<compile_context>
chip_gen: v6e
topology: v6e:2x2x1
jax: 0.10.0
libtpu: 0.0.40
codegen_flags: <defaults>
</compile_context>

<pallas_src>
import math
import functools

import jax
import jax.numpy as jnp
from jax import lax
from jax.experimental import pallas as pl
from jax.experimental.pallas import tpu as pltpu


# ----------------------------- fused forward kernel -----------------------------

def _tf_fused_kernel(mask_ref, src_ref, pe_ref,
                     enc1w_ref, enc1b_ref, enc2w_ref, enc2b_ref,
                     wq_ref, wk_ref, wv_ref, bq_ref, bk_ref, bv_ref,
                     wo_ref, bo_ref,
                     ff1w_ref, ff1b_ref, ff2w_ref, ff2b_ref,
                     ln1g_ref, ln1b_ref, ln2g_ref, ln2b_ref,
                     lin1w_ref, lin1b_ref, lin2wr_ref, lin2b_ref,
                     l2aw_ref, l2ab_ref, l2bw_ref, l2bb_ref,
                     z_ref,
                     x_vmem,
                     *, nhead, eps):
    layer = pl.program_id(1)

    # ---------- layer 0: fused head (encoder MLP + positional encoding) ----------
    @pl.when(layer == 0)
    def _():
        s = src_ref[...]                                               # (S, 1)
        # K=1 "matmul" done as a VPU broadcast multiply (degenerate MXU shape avoided)
        h = jnp.maximum(s * enc1w_ref[...] + enc1b_ref[...], 0.0)      # (S, E/2)
        x0 = jnp.dot(h, enc2w_ref[...],
                     preferred_element_type=jnp.float32) + enc2b_ref[...]
        # PositionalEncoding quirk, faithful to the module: pe is indexed by x.size(0) == batch
        # (the module calls pos_encoder on a batch-first tensor), so batch b's pe row is
        # broadcast over every sequence position.
        x_vmem[...] = x0 + pe_ref[...]

    x = x_vmem[...]                                                    # (S, E) f32 activation
    S, E = x.shape
    Dh = E // nhead
    xb = x.astype(jnp.bfloat16)
    mask = mask_ref[...]                                               # (S, S) additive causal mask

    # ---------- multi-head self-attention (1/sqrt(Dh) already folded into Wq/bq) ----------
    q = jnp.dot(xb, wq_ref[...], preferred_element_type=jnp.float32) + bq_ref[...]
    k = jnp.dot(xb, wk_ref[...], preferred_element_type=jnp.float32) + bk_ref[...]
    v = jnp.dot(xb, wv_ref[...], preferred_element_type=jnp.float32) + bv_ref[...]
    wo = wo_ref[...]                                                   # (E, E) bf16, loaded once

    attn = jnp.zeros((S, E), jnp.float32)
    for hh in range(nhead):        # short static unroll over heads only; every head fully reduces
        c0 = hh * Dh               # into `attn`, so live ranges stay per-head (no concatenates).
        qh = q[:, c0:c0 + Dh]
        kh = k[:, c0:c0 + Dh]
        vh = v[:, c0:c0 + Dh]
        s_h = lax.dot_general(qh, kh, (((1,), (1,)), ((), ())),
                              preferred_element_type=jnp.float32) + mask      # (S, S)
        # causal tril keeps the diagonal, so no row is fully -inf (no NaNs from exp(-inf - -inf)).
        m_h = jnp.max(s_h, axis=-1, keepdims=True)
        p_h = jnp.exp(s_h - m_h)
        l_h = jnp.sum(p_h, axis=-1, keepdims=True)
        o_h = jnp.dot(p_h, vh, preferred_element_type=jnp.float32) / l_h      # exact softmax divide
        # fold the output projection per head: attn += (softmax @ V_h) @ Wo[h-rows, :]
        attn = attn + jnp.dot(o_h.astype(jnp.bfloat16), wo[c0:c0 + Dh, :],
                              preferred_element_type=jnp.float32)
    attn = attn + bo_ref[...]

    # ---------- residual + LayerNorm 1 (post-norm; dropout = identity in eval) ----------
    z1 = x + attn
    mu = jnp.mean(z1, axis=-1, keepdims=True)
    d1 = z1 - mu
    var = jnp.mean(d1 * d1, axis=-1, keepdims=True)
    h1 = d1 * lax.rsqrt(var + eps) * ln1g_ref[...] + ln1b_ref[...]

    # ---------- feed-forward (ReLU), bf16 weights / f32 accumulate ----------
    ff = jnp.dot(h1.astype(jnp.bfloat16), ff1w_ref[...],
                 preferred_element_type=jnp.float32) + ff1b_ref[...]
    ff = jnp.maximum(ff, 0.0)
    ff = jnp.dot(ff.astype(jnp.bfloat16), ff2w_ref[...],
                 preferred_element_type=jnp.float32) + ff2b_ref[...]

    # ---------- residual + LayerNorm 2 ----------
    z2 = h1 + ff
    mu = jnp.mean(z2, axis=-1, keepdims=True)
    d2 = z2 - mu
    var = jnp.mean(d2 * d2, axis=-1, keepdims=True)
    out = d2 * lax.rsqrt(var + eps) * ln2g_ref[...] + ln2b_ref[...]
    x_vmem[...] = out

    # ---------- last layer: fused tails (no (B*S,1) intermediate ever hits HBM) ----------
    @pl.when(layer == pl.num_programs(1) - 1)
    def _():
        # self.linear : Linear(E, E/2) -> ReLU -> Linear(E/2, 1), emitted lane-dense as (1, S)
        t = jnp.maximum(jnp.dot(out, lin1w_ref[...],
                                preferred_element_type=jnp.float32) + lin1b_ref[...], 0.0)   # (S, E/2)
        # y[0, s] = sum_k t[s, k] * lin2_w[k]  (contract the lane dims of both operands)
        y_row = lax.dot_general(lin2wr_ref[...], t, (((1,), (1,)), ((), ())),
                                preferred_element_type=jnp.float32) + lin2b_ref[...]          # (1, S)
        # self.linear2 : Linear(iw, (iw+ow)//2) -> ReLU -> Linear(., ow)
        u = jnp.maximum(jnp.dot(y_row, l2aw_ref[...],
                                preferred_element_type=jnp.float32) + l2ab_ref[...], 0.0)     # (1, mid)
        z_ref[...] = jnp.dot(u, l2bw_ref[...],
                             preferred_element_type=jnp.float32) + l2bb_ref[...]              # (1, ow)


# ----------------------------- wrapper -----------------------------

def tf_model_forward(src, srcmask, params, *, d_model, nhead, nlayers):
    """src: (B, S, 1) with S == iw; srcmask: (S, S) additive mask. Eval mode (dropout = identity)."""
    B, S, _ = src.shape
    E = d_model
    E2 = E // 2
    lp = params['layers']
    F = lp['ff1_w'].shape[-1]
    MID = params['l2a_w'].shape[-1]
    OW = params['l2b_w'].shape[-1]
    assert params['l2a_w'].shape[0] == S, "linear2 expects seq_len == iw"

    pe_b = params['pe'][:B]            # (B, 1, E): pe[:x.size(0)] with x.size(0) == batch (module quirk)

    def fullspec(*shape):
        n = len(shape)
        return pl.BlockSpec(shape, lambda b, l, n=n: (0,) * n)

    def perbatch(*shape):              # leading batch dim squeezed, selected by grid axis 0
        n = len(shape)
        return pl.BlockSpec((None,) + shape, lambda b, l, n=n: (b,) + (0,) * n)

    def perlayer(*shape):              # leading layer dim squeezed, selected by grid axis 1
        n = len(shape)
        return pl.BlockSpec((None,) + shape, lambda b, l, n=n: (l,) + (0,) * n)

    in_specs = [
        fullspec(S, S),                                                      # causal mask (resident)
        perbatch(S, 1),                                                      # src tokens, this batch
        perbatch(1, E),                                                      # pos-enc row, this batch
        fullspec(1, E2), fullspec(1, E2), fullspec(E2, E), fullspec(1, E),   # head MLP
        perlayer(E, E), perlayer(E, E), perlayer(E, E),                      # Wq, Wk, Wv   (bf16)
        perlayer(1, E), perlayer(1, E), perlayer(1, E),                      # bq, bk, bv
        perlayer(E, E), perlayer(1, E),                                      # Wo (bf16), bo
        perlayer(E, F), perlayer(1, F), perlayer(F, E), perlayer(1, E),      # FFN (bf16 weights)
        perlayer(1, E), perlayer(1, E), perlayer(1, E), perlayer(1, E),      # LN1 / LN2
        fullspec(E, E2), fullspec(1, E2), fullspec(1, E2), fullspec(1, 1),   # tail A (self.linear)
        fullspec(S, MID), fullspec(1, MID), fullspec(MID, OW), fullspec(1, OW),  # tail B (self.linear2)
    ]

    z = pl.pallas_call(
        functools.partial(_tf_fused_kernel, nhead=nhead, eps=1e-5),
        out_shape=jax.ShapeDtypeStruct((B, 1, OW), jnp.float32),
        grid=(B, nlayers),
        in_specs=in_specs,
        out_specs=perbatch(1, OW),
        scratch_shapes=[pltpu.VMEM((S, E), jnp.float32)],   # layer-resident activation
        compiler_params=pltpu.CompilerParams(
            dimension_semantics=("parallel", "arbitrary")),  # batch axis -> both TCs on v7x
    )(srcmask, src.astype(jnp.float32), pe_b,
      params['enc1_w'], params['enc1_b'], params['enc2_w'], params['enc2_b'],
      lp['wq'], lp['wk'], lp['wv'], lp['bq'], lp['bk'], lp['bv'],
      lp['wo'], lp['bo'],
      lp['ff1_w'], lp['ff1_b'], lp['ff2_w'], lp['ff2_b'],
      lp['ln1_g'], lp['ln1_b'], lp['ln2_g'], lp['ln2_b'],
      params['lin1_w'], params['lin1_b'], params['lin2_w_row'], params['lin2_b'],
      params['l2a_w'], params['l2a_b'], params['l2b_w'], params['l2b_b'])
    return z.reshape(B, OW)


# ----------------------------- parameters -----------------------------

def init_params(key, iw, ow, d_model, nhead, nlayers, dim_ff, max_len=64):
    keys = iter(jax.random.split(key, 32))

    def w(shape, scale=0.05):
        return jax.random.normal(next(keys), shape, jnp.float32) * scale

    def b(shape, scale=0.02):
        return jax.random.normal(next(keys), shape, jnp.float32) * scale

    L, E, F = nlayers, d_model, dim_ff
    mid = (iw + ow) // 2
    params = {
        # self.encoder = Linear(1, E/2) -> ReLU -> Linear(E/2, E)   (weights stored in->out)
        'enc1_w': w((1, E // 2)), 'enc1_b': b((E // 2,)),
        'enc2_w': w((E // 2, E)), 'enc2_b': b((E,)),
        # self.linear = Linear(E, E/2) -> ReLU -> Linear(E/2, 1)
        'lin1_w': w((E, E // 2)), 'lin1_b': b((E // 2,)),
        'lin2_w': w((E // 2, 1)), 'lin2_b': b((1,)),
        # self.linear2 = Linear(iw, (iw+ow)//2) -> ReLU -> Linear((iw+ow)//2, ow)
        'l2a_w': w((iw, mid)), 'l2a_b': b((mid,)),
        'l2b_w': w((mid, ow)), 'l2b_b': b((ow,)),
        # nn.TransformerEncoder: per-layer weights stacked along a leading layer axis
        'layers': {
            'in_proj_w': w((L, E, 3 * E)), 'in_proj_b': b((L, 3 * E)),
            'out_proj_w': w((L, E, E)), 'out_proj_b': b((L, E)),
            'ff1_w': w((L, E, F)), 'ff1_b': b((L, F)),
            'ff2_w': w((L, F, E)), 'ff2_b': b((L, E)),
            'ln1_g': jnp.ones((L, E), jnp.float32), 'ln1_b': jnp.zeros((L, E), jnp.float32),
            'ln2_g': jnp.ones((L, E), jnp.float32), 'ln2_b': jnp.zeros((L, E), jnp.float32),
        },
    }

    # PositionalEncoding buffer pe: (max_len, 1, d_model)
    position = jnp.arange(max_len, dtype=jnp.float32)[:, None]
    div_term = jnp.exp(jnp.arange(0, E, 2, dtype=jnp.float32) * (-math.log(10000.0) / E))
    pe = jnp.zeros((max_len, E), jnp.float32)
    pe = pe.at[:, 0::2].set(jnp.sin(position * div_term))
    pe = pe.at[:, 1::2].set(jnp.cos(position * div_term))
    params['pe'] = pe[:, None, :]
    return params


def prepare_params(params, nhead):
    """One-time parameter transform (done once, outside the jitted forward):
       split in_proj into Wq/Wk/Wv, fold 1/sqrt(Dh) into Wq/bq, cast the encoder-stack matmul
       weights to bf16, reshape biases to broadcastable rows and lin2_w to a lane-dense row."""
    p = dict(params)
    lp = params['layers']
    E = params['enc2_w'].shape[1]
    L = lp['in_proj_w'].shape[0]
    scale = 1.0 / math.sqrt(E // nhead)
    bf = jnp.bfloat16
    r3 = lambda a: a.reshape(L, 1, -1).astype(jnp.float32)
    p['layers'] = {
        'wq': (lp['in_proj_w'][:, :, :E] * scale).astype(bf),
        'wk': lp['in_proj_w'][:, :, E:2 * E].astype(bf),
        'wv': lp['in_proj_w'][:, :, 2 * E:].astype(bf),
        'bq': r3(lp['in_proj_b'][:, :E] * scale),
        'bk': r3(lp['in_proj_b'][:, E:2 * E]),
        'bv': r3(lp['in_proj_b'][:, 2 * E:]),
        'wo': lp['out_proj_w'].astype(bf), 'bo': r3(lp['out_proj_b']),
        'ff1_w': lp['ff1_w'].astype(bf), 'ff1_b': r3(lp['ff1_b']),
        'ff2_w': lp['ff2_w'].astype(bf), 'ff2_b': r3(lp['ff2_b']),
        'ln1_g': r3(lp['ln1_g']), 'ln1_b': r3(lp['ln1_b']),
        'ln2_g': r3(lp['ln2_g']), 'ln2_b': r3(lp['ln2_b']),
    }
    r2 = lambda a: a.reshape(1, -1)
    p['enc1_b'] = r2(params['enc1_b'])
    p['enc2_b'] = r2(params['enc2_b'])
    p['lin1_b'] = r2(params['lin1_b'])
    p['lin2_w_row'] = params['lin2_w'].reshape(1, -1)     # (E/2, 1) -> (1, E/2), lane-dense row
    p['lin2_b'] = params['lin2_b'].reshape(1, 1)
    p['l2a_b'] = r2(params['l2a_b'])
    p['l2b_b'] = r2(params['l2b_b'])
    del p['lin2_w']
    return p


def generate_square_subsequent_mask(sz):
    # matches TFModel.generate_square_subsequent_mask: 0 on/below the diagonal, -inf above
    keep = jnp.tril(jnp.ones((sz, sz), dtype=bool))
    return jnp.where(keep, 0.0, -jnp.inf).astype(jnp.float32)


# ----------------------------- driver -----------------------------

if __name__ == "__main__":
    # small shapes consistent with the module's forward (seq_len == iw)
    B, IW, OW = 2, 16, 8
    D_MODEL, NHEAD, NLAYERS = 32, 4, 2
    DIM_FF = 2048  # nn.TransformerEncoderLayer default dim_feedforward

    key = jax.random.PRNGKey(0)
    pkey, xkey = jax.random.split(key)
    params = prepare_params(init_params(pkey, IW, OW, D_MODEL, NHEAD, NLAYERS, DIM_FF), NHEAD)

    src = jax.random.normal(xkey, (B, IW, 1), jnp.float32)
    srcmask = generate_square_subsequent_mask(IW)

    fwd = jax.jit(functools.partial(tf_model_forward,
                                    d_model=D_MODEL, nhead=NHEAD, nlayers=NLAYERS))
    out = jax.block_until_ready(fwd(src, srcmask, params))
    assert out.shape == (B, OW), out.shape
    assert bool(jnp.all(jnp.isfinite(out)))
    print("KERNEL_OK")
</pallas_src>

<mosaic_0001>
module attributes {stable_mosaic.version = 11 : i64} {
  func.func @_tf_fused_kernel(%arg0: i32, %arg1: i32, %arg2: memref<16x16xf32, #tpu.memory_space<vmem>>, %arg3: memref<1x16x1xf32, #tpu.memory_space<vmem>>, %arg4: memref<1x1x32xf32, #tpu.memory_space<vmem>>, %arg5: memref<1x16xf32, #tpu.memory_space<vmem>>, %arg6: memref<1x16xf32, #tpu.memory_space<vmem>>, %arg7: memref<16x32xf32, #tpu.memory_space<vmem>>, %arg8: memref<1x32xf32, #tpu.memory_space<vmem>>, %arg9: memref<1x32x32xbf16, #tpu.memory_space<vmem>>, %arg10: memref<1x32x32xbf16, #tpu.memory_space<vmem>>, %arg11: memref<1x32x32xbf16, #tpu.memory_space<vmem>>, %arg12: memref<1x1x32xf32, #tpu.memory_space<vmem>>, %arg13: memref<1x1x32xf32, #tpu.memory_space<vmem>>, %arg14: memref<1x1x32xf32, #tpu.memory_space<vmem>>, %arg15: memref<1x32x32xbf16, #tpu.memory_space<vmem>>, %arg16: memref<1x1x32xf32, #tpu.memory_space<vmem>>, %arg17: memref<1x32x2048xbf16, #tpu.memory_space<vmem>>, %arg18: memref<1x1x2048xf32, #tpu.memory_space<vmem>>, %arg19: memref<1x2048x32xbf16, #tpu.memory_space<vmem>>, %arg20: memref<1x1x32xf32, #tpu.memory_space<vmem>>, %arg21: memref<1x1x32xf32, #tpu.memory_space<vmem>>, %arg22: memref<1x1x32xf32, #tpu.memory_space<vmem>>, %arg23: memref<1x1x32xf32, #tpu.memory_space<vmem>>, %arg24: memref<1x1x32xf32, #tpu.memory_space<vmem>>, %arg25: memref<32x16xf32, #tpu.memory_space<vmem>>, %arg26: memref<1x16xf32, #tpu.memory_space<vmem>>, %arg27: memref<1x16xf32, #tpu.memory_space<vmem>>, %arg28: memref<1x1xf32, #tpu.memory_space<vmem>>, %arg29: memref<16x12xf32, #tpu.memory_space<vmem>>, %arg30: memref<1x12xf32, #tpu.memory_space<vmem>>, %arg31: memref<12x8xf32, #tpu.memory_space<vmem>>, %arg32: memref<1x8xf32, #tpu.memory_space<vmem>>, %arg33: memref<1x1x8xf32, #tpu.memory_space<vmem>>, %arg34: memref<16x32xf32, #tpu.memory_space<vmem>>) attributes {dimension_semantics = [#tpu.dimension_semantics<parallel>, #tpu.dimension_semantics<arbitrary>], iteration_bounds = array<i64: 2, 2>, scalar_prefetch = 0 : i64, scratch_operands = 1 : i64, tpu.core_type = #tpu.core_type<tc>, window_params = [{pipeline_mode = #tpu.pipeline_mode<synchronous>, transform_indices = @transform_0, window_bounds = array<i64: 16, 16>}, {transform_indices = @transform_1, window_bounds = array<i64: 1, 16, 1>}, {transform_indices = @transform_2, window_bounds = array<i64: 1, 1, 32>}, {pipeline_mode = #tpu.pipeline_mode<synchronous>, transform_indices = @transform_3, window_bounds = array<i64: 1, 16>}, {pipeline_mode = #tpu.pipeline_mode<synchronous>, transform_indices = @transform_4, window_bounds = array<i64: 1, 16>}, {pipeline_mode = #tpu.pipeline_mode<synchronous>, transform_indices = @transform_5, window_bounds = array<i64: 16, 32>}, {pipeline_mode = #tpu.pipeline_mode<synchronous>, transform_indices = @transform_6, window_bounds = array<i64: 1, 32>}, {transform_indices = @transform_7, window_bounds = array<i64: 1, 32, 32>}, {transform_indices = @transform_8, window_bounds = array<i64: 1, 32, 32>}, {transform_indices = @transform_9, window_bounds = array<i64: 1, 32, 32>}, {transform_indices = @transform_10, window_bounds = array<i64: 1, 1, 32>}, {transform_indices = @transform_11, window_bounds = array<i64: 1, 1, 32>}, {transform_indices = @transform_12, window_bounds = array<i64: 1, 1, 32>}, {transform_indices = @transform_13, window_bounds = array<i64: 1, 32, 32>}, {transform_indices = @transform_14, window_bounds = array<i64: 1, 1, 32>}, {transform_indices = @transform_15, window_bounds = array<i64: 1, 32, 2048>}, {transform_indices = @transform_16, window_bounds = array<i64: 1, 1, 2048>}, {transform_indices = @transform_17, window_bounds = array<i64: 1, 2048, 32>}, {transform_indices = @transform_18, window_bounds = array<i64: 1, 1, 32>}, {transform_indices = @transform_19, window_bounds = array<i64: 1, 1, 32>}, {transform_indices = @transform_20, window_bounds = array<i64: 1, 1, 32>}, {transform_indices = @transform_21, window_bounds = array<i64: 1, 1, 32>}, {transform_indices = @transform_22, window_bounds = array<i64: 1, 1, 32>}, {pipeline_mode = #tpu.pipeline_mode<synchronous>, transform_indices = @transform_23, window_bounds = array<i64: 32, 16>}, {pipeline_mode = #tpu.pipeline_mode<synchronous>, transform_indices = @transform_24, window_bounds = array<i64: 1, 16>}, {pipeline_mode = #tpu.pipeline_mode<synchronous>, transform_indices = @transform_25, window_bounds = array<i64: 1, 16>}, {pipeline_mode = #tpu.pipeline_mode<synchronous>, transform_indices = @transform_26, window_bounds = array<i64: 1, 1>}, {pipeline_mode = #tpu.pipeline_mode<synchronous>, transform_indices = @transform_27, window_bounds = array<i64: 16, 12>}, {pipeline_mode = #tpu.pipeline_mode<synchronous>, transform_indices = @transform_28, window_bounds = array<i64: 1, 12>}, {pipeline_mode = #tpu.pipeline_mode<synchronous>, transform_indices = @transform_29, window_bounds = array<i64: 12, 8>}, {pipeline_mode = #tpu.pipeline_mode<synchronous>, transform_indices = @transform_30, window_bounds = array<i64: 1, 8>}, {transform_indices = @transform_31, window_bounds = array<i64: 1, 1, 8>}]} {
    %c0_i32 = arith.constant 0 : i32
    %0 = arith.cmpi eq, %arg1, %c0_i32 : i32
    %1 = arith.extui %0 : i1 to i32
    %c0_i32_0 = arith.constant 0 : i32
    %2 = arith.cmpi ne, %1, %c0_i32_0 : i32
    scf.if %2 {
      %c0_91 = arith.constant 0 : index
      %c0_92 = arith.constant 0 : index
      %c0_93 = arith.constant 0 : index
      %182 = vector.load %arg3[%c0_91, %c0_92, %c0_93] : memref<1x16x1xf32, #tpu.memory_space<vmem>>, vector<1x16x1xf32>
      %183 = vector.shape_cast %182 : vector<1x16x1xf32> to vector<16x1xf32>
      %c0_94 = arith.constant 0 : index
      %c0_95 = arith.constant 0 : index
      %184 = vector.load %arg5[%c0_94, %c0_95] : memref<1x16xf32, #tpu.memory_space<vmem>>, vector<1x16xf32>
      %185 = vector.broadcast %183 : vector<16x1xf32> to vector<16x16xf32>
      %186 = vector.broadcast %184 : vector<1x16xf32> to vector<16x16xf32>
      %187 = arith.mulf %185, %186 : vector<16x16xf32>
      %c0_96 = arith.constant 0 : index
      %c0_97 = arith.constant 0 : index
      %188 = vector.load %arg6[%c0_96, %c0_97] : memref<1x16xf32, #tpu.memory_space<vmem>>, vector<1x16xf32>
      %189 = vector.broadcast %188 : vector<1x16xf32> to vector<16x16xf32>
      %190 = arith.addf %187, %189 : vector<16x16xf32>
      %cst_98 = arith.constant 0.000000e+00 : f32
      %191 = vector.broadcast %cst_98 : f32 to vector<16x16xf32>
      %192 = arith.maximumf %190, %191 : vector<16x16xf32>
      %c0_99 = arith.constant 0 : index
      %c0_100 = arith.constant 0 : index
      %193 = vector.load %arg7[%c0_99, %c0_100] : memref<16x32xf32, #tpu.memory_space<vmem>>, vector<16x32xf32>
      %cst_101 = arith.constant dense<0.000000e+00> : vector<16x32xf32>
      %194 = tpu.matmul %192, %193, %cst_101 {dimension_numbers = #tpu.dot_dimension_numbers<[1], [0], [0], [1], [0, 0, 1, 1], [], []>} : vector<16x16xf32>, vector<16x32xf32>, vector<16x32xf32> -> vector<16x32xf32>
      %c0_102 = arith.constant 0 : index
      %c0_103 = arith.constant 0 : index
      %195 = vector.load %arg8[%c0_102, %c0_103] : memref<1x32xf32, #tpu.memory_space<vmem>>, vector<1x32xf32>
      %196 = vector.broadcast %195 : vector<1x32xf32> to vector<16x32xf32>
      %197 = arith.addf %194, %196 : vector<16x32xf32>
      %c0_104 = arith.constant 0 : index
      %c0_105 = arith.constant 0 : index
      %c0_106 = arith.constant 0 : index
      %198 = vector.load %arg4[%c0_104, %c0_105, %c0_106] : memref<1x1x32xf32, #tpu.memory_space<vmem>>, vector<1x1x32xf32>
      %199 = vector.shape_cast %198 : vector<1x1x32xf32> to vector<1x32xf32>
      %200 = vector.broadcast %199 : vector<1x32xf32> to vector<16x32xf32>
      %201 = arith.addf %197, %200 : vector<16x32xf32>
      %c0_107 = arith.constant 0 : index
      %c0_108 = arith.constant 0 : index
      %202 = vector.load %arg34[%c0_107, %c0_108] : memref<16x32xf32, #tpu.memory_space<vmem>>, vector<16x32xf32>
      tpu.vector_store %arg34[%c0_107, %c0_108], %201 {strides = array<i32>} : memref<16x32xf32, #tpu.memory_space<vmem>>, vector<16x32xf32>,
    } else {
    }
    %c0 = arith.constant 0 : index
    %c0_1 = arith.constant 0 : index
    %3 = vector.load %arg34[%c0, %c0_1] : memref<16x32xf32, #tpu.memory_space<vmem>>, vector<16x32xf32>
    %4 = arith.truncf %3 : vector<16x32xf32> to vector<16x32xbf16>
    %c0_2 = arith.constant 0 : index
    %c0_3 = arith.constant 0 : index
    %5 = vector.load %arg2[%c0_2, %c0_3] : memref<16x16xf32, #tpu.memory_space<vmem>>, vector<16x16xf32>
    %c0_4 = arith.constant 0 : index
    %c0_5 = arith.constant 0 : index
    %c0_6 = arith.constant 0 : index
    %6 = vector.load %arg9[%c0_4, %c0_5, %c0_6] : memref<1x32x32xbf16, #tpu.memory_space<vmem>>, vector<1x32x32xbf16>
    %7 = vector.shape_cast %6 : vector<1x32x32xbf16> to vector<32x32xbf16>
    %cst = arith.constant dense<0.000000e+00> : vector<16x32xf32>
    %8 = tpu.matmul %4, %7, %cst {dimension_numbers = #tpu.dot_dimension_numbers<[1], [0], [0], [1], [0, 0, 1, 1], [], []>} : vector<16x32xbf16>, vector<32x32xbf16>, vector<16x32xf32> -> vector<16x32xf32>
    %c0_7 = arith.constant 0 : index
    %c0_8 = arith.constant 0 : index
    %c0_9 = arith.constant 0 : index
    %9 = vector.load %arg12[%c0_7, %c0_8, %c0_9] : memref<1x1x32xf32, #tpu.memory_space<vmem>>, vector<1x1x32xf32>
    %10 = vector.shape_cast %9 : vector<1x1x32xf32> to vector<1x32xf32>
    %11 = vector.broadcast %10 : vector<1x32xf32> to vector<16x32xf32>
    %12 = arith.addf %8, %11 : vector<16x32xf32>
    %c0_10 = arith.constant 0 : index
    %c0_11 = arith.constant 0 : index
    %c0_12 = arith.constant 0 : index
    %13 = vector.load %arg10[%c0_10, %c0_11, %c0_12] : memref<1x32x32xbf16, #tpu.memory_space<vmem>>, vector<1x32x32xbf16>
    %14 = vector.shape_cast %13 : vector<1x32x32xbf16> to vector<32x32xbf16>
    %cst_13 = arith.constant dense<0.000000e+00> : vector<16x32xf32>
    %15 = tpu.matmul %4, %14, %cst_13 {dimension_numbers = #tpu.dot_dimension_numbers<[1], [0], [0], [1], [0, 0, 1, 1], [], []>} : vector<16x32xbf16>, vector<32x32xbf16>, vector<16x32xf32> -> vector<16x32xf32>
    %c0_14 = arith.constant 0 : index
    %c0_15 = arith.constant 0 : index
    %c0_16 = arith.constant 0 : index
    %16 = vector.load %arg13[%c0_14, %c0_15, %c0_16] : memref<1x1x32xf32, #tpu.memory_space<vmem>>, vector<1x1x32xf32>
    %17 = vector.shape_cast %16 : vector<1x1x32xf32> to vector<1x32xf32>
    %18 = vector.broadcast %17 : vector<1x32xf32> to vector<16x32xf32>
    %19 = arith.addf %15, %18 : vector<16x32xf32>
    %c0_17 = arith.constant 0 : index
    %c0_18 = arith.constant 0 : index
    %c0_19 = arith.constant 0 : index
    %20 = vector.load %arg11[%c0_17, %c0_18, %c0_19] : memref<1x32x32xbf16, #tpu.memory_space<vmem>>, vector<1x32x32xbf16>
    %21 = vector.shape_cast %20 : vector<1x32x32xbf16> to vector<32x32xbf16>
    %cst_20 = arith.constant dense<0.000000e+00> : vector<16x32xf32>
    %22 = tpu.matmul %4, %21, %cst_20 {dimension_numbers = #tpu.dot_dimension_numbers<[1], [0], [0], [1], [0, 0, 1, 1], [], []>} : vector<16x32xbf16>, vector<32x32xbf16>, vector<16x32xf32> -> vector<16x32xf32>
    %c0_21 = arith.constant 0 : index
    %c0_22 = arith.constant 0 : index
    %c0_23 = arith.constant 0 : index
    %23 = vector.load %arg14[%c0_21, %c0_22, %c0_23] : memref<1x1x32xf32, #tpu.memory_space<vmem>>, vector<1x1x32xf32>
    %24 = vector.shape_cast %23 : vector<1x1x32xf32> to vector<1x32xf32>
    %25 = vector.broadcast %24 : vector<1x32xf32> to vector<16x32xf32>
    %26 = arith.addf %22, %25 : vector<16x32xf32>
    %c0_24 = arith.constant 0 : index
    %c0_25 = arith.constant 0 : index
    %c0_26 = arith.constant 0 : index
    %27 = vector.load %arg15[%c0_24, %c0_25, %c0_26] : memref<1x32x32xbf16, #tpu.memory_space<vmem>>, vector<1x32x32xbf16>
    %28 = vector.shape_cast %27 : vector<1x32x32xbf16> to vector<32x32xbf16>
    %cst_27 = arith.constant 0.000000e+00 : f32
    %29 = vector.broadcast %cst_27 : f32 to vector<16x32xf32>
    %30 = vector.extract_strided_slice %12 {offsets = [0, 0], sizes = [16, 8], strides = [1, 1]} : vector<16x32xf32> to vector<16x8xf32>
    %31 = vector.extract_strided_slice %19 {offsets = [0, 0], sizes = [16, 8], strides = [1, 1]} : vector<16x32xf32> to vector<16x8xf32>
    %32 = vector.extract_strided_slice %26 {offsets = [0, 0], sizes = [16, 8], strides = [1, 1]} : vector<16x32xf32> to vector<16x8xf32>
    %cst_28 = arith.constant dense<0.000000e+00> : vector<16x16xf32>
    %33 = tpu.matmul %30, %31, %cst_28 {dimension_numbers = #tpu.dot_dimension_numbers<[1], [1], [0], [0], [0, 0, 1, 0], [], []>} : vector<16x8xf32>, vector<16x8xf32>, vector<16x16xf32> -> vector<16x16xf32>
    %34 = arith.addf %33, %5 : vector<16x16xf32>
    %cst_29 = arith.constant dense<0xFF800000> : vector<16xf32>
    %35 = vector.multi_reduction <maximumf>, %34, %cst_29 [1] : vector<16x16xf32> to vector<16xf32>
    %36 = vector.shape_cast %35 : vector<16xf32> to vector<16x1xf32>
    %37 = vector.broadcast %36 : vector<16x1xf32> to vector<16x16xf32>
    %38 = arith.subf %34, %37 : vector<16x16xf32>
    %39 = math.exp %38 : vector<16x16xf32>
    %cst_30 = arith.constant dense<0.000000e+00> : vector<16xf32>
    %40 = vector.multi_reduction <add>, %39, %cst_30 [1] : vector<16x16xf32> to vector<16xf32>
    %41 = vector.shape_cast %40 : vector<16xf32> to vector<16x1xf32>
    %cst_31 = arith.constant dense<0.000000e+00> : vector<16x8xf32>
    %42 = tpu.matmul %39, %32, %cst_31 {dimension_numbers = #tpu.dot_dimension_numbers<[1], [0], [0], [1], [0, 0, 1, 1], [], []>} : vector<16x16xf32>, vector<16x8xf32>, vector<16x8xf32> -> vector<16x8xf32>
    %43 = vector.broadcast %41 : vector<16x1xf32> to vector<16x8xf32>
    %44 = arith.divf %42, %43 : vector<16x8xf32>
    %45 = arith.truncf %44 : vector<16x8xf32> to vector<16x8xbf16>
    %46 = vector.extract_strided_slice %28 {offsets = [0, 0], sizes = [8, 32], strides = [1, 1]} : vector<32x32xbf16> to vector<8x32xbf16>
    %cst_32 = arith.constant dense<0.000000e+00> : vector<16x32xf32>
    %47 = tpu.matmul %45, %46, %cst_32 {dimension_numbers = #tpu.dot_dimension_numbers<[1], [0], [0], [1], [0, 0, 1, 1], [], []>} : vector<16x8xbf16>, vector<8x32xbf16>, vector<16x32xf32> -> vector<16x32xf32>
    %48 = arith.addf %29, %47 : vector<16x32xf32>
    %49 = vector.extract_strided_slice %12 {offsets = [0, 8], sizes = [16, 8], strides = [1, 1]} : vector<16x32xf32> to vector<16x8xf32>
    %50 = vector.extract_strided_slice %19 {offsets = [0, 8], sizes = [16, 8], strides = [1, 1]} : vector<16x32xf32> to vector<16x8xf32>
    %51 = vector.extract_strided_slice %26 {offsets = [0, 8], sizes = [16, 8], strides = [1, 1]} : vector<16x32xf32> to vector<16x8xf32>
    %cst_33 = arith.constant dense<0.000000e+00> : vector<16x16xf32>
    %52 = tpu.matmul %49, %50, %cst_33 {dimension_numbers = #tpu.dot_dimension_numbers<[1], [1], [0], [0], [0, 0, 1, 0], [], []>} : vector<16x8xf32>, vector<16x8xf32>, vector<16x16xf32> -> vector<16x16xf32>
    %53 = arith.addf %52, %5 : vector<16x16xf32>
    %cst_34 = arith.constant dense<0xFF800000> : vector<16xf32>
    %54 = vector.multi_reduction <maximumf>, %53, %cst_34 [1] : vector<16x16xf32> to vector<16xf32>
    %55 = vector.shape_cast %54 : vector<16xf32> to vector<16x1xf32>
    %56 = vector.broadcast %55 : vector<16x1xf32> to vector<16x16xf32>
    %57 = arith.subf %53, %56 : vector<16x16xf32>
    %58 = math.exp %57 : vector<16x16xf32>
    %cst_35 = arith.constant dense<0.000000e+00> : vector<16xf32>
    %59 = vector.multi_reduction <add>, %58, %cst_35 [1] : vector<16x16xf32> to vector<16xf32>
    %60 = vector.shape_cast %59 : vector<16xf32> to vector<16x1xf32>
    %cst_36 = arith.constant dense<0.000000e+00> : vector<16x8xf32>
    %61 = tpu.matmul %58, %51, %cst_36 {dimension_numbers = #tpu.dot_dimension_numbers<[1], [0], [0], [1], [0, 0, 1, 1], [], []>} : vector<16x16xf32>, vector<16x8xf32>, vector<16x8xf32> -> vector<16x8xf32>
    %62 = vector.broadcast %60 : vector<16x1xf32> to vector<16x8xf32>
    %63 = arith.divf %61, %62 : vector<16x8xf32>
    %64 = arith.truncf %63 : vector<16x8xf32> to vector<16x8xbf16>
    %65 = vector.extract_strided_slice %28 {offsets = [8, 0], sizes = [8, 32], strides = [1, 1]} : vector<32x32xbf16> to vector<8x32xbf16>
    %cst_37 = arith.constant dense<0.000000e+00> : vector<16x32xf32>
    %66 = tpu.matmul %64, %65, %cst_37 {dimension_numbers = #tpu.dot_dimension_numbers<[1], [0], [0], [1], [0, 0, 1, 1], [], []>} : vector<16x8xbf16>, vector<8x32xbf16>, vector<16x32xf32> -> vector<16x32xf32>
    %67 = arith.addf %48, %66 : vector<16x32xf32>
    %68 = vector.extract_strided_slice %12 {offsets = [0, 16], sizes = [16, 8], strides = [1, 1]} : vector<16x32xf32> to vector<16x8xf32>
    %69 = vector.extract_strided_slice %19 {offsets = [0, 16], sizes = [16, 8], strides = [1, 1]} : vector<16x32xf32> to vector<16x8xf32>
    %70 = vector.extract_strided_slice %26 {offsets = [0, 16], sizes = [16, 8], strides = [1, 1]} : vector<16x32xf32> to vector<16x8xf32>
    %cst_38 = arith.constant dense<0.000000e+00> : vector<16x16xf32>
    %71 = tpu.matmul %68, %69, %cst_38 {dimension_numbers = #tpu.dot_dimension_numbers<[1], [1], [0], [0], [0, 0, 1, 0], [], []>} : vector<16x8xf32>, vector<16x8xf32>, vector<16x16xf32> -> vector<16x16xf32>
    %72 = arith.addf %71, %5 : vector<16x16xf32>
    %cst_39 = arith.constant dense<0xFF800000> : vector<16xf32>
    %73 = vector.multi_reduction <maximumf>, %72, %cst_39 [1] : vector<16x16xf32> to vector<16xf32>
    %74 = vector.shape_cast %73 : vector<16xf32> to vector<16x1xf32>
    %75 = vector.broadcast %74 : vector<16x1xf32> to vector<16x16xf32>
    %76 = arith.subf %72, %75 : vector<16x16xf32>
    %77 = math.exp %76 : vector<16x16xf32>
    %cst_40 = arith.constant dense<0.000000e+00> : vector<16xf32>
    %78 = vector.multi_reduction <add>, %77, %cst_40 [1] : vector<16x16xf32> to vector<16xf32>
    %79 = vector.shape_cast %78 : vector<16xf32> to vector<16x1xf32>
    %cst_41 = arith.constant dense<0.000000e+00> : vector<16x8xf32>
    %80 = tpu.matmul %77, %70, %cst_41 {dimension_numbers = #tpu.dot_dimension_numbers<[1], [0], [0], [1], [0, 0, 1, 1], [], []>} : vector<16x16xf32>, vector<16x8xf32>, vector<16x8xf32> -> vector<16x8xf32>
    %81 = vector.broadcast %79 : vector<16x1xf32> to vector<16x8xf32>
    %82 = arith.divf %80, %81 : vector<16x8xf32>
    %83 = arith.truncf %82 : vector<16x8xf32> to vector<16x8xbf16>
    %84 = vector.extract_strided_slice %28 {offsets = [16, 0], sizes = [8, 32], strides = [1, 1]} : vector<32x32xbf16> to vector<8x32xbf16>
    %cst_42 = arith.constant dense<0.000000e+00> : vector<16x32xf32>
    %85 = tpu.matmul %83, %84, %cst_42 {dimension_numbers = #tpu.dot_dimension_numbers<[1], [0], [0], [1], [0, 0, 1, 1], [], []>} : vector<16x8xbf16>, vector<8x32xbf16>, vector<16x32xf32> -> vector<16x32xf32>
    %86 = arith.addf %67, %85 : vector<16x32xf32>
    %87 = vector.extract_strided_slice %12 {offsets = [0, 24], sizes = [16, 8], strides = [1, 1]} : vector<16x32xf32> to vector<16x8xf32>
    %88 = vector.extract_strided_slice %19 {offsets = [0, 24], sizes = [16, 8], strides = [1, 1]} : vector<16x32xf32> to vector<16x8xf32>
    %89 = vector.extract_strided_slice %26 {offsets = [0, 24], sizes = [16, 8], strides = [1, 1]} : vector<16x32xf32> to vector<16x8xf32>
    %cst_43 = arith.constant dense<0.000000e+00> : vector<16x16xf32>
    %90 = tpu.matmul %87, %88, %cst_43 {dimension_numbers = #tpu.dot_dimension_numbers<[1], [1], [0], [0], [0, 0, 1, 0], [], []>} : vector<16x8xf32>, vector<16x8xf32>, vector<16x16xf32> -> vector<16x16xf32>
    %91 = arith.addf %90, %5 : vector<16x16xf32>
    %cst_44 = arith.constant dense<0xFF800000> : vector<16xf32>
    %92 = vector.multi_reduction <maximumf>, %91, %cst_44 [1] : vector<16x16xf32> to vector<16xf32>
    %93 = vector.shape_cast %92 : vector<16xf32> to vector<16x1xf32>
    %94 = vector.broadcast %93 : vector<16x1xf32> to vector<16x16xf32>
    %95 = arith.subf %91, %94 : vector<16x16xf32>
    %96 = math.exp %95 : vector<16x16xf32>
    %cst_45 = arith.constant dense<0.000000e+00> : vector<16xf32>
    %97 = vector.multi_reduction <add>, %96, %cst_45 [1] : vector<16x16xf32> to vector<16xf32>
    %98 = vector.shape_cast %97 : vector<16xf32> to vector<16x1xf32>
    %cst_46 = arith.constant dense<0.000000e+00> : vector<16x8xf32>
    %99 = tpu.matmul %96, %89, %cst_46 {dimension_numbers = #tpu.dot_dimension_numbers<[1], [0], [0], [1], [0, 0, 1, 1], [], []>} : vector<16x16xf32>, vector<16x8xf32>, vector<16x8xf32> -> vector<16x8xf32>
    %100 = vector.broadcast %98 : vector<16x1xf32> to vector<16x8xf32>
    %101 = arith.divf %99, %100 : vector<16x8xf32>
    %102 = arith.truncf %101 : vector<16x8xf32> to vector<16x8xbf16>
    %103 = vector.extract_strided_slice %28 {offsets = [24, 0], sizes = [8, 32], strides = [1, 1]} : vector<32x32xbf16> to vector<8x32xbf16>
    %cst_47 = arith.constant dense<0.000000e+00> : vector<16x32xf32>
    %104 = tpu.matmul %102, %103, %cst_47 {dimension_numbers = #tpu.dot_dimension_numbers<[1], [0], [0], [1], [0, 0, 1, 1], [], []>} : vector<16x8xbf16>, vector<8x32xbf16>, vector<16x32xf32> -> vector<16x32xf32>
    %105 = arith.addf %86, %104 : vector<16x32xf32>
    %c0_48 = arith.constant 0 : index
    %c0_49 = arith.constant 0 : index
    %c0_50 = arith.constant 0 : index
    %106 = vector.load %arg16[%c0_48, %c0_49, %c0_50] : memref<1x1x32xf32, #tpu.memory_space<vmem>>, vector<1x1x32xf32>
    %107 = vector.shape_cast %106 : vector<1x1x32xf32> to vector<1x32xf32>
    %108 = vector.broadcast %107 : vector<1x32xf32> to vector<16x32xf32>
    %109 = arith.addf %105, %108 : vector<16x32xf32>
    %110 = arith.addf %3, %109 : vector<16x32xf32>
    %cst_51 = arith.constant dense<0.000000e+00> : vector<16xf32>
    %111 = vector.multi_reduction <add>, %110, %cst_51 [1] : vector<16x32xf32> to vector<16xf32>
    %112 = vector.shape_cast %111 : vector<16xf32> to vector<16x1xf32>
    %cst_52 = arith.constant 3.200000e+01 : f32
    %113 = vector.broadcast %cst_52 : f32 to vector<16x1xf32>
    %114 = arith.divf %112, %113 : vector<16x1xf32>
    %115 = vector.broadcast %114 : vector<16x1xf32> to vector<16x32xf32>
    %116 = arith.subf %110, %115 : vector<16x32xf32>
    %117 = arith.mulf %116, %116 : vector<16x32xf32>
    %cst_53 = arith.constant dense<0.000000e+00> : vector<16xf32>
    %118 = vector.multi_reduction <add>, %117, %cst_53 [1] : vector<16x32xf32> to vector<16xf32>
    %119 = vector.shape_cast %118 : vector<16xf32> to vector<16x1xf32>
    %cst_54 = arith.constant 3.200000e+01 : f32
    %120 = vector.broadcast %cst_54 : f32 to vector<16x1xf32>
    %121 = arith.divf %119, %120 : vector<16x1xf32>
    %cst_55 = arith.constant 9.99999974E-6 : f32
    %122 = vector.broadcast %cst_55 : f32 to vector<16x1xf32>
    %123 = arith.addf %121, %122 : vector<16x1xf32>
    %124 = math.rsqrt %123 : vector<16x1xf32>
    %125 = vector.broadcast %124 : vector<16x1xf32> to vector<16x32xf32>
    %126 = arith.mulf %116, %125 : vector<16x32xf32>
    %c0_56 = arith.constant 0 : index
    %c0_57 = arith.constant 0 : index
    %c0_58 = arith.constant 0 : index
    %127 = vector.load %arg21[%c0_56, %c0_57, %c0_58] : memref<1x1x32xf32, #tpu.memory_space<vmem>>, vector<1x1x32xf32>
    %128 = vector.shape_cast %127 : vector<1x1x32xf32> to vector<1x32xf32>
    %129 = vector.broadcast %128 : vector<1x32xf32> to vector<16x32xf32>
    %130 = arith.mulf %126, %129 : vector<16x32xf32>
    %c0_59 = arith.constant 0 : index
    %c0_60 = arith.constant 0 : index
    %c0_61 = arith.constant 0 : index
    %131 = vector.load %arg22[%c0_59, %c0_60, %c0_61] : memref<1x1x32xf32, #tpu.memory_space<vmem>>, vector<1x1x32xf32>
    %132 = vector.shape_cast %131 : vector<1x1x32xf32> to vector<1x32xf32>
    %133 = vector.broadcast %132 : vector<1x32xf32> to vector<16x32xf32>
    %134 = arith.addf %130, %133 : vector<16x32xf32>
    %135 = arith.truncf %134 : vector<16x32xf32> to vector<16x32xbf16>
    %c0_62 = arith.constant 0 : index
    %c0_63 = arith.constant 0 : index
    %c0_64 = arith.constant 0 : index
    %136 = vector.load %arg17[%c0_62, %c0_63, %c0_64] : memref<1x32x2048xbf16, #tpu.memory_space<vmem>>, vector<1x32x2048xbf16>
    %137 = vector.shape_cast %136 : vector<1x32x2048xbf16> to vector<32x2048xbf16>
    %cst_65 = arith.constant dense<0.000000e+00> : vector<16x2048xf32>
    %138 = tpu.matmul %135, %137, %cst_65 {dimension_numbers = #tpu.dot_dimension_numbers<[1], [0], [0], [1], [0, 0, 1, 1], [], []>} : vector<16x32xbf16>, vector<32x2048xbf16>, vector<16x2048xf32> -> vector<16x2048xf32>
    %c0_66 = arith.constant 0 : index
    %c0_67 = arith.constant 0 : index
    %c0_68 = arith.constant 0 : index
    %139 = vector.load %arg18[%c0_66, %c0_67, %c0_68] : memref<1x1x2048xf32, #tpu.memory_space<vmem>>, vector<1x1x2048xf32>
    %140 = vector.shape_cast %139 : vector<1x1x2048xf32> to vector<1x2048xf32>
    %141 = vector.broadcast %140 : vector<1x2048xf32> to vector<16x2048xf32>
    %142 = arith.addf %138, %141 : vector<16x2048xf32>
    %cst_69 = arith.constant 0.000000e+00 : f32
    %143 = vector.broadcast %cst_69 : f32 to vector<16x2048xf32>
    %144 = arith.maximumf %142, %143 : vector<16x2048xf32>
    %145 = arith.truncf %144 : vector<16x2048xf32> to vector<16x2048xbf16>
    %c0_70 = arith.constant 0 : index
    %c0_71 = arith.constant 0 : index
    %c0_72 = arith.constant 0 : index
    %146 = vector.load %arg19[%c0_70, %c0_71, %c0_72] : memref<1x2048x32xbf16, #tpu.memory_space<vmem>>, vector<1x2048x32xbf16>
    %147 = vector.shape_cast %146 : vector<1x2048x32xbf16> to vector<2048x32xbf16>
    %cst_73 = arith.constant dense<0.000000e+00> : vector<16x32xf32>
    %148 = tpu.matmul %145, %147, %cst_73 {dimension_numbers = #tpu.dot_dimension_numbers<[1], [0], [0], [1], [0, 0, 1, 1], [], []>} : vector<16x2048xbf16>, vector<2048x32xbf16>, vector<16x32xf32> -> vector<16x32xf32>
    %c0_74 = arith.constant 0 : index
    %c0_75 = arith.constant 0 : index
    %c0_76 = arith.constant 0 : index
    %149 = vector.load %arg20[%c0_74, %c0_75, %c0_76] : memref<1x1x32xf32, #tpu.memory_space<vmem>>, vector<1x1x32xf32>
    %150 = vector.shape_cast %149 : vector<1x1x32xf32> to vector<1x32xf32>
    %151 = vector.broadcast %150 : vector<1x32xf32> to vector<16x32xf32>
    %152 = arith.addf %148, %151 : vector<16x32xf32>
    %153 = arith.addf %134, %152 : vector<16x32xf32>
    %cst_77 = arith.constant dense<0.000000e+00> : vector<16xf32>
    %154 = vector.multi_reduction <add>, %153, %cst_77 [1] : vector<16x32xf32> to vector<16xf32>
    %155 = vector.shape_cast %154 : vector<16xf32> to vector<16x1xf32>
    %cst_78 = arith.constant 3.200000e+01 : f32
    %156 = vector.broadcast %cst_78 : f32 to vector<16x1xf32>
    %157 = arith.divf %155, %156 : vector<16x1xf32>
    %158 = vector.broadcast %157 : vector<16x1xf32> to vector<16x32xf32>
    %159 = arith.subf %153, %158 : vector<16x32xf32>
    %160 = arith.mulf %159, %159 : vector<16x32xf32>
    %cst_79 = arith.constant dense<0.000000e+00> : vector<16xf32>
    %161 = vector.multi_reduction <add>, %160, %cst_79 [1] : vector<16x32xf32> to vector<16xf32>
    %162 = vector.shape_cast %161 : vector<16xf32> to vector<16x1xf32>
    %cst_80 = arith.constant 3.200000e+01 : f32
    %163 = vector.broadcast %cst_80 : f32 to vector<16x1xf32>
    %164 = arith.divf %162, %163 : vector<16x1xf32>
    %cst_81 = arith.constant 9.99999974E-6 : f32
    %165 = vector.broadcast %cst_81 : f32 to vector<16x1xf32>
    %166 = arith.addf %164, %165 : vector<16x1xf32>
    %167 = math.rsqrt %166 : vector<16x1xf32>
    %168 = vector.broadcast %167 : vector<16x1xf32> to vector<16x32xf32>
    %169 = arith.mulf %159, %168 : vector<16x32xf32>
    %c0_82 = arith.constant 0 : index
    %c0_83 = arith.constant 0 : index
    %c0_84 = arith.constant 0 : index
    %170 = vector.load %arg23[%c0_82, %c0_83, %c0_84] : memref<1x1x32xf32, #tpu.memory_space<vmem>>, vector<1x1x32xf32>
    %171 = vector.shape_cast %170 : vector<1x1x32xf32> to vector<1x32xf32>
    %172 = vector.broadcast %171 : vector<1x32xf32> to vector<16x32xf32>
    %173 = arith.mulf %169, %172 : vector<16x32xf32>
    %c0_85 = arith.constant 0 : index
    %c0_86 = arith.constant 0 : index
    %c0_87 = arith.constant 0 : index
    %174 = vector.load %arg24[%c0_85, %c0_86, %c0_87] : memref<1x1x32xf32, #tpu.memory_space<vmem>>, vector<1x1x32xf32>
    %175 = vector.shape_cast %174 : vector<1x1x32xf32> to vector<1x32xf32>
    %176 = vector.broadcast %175 : vector<1x32xf32> to vector<16x32xf32>
    %177 = arith.addf %173, %176 : vector<16x32xf32>
    %c0_88 = arith.constant 0 : index
    %c0_89 = arith.constant 0 : index
    %178 = vector.load %arg34[%c0_88, %c0_89] : memref<16x32xf32, #tpu.memory_space<vmem>>, vector<16x32xf32>
    tpu.vector_store %arg34[%c0_88, %c0_89], %177 {strides = array<i32>} : memref<16x32xf32, #tpu.memory_space<vmem>>, vector<16x32xf32>,
    %c1_i32 = arith.constant 1 : i32
    %179 = arith.cmpi eq, %arg1, %c1_i32 : i32
    %180 = arith.extui %179 : i1 to i32
    %c0_i32_90 = arith.constant 0 : i32
    %181 = arith.cmpi ne, %180, %c0_i32_90 : i32
    scf.if %181 {
      %c0_91 = arith.constant 0 : index
      %c0_92 = arith.constant 0 : index
      %182 = vector.load %arg25[%c0_91, %c0_92] : memref<32x16xf32, #tpu.memory_space<vmem>>, vector<32x16xf32>
      %cst_93 = arith.constant dense<0.000000e+00> : vector<16x16xf32>
      %183 = tpu.matmul %177, %182, %cst_93 {dimension_numbers = #tpu.dot_dimension_numbers<[1], [0], [0], [1], [0, 0, 1, 1], [], []>} : vector<16x32xf32>, vector<32x16xf32>, vector<16x16xf32> -> vector<16x16xf32>
      %c0_94 = arith.constant 0 : index
      %c0_95 = arith.constant 0 : index
      %184 = vector.load %arg26[%c0_94, %c0_95] : memref<1x16xf32, #tpu.memory_space<vmem>>, vector<1x16xf32>
      %185 = vector.broadcast %184 : vector<1x16xf32> to vector<16x16xf32>
      %186 = arith.addf %183, %185 : vector<16x16xf32>
      %cst_96 = arith.constant 0.000000e+00 : f32
      %187 = vector.broadcast %cst_96 : f32 to vector<16x16xf32>
      %188 = arith.maximumf %186, %187 : vector<16x16xf32>
      %c0_97 = arith.constant 0 : index
      %c0_98 = arith.constant 0 : index
      %189 = vector.load %arg27[%c0_97, %c0_98] : memref<1x16xf32, #tpu.memory_space<vmem>>, vector<1x16xf32>
      %cst_99 = arith.constant dense<0.000000e+00> : vector<1x16xf32>
      %190 = tpu.matmul %189, %188, %cst_99 {dimension_numbers = #tpu.dot_dimension_numbers<[1], [1], [0], [0], [0, 0, 1, 0], [], []>} : vector<1x16xf32>, vector<16x16xf32>, vector<1x16xf32> -> vector<1x16xf32>
      %c0_100 = arith.constant 0 : index
      %c0_101 = arith.constant 0 : index
      %191 = vector.load %arg28[%c0_100, %c0_101] : memref<1x1xf32, #tpu.memory_space<vmem>>, vector<1x1xf32>
      %192 = vector.broadcast %191 : vector<1x1xf32> to vector<1x16xf32>
      %193 = arith.addf %190, %192 : vector<1x16xf32>
      %c0_102 = arith.constant 0 : index
      %c0_103 = arith.constant 0 : index
      %194 = vector.load %arg29[%c0_102, %c0_103] : memref<16x12xf32, #tpu.memory_space<vmem>>, vector<16x12xf32>
      %cst_104 = arith.constant dense<0.000000e+00> : vector<1x12xf32>
      %195 = tpu.matmul %193, %194, %cst_104 {dimension_numbers = #tpu.dot_dimension_numbers<[1], [0], [0], [1], [0, 0, 1, 1], [], []>} : vector<1x16xf32>, vector<16x12xf32>, vector<1x12xf32> -> vector<1x12xf32>
      %c0_105 = arith.constant 0 : index
      %c0_106 = arith.constant 0 : index
      %196 = vector.load %arg30[%c0_105, %c0_106] : memref<1x12xf32, #tpu.memory_space<vmem>>, vector<1x12xf32>
      %197 = arith.addf %195, %196 : vector<1x12xf32>
      %cst_107 = arith.constant 0.000000e+00 : f32
      %198 = vector.broadcast %cst_107 : f32 to vector<1x12xf32>
      %199 = arith.maximumf %197, %198 : vector<1x12xf32>
      %c0_108 = arith.constant 0 : index
      %c0_109 = arith.constant 0 : index
      %200 = vector.load %arg31[%c0_108, %c0_109] : memref<12x8xf32, #tpu.memory_space<vmem>>, vector<12x8xf32>
      %cst_110 = arith.constant dense<0.000000e+00> : vector<1x8xf32>
      %201 = tpu.matmul %199, %200, %cst_110 {dimension_numbers = #tpu.dot_dimension_numbers<[1], [0], [0], [1], [0, 0, 1, 1], [], []>} : vector<1x12xf32>, vector<12x8xf32>, vector<1x8xf32> -> vector<1x8xf32>
      %c0_111 = arith.constant 0 : index
      %c0_112 = arith.constant 0 : index
      %202 = vector.load %arg32[%c0_111, %c0_112] : memref<1x8xf32, #tpu.memory_space<vmem>>, vector<1x8xf32>
      %203 = arith.addf %201, %202 : vector<1x8xf32>
      %c0_113 = arith.constant 0 : index
      %c0_114 = arith.constant 0 : index
      %c0_115 = arith.constant 0 : index
      %204 = vector.load %arg33[%c0_113, %c0_114, %c0_115] : memref<1x1x8xf32, #tpu.memory_space<vmem>>, vector<1x1x8xf32>
      %205 = vector.shape_cast %204 : vector<1x1x8xf32> to vector<1x8xf32>
      %206 = vector.shape_cast %203 : vector<1x8xf32> to vector<1x1x8xf32>
      tpu.vector_store %arg33[%c0_113, %c0_114, %c0_115], %206 {strides = array<i32>} : memref<1x1x8xf32, #tpu.memory_space<vmem>>, vector<1x1x8xf32>,
    } else {
    }
    return
  }
  func.func @transform_0(%arg0: i32, %arg1: i32) -> (i32, i32) {
    %c0_i32 = arith.constant 0 : i32
    %c0_i32_0 = arith.constant 0 : i32
    %c0_i32_1 = arith.constant 0 : i32
    return %c0_i32, %c0_i32_0 : i32, i32
  }
  func.func @transform_1(%arg0: i32, %arg1: i32) -> (i32, i32, i32) {
    %c0_i32 = arith.constant 0 : i32
    %c0_i32_0 = arith.constant 0 : i32
    %c0_i32_1 = arith.constant 0 : i32
    return %arg0, %c0_i32, %c0_i32_0 : i32, i32, i32
  }
  func.func @transform_2(%arg0: i32, %arg1: i32) -> (i32, i32, i32) {
    %c0_i32 = arith.constant 0 : i32
    %c0_i32_0 = arith.constant 0 : i32
    %c0_i32_1 = arith.constant 0 : i32
    return %arg0, %c0_i32, %c0_i32_0 : i32, i32, i32
  }
  func.func @transform_3(%arg0: i32, %arg1: i32) -> (i32, i32) {
    %c0_i32 = arith.constant 0 : i32
    %c0_i32_0 = arith.constant 0 : i32
    %c0_i32_1 = arith.constant 0 : i32
    return %c0_i32, %c0_i32_0 : i32, i32
  }
  func.func @transform_4(%arg0: i32, %arg1: i32) -> (i32, i32) {
    %c0_i32 = arith.constant 0 : i32
    %c0_i32_0 = arith.constant 0 : i32
    %c0_i32_1 = arith.constant 0 : i32
    return %c0_i32, %c0_i32_0 : i32, i32
  }
  func.func @transform_5(%arg0: i32, %arg1: i32) -> (i32, i32) {
    %c0_i32 = arith.constant 0 : i32
    %c0_i32_0 = arith.constant 0 : i32
    %c0_i32_1 = arith.constant 0 : i32
    return %c0_i32, %c0_i32_0 : i32, i32
  }
  func.func @transform_6(%arg0: i32, %arg1: i32) -> (i32, i32) {
    %c0_i32 = arith.constant 0 : i32
    %c0_i32_0 = arith.constant 0 : i32
    %c0_i32_1 = arith.constant 0 : i32
    return %c0_i32, %c0_i32_0 : i32, i32
  }
  func.func @transform_7(%arg0: i32, %arg1: i32) -> (i32, i32, i32) {
    %c0_i32 = arith.constant 0 : i32
    %c0_i32_0 = arith.constant 0 : i32
    %c0_i32_1 = arith.constant 0 : i32
    return %arg1, %c0_i32, %c0_i32_0 : i32, i32, i32
  }
  func.func @transform_8(%arg0: i32, %arg1: i32) -> (i32, i32, i32) {
    %c0_i32 = arith.constant 0 : i32
    %c0_i32_0 = arith.constant 0 : i32
    %c0_i32_1 = arith.constant 0 : i32
    return %arg1, %c0_i32, %c0_i32_0 : i32, i32, i32
  }
  func.func @transform_9(%arg0: i32, %arg1: i32) -> (i32, i32, i32) {
    %c0_i32 = arith.constant 0 : i32
    %c0_i32_0 = arith.constant 0 : i32
    %c0_i32_1 = arith.constant 0 : i32
    return %arg1, %c0_i32, %c0_i32_0 : i32, i32, i32
  }
  func.func @transform_10(%arg0: i32, %arg1: i32) -> (i32, i32, i32) {
    %c0_i32 = arith.constant 0 : i32
    %c0_i32_0 = arith.constant 0 : i32
    %c0_i32_1 = arith.constant 0 : i32
    return %arg1, %c0_i32, %c0_i32_0 : i32, i32, i32
  }
  func.func @transform_11(%arg0: i32, %arg1: i32) -> (i32, i32, i32) {
    %c0_i32 = arith.constant 0 : i32
    %c0_i32_0 = arith.constant 0 : i32
    %c0_i32_1 = arith.constant 0 : i32
    return %arg1, %c0_i32, %c0_i32_0 : i32, i32, i32
  }
  func.func @transform_12(%arg0: i32, %arg1: i32) -> (i32, i32, i32) {
    %c0_i32 = arith.constant 0 : i32
    %c0_i32_0 = arith.constant 0 : i32
    %c0_i32_1 = arith.constant 0 : i32
    return %arg1, %c0_i32, %c0_i32_0 : i32, i32, i32
  }
  func.func @transform_13(%arg0: i32, %arg1: i32) -> (i32, i32, i32) {
    %c0_i32 = arith.constant 0 : i32
    %c0_i32_0 = arith.constant 0 : i32
    %c0_i32_1 = arith.constant 0 : i32
    return %arg1, %c0_i32, %c0_i32_0 : i32, i32, i32
  }
  func.func @transform_14(%arg0: i32, %arg1: i32) -> (i32, i32, i32) {
    %c0_i32 = arith.constant 0 : i32
    %c0_i32_0 = arith.constant 0 : i32
    %c0_i32_1 = arith.constant 0 : i32
    return %arg1, %c0_i32, %c0_i32_0 : i32, i32, i32
  }
  func.func @transform_15(%arg0: i32, %arg1: i32) -> (i32, i32, i32) {
    %c0_i32 = arith.constant 0 : i32
    %c0_i32_0 = arith.constant 0 : i32
    %c0_i32_1 = arith.constant 0 : i32
    return %arg1, %c0_i32, %c0_i32_0 : i32, i32, i32
  }
  func.func @transform_16(%arg0: i32, %arg1: i32) -> (i32, i32, i32) {
    %c0_i32 = arith.constant 0 : i32
    %c0_i32_0 = arith.constant 0 : i32
    %c0_i32_1 = arith.constant 0 : i32
    return %arg1, %c0_i32, %c0_i32_0 : i32, i32, i32
  }
  func.func @transform_17(%arg0: i32, %arg1: i32) -> (i32, i32, i32) {
    %c0_i32 = arith.constant 0 : i32
    %c0_i32_0 = arith.constant 0 : i32
    %c0_i32_1 = arith.constant 0 : i32
    return %arg1, %c0_i32, %c0_i32_0 : i32, i32, i32
  }
  func.func @transform_18(%arg0: i32, %arg1: i32) -> (i32, i32, i32) {
    %c0_i32 = arith.constant 0 : i32
    %c0_i32_0 = arith.constant 0 : i32
    %c0_i32_1 = arith.constant 0 : i32
    return %arg1, %c0_i32, %c0_i32_0 : i32, i32, i32
  }
  func.func @transform_19(%arg0: i32, %arg1: i32) -> (i32, i32, i32) {
    %c0_i32 = arith.constant 0 : i32
    %c0_i32_0 = arith.constant 0 : i32
    %c0_i32_1 = arith.constant 0 : i32
    return %arg1, %c0_i32, %c0_i32_0 : i32, i32, i32
  }
  func.func @transform_20(%arg0: i32, %arg1: i32) -> (i32, i32, i32) {
    %c0_i32 = arith.constant 0 : i32
    %c0_i32_0 = arith.constant 0 : i32
    %c0_i32_1 = arith.constant 0 : i32
    return %arg1, %c0_i32, %c0_i32_0 : i32, i32, i32
  }
  func.func @transform_21(%arg0: i32, %arg1: i32) -> (i32, i32, i32) {
    %c0_i32 = arith.constant 0 : i32
    %c0_i32_0 = arith.constant 0 : i32
    %c0_i32_1 = arith.constant 0 : i32
    return %arg1, %c0_i32, %c0_i32_0 : i32, i32, i32
  }
  func.func @transform_22(%arg0: i32, %arg1: i32) -> (i32, i32, i32) {
    %c0_i32 = arith.constant 0 : i32
    %c0_i32_0 = arith.constant 0 : i32
    %c0_i32_1 = arith.constant 0 : i32
    return %arg1, %c0_i32, %c0_i32_0 : i32, i32, i32
  }
  func.func @transform_23(%arg0: i32, %arg1: i32) -> (i32, i32) {
    %c0_i32 = arith.constant 0 : i32
    %c0_i32_0 = arith.constant 0 : i32
    %c0_i32_1 = arith.constant 0 : i32
    return %c0_i32, %c0_i32_0 : i32, i32
  }
  func.func @transform_24(%arg0: i32, %arg1: i32) -> (i32, i32) {
    %c0_i32 = arith.constant 0 : i32
    %c0_i32_0 = arith.constant 0 : i32
    %c0_i32_1 = arith.constant 0 : i32
    return %c0_i32, %c0_i32_0 : i32, i32
  }
  func.func @transform_25(%arg0: i32, %arg1: i32) -> (i32, i32) {
    %c0_i32 = arith.constant 0 : i32
    %c0_i32_0 = arith.constant 0 : i32
    %c0_i32_1 = arith.constant 0 : i32
    return %c0_i32, %c0_i32_0 : i32, i32
  }
  func.func @transform_26(%arg0: i32, %arg1: i32) -> (i32, i32) {
    %c0_i32 = arith.constant 0 : i32
    %c0_i32_0 = arith.constant 0 : i32
    %c0_i32_1 = arith.constant 0 : i32
    return %c0_i32, %c0_i32_0 : i32, i32
  }
  func.func @transform_27(%arg0: i32, %arg1: i32) -> (i32, i32) {
    %c0_i32 = arith.constant 0 : i32
    %c0_i32_0 = arith.constant 0 : i32
    %c0_i32_1 = arith.constant 0 : i32
    return %c0_i32, %c0_i32_0 : i32, i32
  }
  func.func @transform_28(%arg0: i32, %arg1: i32) -> (i32, i32) {
    %c0_i32 = arith.constant 0 : i32
    %c0_i32_0 = arith.constant 0 : i32
    %c0_i32_1 = arith.constant 0 : i32
    return %c0_i32, %c0_i32_0 : i32, i32
  }
  func.func @transform_29(%arg0: i32, %arg1: i32) -> (i32, i32) {
    %c0_i32 = arith.constant 0 : i32
    %c0_i32_0 = arith.constant 0 : i32
    %c0_i32_1 = arith.constant 0 : i32
    return %c0_i32, %c0_i32_0 : i32, i32
  }
  func.func @transform_30(%arg0: i32, %arg1: i32) -> (i32, i32) {
    %c0_i32 = arith.constant 0 : i32
    %c0_i32_0 = arith.constant 0 : i32
    %c0_i32_1 = arith.constant 0 : i32
    return %c0_i32, %c0_i32_0 : i32, i32
  }
  func.func @transform_31(%arg0: i32, %arg1: i32) -> (i32, i32, i32) {
    %c0_i32 = arith.constant 0 : i32
    %c0_i32_0 = arith.constant 0 : i32
    %c0_i32_1 = arith.constant 0 : i32
    return %arg0, %c0_i32, %c0_i32_0 : i32, i32, i32
  }
}

</mosaic_0001>

<llo_original>
// kernel: tf_model_forward.1
$region0: #{tf_model_forward.1}
  #allocation0 [shape = 'u32[]', space=smem, size = 0x4, offset = 0x4, fixed_abs, tag = 'smem constant byte address 0x4 - core index']
  #allocation1 [shape = 'u32[144,128]{1,0:T(1,128)}', space=vmem, size = 0x12000, scoped, tag = 'internal scratch']
  #allocation2 [shape = 'f32[16,32]{1,0:T(8,128)}', space=vmem, size = 0x2000, scoped, tag = 'scratch operand']
  #allocation3 [shape = 'f32[1,1]{1,0:T(1,128)S(1)}', space=vmem, size = 0x200, scoped, tag = 'scoped memory for tf_model_forward.1']
  %s0 = inlined_call_operand.smem [shape: u32[32], index: -1, kind: input, shape index: {}]
  %s1 = sld [smem:[%s0]]
  %s2 = scalar_lea.smem %s0, 1
  %s3 = sld [smem:[%s2]]
  %s4 = scalar_lea.smem %s0, 2
  %s5 = sld [smem:[%s4]]
  %s6 = scalar_lea.smem %s0, 3
  %s7 = sld [smem:[%s6]]
  %s8 = scalar_lea.smem %s0, 4
  %s9 = sld [smem:[%s8]]
  %s10 = scalar_lea.smem %s0, 5
  %s11 = sld [smem:[%s10]]
  %s12 = scalar_lea.smem %s0, 6
  %s13 = sld [smem:[%s12]]
  %s14 = scalar_lea.smem %s0, 7
  %s15 = sld [smem:[%s14]]
  %s16 = scalar_lea.smem %s0, 8
  %s17 = sld [smem:[%s16]]
  %s18 = scalar_lea.smem %s0, 9
  %s19 = sld [smem:[%s18]]
  %s20 = scalar_lea.smem %s0, 10
  %s21 = sld [smem:[%s20]]
  %s22 = scalar_lea.smem %s0, 11
  %s23 = sld [smem:[%s22]]
  %s24 = scalar_lea.smem %s0, 12
  %s25 = sld [smem:[%s24]]
  %s26 = scalar_lea.smem %s0, 13
  %s27 = sld [smem:[%s26]]
  %s28 = scalar_lea.smem %s0, 14
  %s29 = sld [smem:[%s28]]
  %s30 = scalar_lea.smem %s0, 15
  %s31 = sld [smem:[%s30]]
  %s32 = scalar_lea.smem %s0, 16
  %s33 = sld [smem:[%s32]]
  %s34 = scalar_lea.smem %s0, 17
  %s35 = sld [smem:[%s34]]
  %s36 = scalar_lea.smem %s0, 18
  %s37 = sld [smem:[%s36]]
  %s38 = scalar_lea.smem %s0, 19
  %s39 = sld [smem:[%s38]]
  %s40 = scalar_lea.smem %s0, 20
  %s41 = sld [smem:[%s40]]
  %s42 = scalar_lea.smem %s0, 21
  %s43 = sld [smem:[%s42]]
  %s44 = scalar_lea.smem %s0, 22
  %s45 = sld [smem:[%s44]]
  %s46 = scalar_lea.smem %s0, 23
  %s47 = sld [smem:[%s46]]
  %s48 = scalar_lea.smem %s0, 24
  %s49 = sld [smem:[%s48]]
  %s50 = scalar_lea.smem %s0, 25
  %s51 = sld [smem:[%s50]]
  %s52 = scalar_lea.smem %s0, 26
  %s53 = sld [smem:[%s52]]
  %s54 = scalar_lea.smem %s0, 27
  %s55 = sld [smem:[%s54]]
  %s56 = scalar_lea.smem %s0, 28
  %s57 = sld [smem:[%s56]]
  %s58 = scalar_lea.smem %s0, 29
  %s59 = sld [smem:[%s58]]
  %s60 = scalar_lea.smem %s0, 30
  %s61 = sld [smem:[%s60]]
  %s62 = scalar_lea.smem %s0, 31
  %s63 = sld [smem:[%s62]]
  %s64 = sld [smem:[#allocation0]]
  $region165: #{tf_model_forward.1} parent=0
    _
  %s66 = ssub.s32 1, %s64
  %s67 = scalar_select 0, %s66, %s64
  %v68 = vstv %s53
  %69 = vst [vmem:[#allocation3] sm:$0x1] %v68
  $region1: #{tf_model_forward.1} parent=0
    #allocation4 [shape = 'u8[1024]{0}', space=vmem, size = 0x400, scoped, tag = 'output window, operand 0']
    #allocation5 [shape = 's32[2]{0}', space=sflag, size = 0x8, scoped, tag = 'scoped memory for tf_model_forward.1']
    %70 = vsyncpa [#allocation5], 0
    %s71 = scalar_lea.sflag [#allocation5], 1
    %72 = vsyncpa %s71, 0
    loop: start=0, step=1, limit=6
    $region2: #{tf_model_forward.1} parent=1 // loop_pre_header
      _
    $region3: #{tf_model_forward.1} parent=1 // loop_header
      %s74 = sphi 0, %s78
      %p75 = scmp.ge.s32.totalorder %s74, 6
      %s81 = sphi 0, %s93
      %s82 = sphi 0, %s89
      %s83 = sphi 0, %s81
      %s84 = sphi 0, %s82
      %s85 = sphi 0, %s83
      %s86 = sphi 0, %s84
      %s94 = sphi 0, %s94
      %s96 = sphi 0, %s94
      %s97 = sphi 0, %s96
      %s111 = sphi 0, %s97
      %s117 = sphi 0, %s119
      %s120 = sphi 0, %s117
      %s121 = sphi 0, %s120
      %s137 = sphi 0, %s121
      %s143 = sphi 0, %s145
      %s146 = sphi 0, %s143
      %s147 = sphi 0, %s146
      %s163 = sphi 0, %s147
      %s167 = sphi 0, %s167
      %s169 = sphi 0, %s167
      %s170 = sphi 0, %s169
      %s184 = sphi 0, %s170
      %s188 = sphi 0, %s188
      %s190 = sphi 0, %s188
      %s191 = sphi 0, %s190
      %s205 = sphi 0, %s191
      %s209 = sphi 0, %s209
      %s211 = sphi 0, %s209
      %s212 = sphi 0, %s211
      %s226 = sphi 0, %s212
      %s230 = sphi 0, %s230
      %s232 = sphi 0, %s230
      %s233 = sphi 0, %s232
      %s247 = sphi 0, %s233
      %s253 = sphi 0, %s255
      %s256 = sphi 0, %s253
      %s257 = sphi 0, %s256
      %s273 = sphi 0, %s257
      %s279 = sphi 0, %s281
      %s282 = sphi 0, %s279
      %s283 = sphi 0, %s282
      %s299 = sphi 0, %s283
      %s305 = sphi 0, %s307
      %s308 = sphi 0, %s305
      %s309 = sphi 0, %s308
      %s325 = sphi 0, %s309
      %s331 = sphi 0, %s333
      %s334 = sphi 0, %s331
      %s335 = sphi 0, %s334
      %s351 = sphi 0, %s335
      %s357 = sphi 0, %s359
      %s360 = sphi 0, %s357
      %s361 = sphi 0, %s360
      %s377 = sphi 0, %s361
      %s383 = sphi 0, %s385
      %s386 = sphi 0, %s383
      %s387 = sphi 0, %s386
      %s403 = sphi 0, %s387
      %s409 = sphi 0, %s411
      %s412 = sphi 0, %s409
      %s413 = sphi 0, %s412
      %s429 = sphi 0, %s413
      %s435 = sphi 0, %s437
      %s438 = sphi 0, %s435
      %s439 = sphi 0, %s438
      %s455 = sphi 0, %s439
      %s461 = sphi 0, %s463
      %s464 = sphi 0, %s461
      %s465 = sphi 0, %s464
      %s481 = sphi 0, %s465
      %s487 = sphi 0, %s489
      %s490 = sphi 0, %s487
      %s491 = sphi 0, %s490
      %s507 = sphi 0, %s491
      %s513 = sphi 0, %s515
      %s516 = sphi 0, %s513
      %s517 = sphi 0, %s516
      %s533 = sphi 0, %s517
      %s539 = sphi 0, %s541
      %s542 = sphi 0, %s539
      %s543 = sphi 0, %s542
      %s559 = sphi 0, %s543
      %s565 = sphi 0, %s567
      %s568 = sphi 0, %s565
      %s569 = sphi 0, %s568
      %s585 = sphi 0, %s569
      %s591 = sphi 0, %s593
      %s594 = sphi 0, %s591
      %s595 = sphi 0, %s594
      %s611 = sphi 0, %s595
      %s617 = sphi 0, %s619
      %s620 = sphi 0, %s617
      %s621 = sphi 0, %s620
      %s637 = sphi 0, %s621
      %s643 = sphi 0, %s645
      %s646 = sphi 0, %s643
      %s647 = sphi 0, %s646
      %s663 = sphi 0, %s647
      %s667 = sphi 0, %s667
      %s669 = sphi 0, %s667
      %s670 = sphi 0, %s669
      %s684 = sphi 0, %s670
      %s688 = sphi 0, %s688
      %s690 = sphi 0, %s688
      %s691 = sphi 0, %s690
      %s705 = sphi 0, %s691
      %s709 = sphi 0, %s709
      %s711 = sphi 0, %s709
      %s712 = sphi 0, %s711
      %s726 = sphi 0, %s712
      %s730 = sphi 0, %s730
      %s732 = sphi 0, %s730
      %s733 = sphi 0, %s732
      %s747 = sphi 0, %s733
      %s751 = sphi 0, %s751
      %s753 = sphi 0, %s751
      %s754 = sphi 0, %s753
      %s768 = sphi 0, %s754
      %s772 = sphi 0, %s772
      %s774 = sphi 0, %s772
      %s775 = sphi 0, %s774
      %s789 = sphi 0, %s775
      %s793 = sphi 0, %s793
      %s795 = sphi 0, %s793
      %s796 = sphi 0, %s795
      %s810 = sphi 0, %s796
      %s814 = sphi 0, %s814
      %s816 = sphi 0, %s814
      %s817 = sphi 0, %s816
      %s831 = sphi 0, %s817
      %s837 = sphi 0, %s839
      %s840 = sphi 0, %s837
      %s841 = sphi 0, %s840
      %s857 = sphi 0, %s841
    $region4: #{tf_model_forward.1} parent=1 // loop_header_branch
      %77 = sbr.rel (%p75) target = $region8
    $region5: #{tf_model_forward.1} parent=1 // loop_body
      %s79 = ssub.s32 %s74, 1
      %s80 = ssub.s32 %s74, 2
      %s87 = sadd.s32 1, %s82
      %p88 = scmp.ge.s32.totalorder %s87, 2
      %s89 = scalar_select %p88, 0, %s87
      %s90 = sadd.s32 1, %s81
      %s91 = scalar_select %p88, %s90, %s81
      %p92 = scmp.ge.s32.totalorder %s91, 2
      %s93 = scalar_select %p92, 0, %s91
      %s95 = sadd.s32 %s94, 1
      %p98 = scmp.eq.s32.totalorder %s74, 3
      %p99 = scmp.ne.s32.totalorder %s94, %s96
      %p100 = scmp.eq.s32.totalorder %s74, 0
      %p101 = por %p99, %p100
      %p102 = scmp.ne.s32.totalorder %s94, %s96
      %p103 = scmp.eq.s32.totalorder %s79, 3
      %p104 = por %p102, %p103
      %p105 = scmp.ne.s32.totalorder %s96, %s97
      %p106 = scmp.eq.s32.totalorder %s79, 0
      %p107 = por %p105, %p106
      %p108 = scmp.ne.s32.totalorder %s96, %s97
      %p109 = scmp.eq.s32.totalorder %s80, 3
      %p110 = por %p108, %p109
      %p112 = scmp.ne.s32.totalorder %s97, %s111
      %p113 = scmp.eq.s32.totalorder %s80, 0
      %p114 = por %p112, %p113
      %s115 = ssub.s32 %s81, %s93
      %p116 = scmp.eq.s32.totalorder %s115, 0
      %s118 = sadd.s32 %s117, 1
      %s119 = scalar_select %p116, %s117, %s118
      %p122 = pneg %p116
      %p123 = scmp.eq.s32.totalorder %s74, 3
      %p124 = por %p122, %p123
      %p125 = scmp.ne.s32.totalorder %s117, %s120
      %p126 = scmp.eq.s32.totalorder %s74, 0
      %p127 = por %p125, %p126
      %p128 = scmp.ne.s32.totalorder %s117, %s120
      %p129 = scmp.eq.s32.totalorder %s79, 3
      %p130 = por %p128, %p129
      %p131 = scmp.ne.s32.totalorder %s120, %s121
      %p132 = scmp.eq.s32.totalorder %s79, 0
      %p133 = por %p131, %p132
      %p134 = scmp.ne.s32.totalorder %s120, %s121
      %p135 = scmp.eq.s32.totalorder %s80, 3
      %p136 = por %p134, %p135
      %p138 = scmp.ne.s32.totalorder %s121, %s137
      %p139 = scmp.eq.s32.totalorder %s80, 0
      %p140 = por %p138, %p139
      %s141 = ssub.s32 %s81, %s93
      %p142 = scmp.eq.s32.totalorder %s141, 0
      %s144 = sadd.s32 %s143, 1
      %s145 = scalar_select %p142, %s143, %s144
      %p148 = pneg %p142
      %p149 = scmp.eq.s32.totalorder %s74, 3
      %p150 = por %p148, %p149
      %p151 = scmp.ne.s32.totalorder %s143, %s146
      %p152 = scmp.eq.s32.totalorder %s74, 0
      %p153 = por %p151, %p152
      %p154 = scmp.ne.s32.totalorder %s143, %s146
      %p155 = scmp.eq.s32.totalorder %s79, 3
      %p156 = por %p154, %p155
      %p157 = scmp.ne.s32.totalorder %s146, %s147
      %p158 = scmp.eq.s32.totalorder %s79, 0
      %p159 = por %p157, %p158
      %p160 = scmp.ne.s32.totalorder %s146, %s147
      %p161 = scmp.eq.s32.totalorder %s80, 3
      %p162 = por %p160, %p161
      %p164 = scmp.ne.s32.totalorder %s147, %s163
      %p165 = scmp.eq.s32.totalorder %s80, 0
      %p166 = por %p164, %p165
      %s168 = sadd.s32 %s167, 1
      %p171 = scmp.eq.s32.totalorder %s74, 3
      %p172 = scmp.ne.s32.totalorder %s167, %s169
      %p173 = scmp.eq.s32.totalorder %s74, 0
      %p174 = por %p172, %p173
      %p175 = scmp.ne.s32.totalorder %s167, %s169
      %p176 = scmp.eq.s32.totalorder %s79, 3
      %p177 = por %p175, %p176
      %p178 = scmp.ne.s32.totalorder %s169, %s170
      %p179 = scmp.eq.s32.totalorder %s79, 0
      %p180 = por %p178, %p179
      %p181 = scmp.ne.s32.totalorder %s169, %s170
      %p182 = scmp.eq.s32.totalorder %s80, 3
      %p183 = por %p181, %p182
      %p185 = scmp.ne.s32.totalorder %s170, %s184
      %p186 = scmp.eq.s32.totalorder %s80, 0
      %p187 = por %p185, %p186
      %s189 = sadd.s32 %s188, 1
      %p192 = scmp.eq.s32.totalorder %s74, 3
      %p193 = scmp.ne.s32.totalorder %s188, %s190
      %p194 = scmp.eq.s32.totalorder %s74, 0
      %p195 = por %p193, %p194
      %p196 = scmp.ne.s32.totalorder %s188, %s190
      %p197 = scmp.eq.s32.totalorder %s79, 3
      %p198 = por %p196, %p197
      %p199 = scmp.ne.s32.totalorder %s190, %s191
      %p200 = scmp.eq.s32.totalorder %s79, 0
      %p201 = por %p199, %p200
      %p202 = scmp.ne.s32.totalorder %s190, %s191
      %p203 = scmp.eq.s32.totalorder %s80, 3
      %p204 = por %p202, %p203
      %p206 = scmp.ne.s32.totalorder %s191, %s205
      %p207 = scmp.eq.s32.totalorder %s80, 0
      %p208 = por %p206, %p207
      %s210 = sadd.s32 %s209, 1
      %p213 = scmp.eq.s32.totalorder %s74, 3
      %p214 = scmp.ne.s32.totalorder %s209, %s211
      %p215 = scmp.eq.s32.totalorder %s74, 0
      %p216 = por %p214, %p215
      %p217 = scmp.ne.s32.totalorder %s209, %s211
      %p218 = scmp.eq.s32.totalorder %s79, 3
      %p219 = por %p217, %p218
      %p220 = scmp.ne.s32.totalorder %s211, %s212
      %p221 = scmp.eq.s32.totalorder %s79, 0
      %p222 = por %p220, %p221
      %p223 = scmp.ne.s32.totalorder %s211, %s212
      %p224 = scmp.eq.s32.totalorder %s80, 3
      %p225 = por %p223, %p224
      %p227 = scmp.ne.s32.totalorder %s212, %s226
      %p228 = scmp.eq.s32.totalorder %s80, 0
      %p229 = por %p227, %p228
      %s231 = sadd.s32 %s230, 1
      %p234 = scmp.eq.s32.totalorder %s74, 3
      %p235 = scmp.ne.s32.totalorder %s230, %s232
      %p236 = scmp.eq.s32.totalorder %s74, 0
      %p237 = por %p235, %p236
      %p238 = scmp.ne.s32.totalorder %s230, %s232
      %p239 = scmp.eq.s32.totalorder %s79, 3
      %p240 = por %p238, %p239
      %p241 = scmp.ne.s32.totalorder %s232, %s233
      %p242 = scmp.eq.s32.totalorder %s79, 0
      %p243 = por %p241, %p242
      %p244 = scmp.ne.s32.totalorder %s232, %s233
      %p245 = scmp.eq.s32.totalorder %s80, 3
      %p246 = por %p244, %p245
      %p248 = scmp.ne.s32.totalorder %s233, %s247
      %p249 = scmp.eq.s32.totalorder %s80, 0
      %p250 = por %p248, %p249
      %s251 = ssub.s32 %s82, %s89
      %p252 = scmp.eq.s32.totalorder %s251, 0
      %s254 = sadd.s32 %s253, 1
      %s255 = scalar_select %p252, %s253, %s254
      %p258 = pneg %p252
      %p259 = scmp.eq.s32.totalorder %s74, 3
      %p260 = por %p258, %p259
      %p261 = scmp.ne.s32.totalorder %s253, %s256
      %p262 = scmp.eq.s32.totalorder %s74, 0
      %p263 = por %p261, %p262
      %p264 = scmp.ne.s32.totalorder %s253, %s256
      %p265 = scmp.eq.s32.totalorder %s79, 3
      %p266 = por %p264, %p265
      %p267 = scmp.ne.s32.totalorder %s256, %s257
      %p268 = scmp.eq.s32.totalorder %s79, 0
      %p269 = por %p267, %p268
      %p270 = scmp.ne.s32.totalorder %s256, %s257
      %p271 = scmp.eq.s32.totalorder %s80, 3
      %p272 = por %p270, %p271
      %p274 = scmp.ne.s32.totalorder %s257, %s273
      %p275 = scmp.eq.s32.totalorder %s80, 0
      %p276 = por %p274, %p275
      %s277 = ssub.s32 %s82, %s89
      %p278 = scmp.eq.s32.totalorder %s277, 0
      %s280 = sadd.s32 %s279, 1
      %s281 = scalar_select %p278, %s279, %s280
      %p284 = pneg %p278
      %p285 = scmp.eq.s32.totalorder %s74, 3
      %p286 = por %p284, %p285
      %p287 = scmp.ne.s32.totalorder %s279, %s282
      %p288 = scmp.eq.s32.totalorder %s74, 0
      %p289 = por %p287, %p288
      %p290 = scmp.ne.s32.totalorder %s279, %s282
      %p291 = scmp.eq.s32.totalorder %s79, 3
      %p292 = por %p290, %p291
      %p293 = scmp.ne.s32.totalorder %s282, %s283
      %p294 = scmp.eq.s32.totalorder %s79, 0
      %p295 = por %p293, %p294
      %p296 = scmp.ne.s32.totalorder %s282, %s283
      %p297 = scmp.eq.s32.totalorder %s80, 3
      %p298 = por %p296, %p297
      %p300 = scmp.ne.s32.totalorder %s283, %s299
      %p301 = scmp.eq.s32.totalorder %s80, 0
      %p302 = por %p300, %p301
      %s303 = ssub.s32 %s82, %s89
      %p304 = scmp.eq.s32.totalorder %s303, 0
      %s306 = sadd.s32 %s305, 1
      %s307 = scalar_select %p304, %s305, %s306
      %p310 = pneg %p304
      %p311 = scmp.eq.s32.totalorder %s74, 3
      %p312 = por %p310, %p311
      %p313 = scmp.ne.s32.totalorder %s305, %s308
      %p314 = scmp.eq.s32.totalorder %s74, 0
      %p315 = por %p313, %p314
      %p316 = scmp.ne.s32.totalorder %s305, %s308
      %p317 = scmp.eq.s32.totalorder %s79, 3
      %p318 = por %p316, %p317
      %p319 = scmp.ne.s32.totalorder %s308, %s309
      %p320 = scmp.eq.s32.totalorder %s79, 0
      %p321 = por %p319, %p320
      %p322 = scmp.ne.s32.totalorder %s308, %s309
      %p323 = scmp.eq.s32.totalorder %s80, 3
      %p324 = por %p322, %p323
      %p326 = scmp.ne.s32.totalorder %s309, %s325
      %p327 = scmp.eq.s32.totalorder %s80, 0
      %p328 = por %p326, %p327
      %s329 = ssub.s32 %s82, %s89
      %p330 = scmp.eq.s32.totalorder %s329, 0
      %s332 = sadd.s32 %s331, 1
      %s333 = scalar_select %p330, %s331, %s332
      %p336 = pneg %p330
      %p337 = scmp.eq.s32.totalorder %s74, 3
      %p338 = por %p336, %p337
      %p339 = scmp.ne.s32.totalorder %s331, %s334
      %p340 = scmp.eq.s32.totalorder %s74, 0
      %p341 = por %p339, %p340
      %p342 = scmp.ne.s32.totalorder %s331, %s334
      %p343 = scmp.eq.s32.totalorder %s79, 3
      %p344 = por %p342, %p343
      %p345 = scmp.ne.s32.totalorder %s334, %s335
      %p346 = scmp.eq.s32.totalorder %s79, 0
      %p347 = por %p345, %p346
      %p348 = scmp.ne.s32.totalorder %s334, %s335
      %p349 = scmp.eq.s32.totalorder %s80, 3
      %p350 = por %p348, %p349
      %p352 = scmp.ne.s32.totalorder %s335, %s351
      %p353 = scmp.eq.s32.totalorder %s80, 0
      %p354 = por %p352, %p353
      %s355 = ssub.s32 %s82, %s89
      %p356 = scmp.eq.s32.totalorder %s355, 0
      %s358 = sadd.s32 %s357, 1
      %s359 = scalar_select %p356, %s357, %s358
      %p362 = pneg %p356
      %p363 = scmp.eq.s32.totalorder %s74, 3
      %p364 = por %p362, %p363
      %p365 = scmp.ne.s32.totalorder %s357, %s360
      %p366 = scmp.eq.s32.totalorder %s74, 0
      %p367 = por %p365, %p366
      %p368 = scmp.ne.s32.totalorder %s357, %s360
      %p369 = scmp.eq.s32.totalorder %s79, 3
      %p370 = por %p368, %p369
      %p371 = scmp.ne.s32.totalorder %s360, %s361
      %p372 = scmp.eq.s32.totalorder %s79, 0
      %p373 = por %p371, %p372
      %p374 = scmp.ne.s32.totalorder %s360, %s361
      %p375 = scmp.eq.s32.totalorder %s80, 3
      %p376 = por %p374, %p375
      %p378 = scmp.ne.s32.totalorder %s361, %s377
      %p379 = scmp.eq.s32.totalorder %s80, 0
      %p380 = por %p378, %p379
      %s381 = ssub.s32 %s82, %s89
      %p382 = scmp.eq.s32.totalorder %s381, 0
      %s384 = sadd.s32 %s383, 1
      %s385 = scalar_select %p382, %s383, %s384
      %p388 = pneg %p382
      %p389 = scmp.eq.s32.totalorder %s74, 3
      %p390 = por %p388, %p389
      %p391 = scmp.ne.s32.totalorder %s383, %s386
      %p392 = scmp.eq.s32.totalorder %s74, 0
      %p393 = por %p391, %p392
      %p394 = scmp.ne.s32.totalorder %s383, %s386
      %p395 = scmp.eq.s32.totalorder %s79, 3
      %p396 = por %p394, %p395
      %p397 = scmp.ne.s32.totalorder %s386, %s387
      %p398 = scmp.eq.s32.totalorder %s79, 0
      %p399 = por %p397, %p398
      %p400 = scmp.ne.s32.totalorder %s386, %s387
      %p401 = scmp.eq.s32.totalorder %s80, 3
      %p402 = por %p400, %p401
      %p404 = scmp.ne.s32.totalorder %s387, %s403
      %p405 = scmp.eq.s32.totalorder %s80, 0
      %p406 = por %p404, %p405
      %s407 = ssub.s32 %s82, %s89
      %p408 = scmp.eq.s32.totalorder %s407, 0
      %s410 = sadd.s32 %s409, 1
      %s411 = scalar_select %p408, %s409, %s410
      %p414 = pneg %p408
      %p415 = scmp.eq.s32.totalorder %s74, 3
      %p416 = por %p414, %p415
      %p417 = scmp.ne.s32.totalorder %s409, %s412
      %p418 = scmp.eq.s32.totalorder %s74, 0
      %p419 = por %p417, %p418
      %p420 = scmp.ne.s32.totalorder %s409, %s412
      %p421 = scmp.eq.s32.totalorder %s79, 3
      %p422 = por %p420, %p421
      %p423 = scmp.ne.s32.totalorder %s412, %s413
      %p424 = scmp.eq.s32.totalorder %s79, 0
      %p425 = por %p423, %p424
      %p426 = scmp.ne.s32.totalorder %s412, %s413
      %p427 = scmp.eq.s32.totalorder %s80, 3
      %p428 = por %p426, %p427
      %p430 = scmp.ne.s32.totalorder %s413, %s429
      %p431 = scmp.eq.s32.totalorder %s80, 0
      %p432 = por %p430, %p431
      %s433 = ssub.s32 %s82, %s89
      %p434 = scmp.eq.s32.totalorder %s433, 0
      %s436 = sadd.s32 %s435, 1
      %s437 = scalar_select %p434, %s435, %s436
      %p440 = pneg %p434
      %p441 = scmp.eq.s32.totalorder %s74, 3
      %p442 = por %p440, %p441
      %p443 = scmp.ne.s32.totalorder %s435, %s438
      %p444 = scmp.eq.s32.totalorder %s74, 0
      %p445 = por %p443, %p444
      %p446 = scmp.ne.s32.totalorder %s435, %s438
      %p447 = scmp.eq.s32.totalorder %s79, 3
      %p448 = por %p446, %p447
      %p449 = scmp.ne.s32.totalorder %s438, %s439
      %p450 = scmp.eq.s32.totalorder %s79, 0
      %p451 = por %p449, %p450
      %p452 = scmp.ne.s32.totalorder %s438, %s439
      %p453 = scmp.eq.s32.totalorder %s80, 3
      %p454 = por %p452, %p453
      %p456 = scmp.ne.s32.totalorder %s439, %s455
      %p457 = scmp.eq.s32.totalorder %s80, 0
      %p458 = por %p456, %p457
      %s459 = ssub.s32 %s82, %s89
      %p460 = scmp.eq.s32.totalorder %s459, 0
      %s462 = sadd.s32 %s461, 1
      %s463 = scalar_select %p460, %s461, %s462
      %p466 = pneg %p460
      %p467 = scmp.eq.s32.totalorder %s74, 3
      %p468 = por %p466, %p467
      %p469 = scmp.ne.s32.totalorder %s461, %s464
      %p470 = scmp.eq.s32.totalorder %s74, 0
      %p471 = por %p469, %p470
      %p472 = scmp.ne.s32.totalorder %s461, %s464
      %p473 = scmp.eq.s32.totalorder %s79, 3
      %p474 = por %p472, %p473
      %p475 = scmp.ne.s32.totalorder %s464, %s465
      %p476 = scmp.eq.s32.totalorder %s79, 0
      %p477 = por %p475, %p476
      %p478 = scmp.ne.s32.totalorder %s464, %s465
      %p479 = scmp.eq.s32.totalorder %s80, 3
      %p480 = por %p478, %p479
      %p482 = scmp.ne.s32.totalorder %s465, %s481
      %p483 = scmp.eq.s32.totalorder %s80, 0
      %p484 = por %p482, %p483
      %s485 = ssub.s32 %s82, %s89
      %p486 = scmp.eq.s32.totalorder %s485, 0
      %s488 = sadd.s32 %s487, 1
      %s489 = scalar_select %p486, %s487, %s488
      %p492 = pneg %p486
      %p493 = scmp.eq.s32.totalorder %s74, 3
      %p494 = por %p492, %p493
      %p495 = scmp.ne.s32.totalorder %s487, %s490
      %p496 = scmp.eq.s32.totalorder %s74, 0
      %p497 = por %p495, %p496
      %p498 = scmp.ne.s32.totalorder %s487, %s490
      %p499 = scmp.eq.s32.totalorder %s79, 3
      %p500 = por %p498, %p499
      %p501 = scmp.ne.s32.totalorder %s490, %s491
      %p502 = scmp.eq.s32.totalorder %s79, 0
      %p503 = por %p501, %p502
      %p504 = scmp.ne.s32.totalorder %s490, %s491
      %p505 = scmp.eq.s32.totalorder %s80, 3
      %p506 = por %p504, %p505
      %p508 = scmp.ne.s32.totalorder %s491, %s507
      %p509 = scmp.eq.s32.totalorder %s80, 0
      %p510 = por %p508, %p509
      %s511 = ssub.s32 %s82, %s89
      %p512 = scmp.eq.s32.totalorder %s511, 0
      %s514 = sadd.s32 %s513, 1
      %s515 = scalar_select %p512, %s513, %s514
      %p518 = pneg %p512
      %p519 = scmp.eq.s32.totalorder %s74, 3
      %p520 = por %p518, %p519
      %p521 = scmp.ne.s32.totalorder %s513, %s516
      %p522 = scmp.eq.s32.totalorder %s74, 0
      %p523 = por %p521, %p522
      %p524 = scmp.ne.s32.totalorder %s513, %s516
      %p525 = scmp.eq.s32.totalorder %s79, 3
      %p526 = por %p524, %p525
      %p527 = scmp.ne.s32.totalorder %s516, %s517
      %p528 = scmp.eq.s32.totalorder %s79, 0
      %p529 = por %p527, %p528
      %p530 = scmp.ne.s32.totalorder %s516, %s517
      %p531 = scmp.eq.s32.totalorder %s80, 3
      %p532 = por %p530, %p531
      %p534 = scmp.ne.s32.totalorder %s517, %s533
      %p535 = scmp.eq.s32.totalorder %s80, 0
      %p536 = por %p534, %p535
      %s537 = ssub.s32 %s82, %s89
      %p538 = scmp.eq.s32.totalorder %s537, 0
      %s540 = sadd.s32 %s539, 1
      %s541 = scalar_select %p538, %s539, %s540
      %p544 = pneg %p538
      %p545 = scmp.eq.s32.totalorder %s74, 3
      %p546 = por %p544, %p545
      %p547 = scmp.ne.s32.totalorder %s539, %s542
      %p548 = scmp.eq.s32.totalorder %s74, 0
      %p549 = por %p547, %p548
      %p550 = scmp.ne.s32.totalorder %s539, %s542
      %p551 = scmp.eq.s32.totalorder %s79, 3
      %p552 = por %p550, %p551
      %p553 = scmp.ne.s32.totalorder %s542, %s543
      %p554 = scmp.eq.s32.totalorder %s79, 0
      %p555 = por %p553, %p554
      %p556 = scmp.ne.s32.totalorder %s542, %s543
      %p557 = scmp.eq.s32.totalorder %s80, 3
      %p558 = por %p556, %p557
      %p560 = scmp.ne.s32.totalorder %s543, %s559
      %p561 = scmp.eq.s32.totalorder %s80, 0
      %p562 = por %p560, %p561
      %s563 = ssub.s32 %s82, %s89
      %p564 = scmp.eq.s32.totalorder %s563, 0
      %s566 = sadd.s32 %s565, 1
      %s567 = scalar_select %p564, %s565, %s566
      %p570 = pneg %p564
      %p571 = scmp.eq.s32.totalorder %s74, 3
      %p572 = por %p570, %p571
      %p573 = scmp.ne.s32.totalorder %s565, %s568
      %p574 = scmp.eq.s32.totalorder %s74, 0
      %p575 = por %p573, %p574
      %p576 = scmp.ne.s32.totalorder %s565, %s568
      %p577 = scmp.eq.s32.totalorder %s79, 3
      %p578 = por %p576, %p577
      %p579 = scmp.ne.s32.totalorder %s568, %s569
      %p580 = scmp.eq.s32.totalorder %s79, 0
      %p581 = por %p579, %p580
      %p582 = scmp.ne.s32.totalorder %s568, %s569
      %p583 = scmp.eq.s32.totalorder %s80, 3
      %p584 = por %p582, %p583
      %p586 = scmp.ne.s32.totalorder %s569, %s585
      %p587 = scmp.eq.s32.totalorder %s80, 0
      %p588 = por %p586, %p587
      %s589 = ssub.s32 %s82, %s89
      %p590 = scmp.eq.s32.totalorder %s589, 0
      %s592 = sadd.s32 %s591, 1
      %s593 = scalar_select %p590, %s591, %s592
      %p596 = pneg %p590
      %p597 = scmp.eq.s32.totalorder %s74, 3
      %p598 = por %p596, %p597
      %p599 = scmp.ne.s32.totalorder %s591, %s594
      %p600 = scmp.eq.s32.totalorder %s74, 0
      %p601 = por %p599, %p600
      %p602 = scmp.ne.s32.totalorder %s591, %s594
      %p603 = scmp.eq.s32.totalorder %s79, 3
      %p604 = por %p602, %p603
      %p605 = scmp.ne.s32.totalorder %s594, %s595
      %p606 = scmp.eq.s32.totalorder %s79, 0
      %p607 = por %p605, %p606
      %p608 = scmp.ne.s32.totalorder %s594, %s595
      %p609 = scmp.eq.s32.totalorder %s80, 3
      %p610 = por %p608, %p609
      %p612 = scmp.ne.s32.totalorder %s595, %s611
      %p613 = scmp.eq.s32.totalorder %s80, 0
      %p614 = por %p612, %p613
      %s615 = ssub.s32 %s82, %s89
      %p616 = scmp.eq.s32.totalorder %s615, 0
      %s618 = sadd.s32 %s617, 1
      %s619 = scalar_select %p616, %s617, %s618
      %p622 = pneg %p616
      %p623 = scmp.eq.s32.totalorder %s74, 3
      %p624 = por %p622, %p623
      %p625 = scmp.ne.s32.totalorder %s617, %s620
      %p626 = scmp.eq.s32.totalorder %s74, 0
      %p627 = por %p625, %p626
      %p628 = scmp.ne.s32.totalorder %s617, %s620
      %p629 = scmp.eq.s32.totalorder %s79, 3
      %p630 = por %p628, %p629
      %p631 = scmp.ne.s32.totalorder %s620, %s621
      %p632 = scmp.eq.s32.totalorder %s79, 0
      %p633 = por %p631, %p632
      %p634 = scmp.ne.s32.totalorder %s620, %s621
      %p635 = scmp.eq.s32.totalorder %s80, 3
      %p636 = por %p634, %p635
      %p638 = scmp.ne.s32.totalorder %s621, %s637
      %p639 = scmp.eq.s32.totalorder %s80, 0
      %p640 = por %p638, %p639
      %s641 = ssub.s32 %s82, %s89
      %p642 = scmp.eq.s32.totalorder %s641, 0
      %s644 = sadd.s32 %s643, 1
      %s645 = scalar_select %p642, %s643, %s644
      %p648 = pneg %p642
      %p649 = scmp.eq.s32.totalorder %s74, 3
      %p650 = por %p648, %p649
      %p651 = scmp.ne.s32.totalorder %s643, %s646
      %p652 = scmp.eq.s32.totalorder %s74, 0
      %p653 = por %p651, %p652
      %p654 = scmp.ne.s32.totalorder %s643, %s646
      %p655 = scmp.eq.s32.totalorder %s79, 3
      %p656 = por %p654, %p655
      %p657 = scmp.ne.s32.totalorder %s646, %s647
      %p658 = scmp.eq.s32.totalorder %s79, 0
      %p659 = por %p657, %p658
      %p660 = scmp.ne.s32.totalorder %s646, %s647
      %p661 = scmp.eq.s32.totalorder %s80, 3
      %p662 = por %p660, %p661
      %p664 = scmp.ne.s32.totalorder %s647, %s663
      %p665 = scmp.eq.s32.totalorder %s80, 0
      %p666 = por %p664, %p665
      %s668 = sadd.s32 %s667, 1
      %p671 = scmp.eq.s32.totalorder %s74, 3
      %p672 = scmp.ne.s32.totalorder %s667, %s669
      %p673 = scmp.eq.s32.totalorder %s74, 0
      %p674 = por %p672, %p673
      %p675 = scmp.ne.s32.totalorder %s667, %s669
      %p676 = scmp.eq.s32.totalorder %s79, 3
      %p677 = por %p675, %p676
      %p678 = scmp.ne.s32.totalorder %s669, %s670
      %p679 = scmp.eq.s32.totalorder %s79, 0
      %p680 = por %p678, %p679
      %p681 = scmp.ne.s32.totalorder %s669, %s670
      %p682 = scmp.eq.s32.totalorder %s80, 3
      %p683 = por %p681, %p682
      %p685 = scmp.ne.s32.totalorder %s670, %s684
      %p686 = scmp.eq.s32.totalorder %s80, 0
      %p687 = por %p685, %p686
      %s689 = sadd.s32 %s688, 1
      %p692 = scmp.eq.s32.totalorder %s74, 3
      %p693 = scmp.ne.s32.totalorder %s688, %s690
      %p694 = scmp.eq.s32.totalorder %s74, 0
      %p695 = por %p693, %p694
      %p696 = scmp.ne.s32.totalorder %s688, %s690
      %p697 = scmp.eq.s32.totalorder %s79, 3
      %p698 = por %p696, %p697
      %p699 = scmp.ne.s32.totalorder %s690, %s691
      %p700 = scmp.eq.s32.totalorder %s79, 0
      %p701 = por %p699, %p700
      %p702 = scmp.ne.s32.totalorder %s690, %s691
      %p703 = scmp.eq.s32.totalorder %s80, 3
      %p704 = por %p702, %p703
      %p706 = scmp.ne.s32.totalorder %s691, %s705
      %p707 = scmp.eq.s32.totalorder %s80, 0
      %p708 = por %p706, %p707
      %s710 = sadd.s32 %s709, 1
      %p713 = scmp.eq.s32.totalorder %s74, 3
      %p714 = scmp.ne.s32.totalorder %s709, %s711
      %p715 = scmp.eq.s32.totalorder %s74, 0
      %p716 = por %p714, %p715
      %p717 = scmp.ne.s32.totalorder %s709, %s711
      %p718 = scmp.eq.s32.totalorder %s79, 3
      %p719 = por %p717, %p718
      %p720 = scmp.ne.s32.totalorder %s711, %s712
      %p721 = scmp.eq.s32.totalorder %s79, 0
      %p722 = por %p720, %p721
      %p723 = scmp.ne.s32.totalorder %s711, %s712
      %p724 = scmp.eq.s32.totalorder %s80, 3
      %p725 = por %p723, %p724
      %p727 = scmp.ne.s32.totalorder %s712, %s726
      %p728 = scmp.eq.s32.totalorder %s80, 0
      %p729 = por %p727, %p728
      %s731 = sadd.s32 %s730, 1
      %p734 = scmp.eq.s32.totalorder %s74, 3
      %p735 = scmp.ne.s32.totalorder %s730, %s732
      %p736 = scmp.eq.s32.totalorder %s74, 0
      %p737 = por %p735, %p736
      %p738 = scmp.ne.s32.totalorder %s730, %s732
      %p739 = scmp.eq.s32.totalorder %s79, 3
      %p740 = por %p738, %p739
      %p741 = scmp.ne.s32.totalorder %s732, %s733
      %p742 = scmp.eq.s32.totalorder %s79, 0
      %p743 = por %p741, %p742
      %p744 = scmp.ne.s32.totalorder %s732, %s733
      %p745 = scmp.eq.s32.totalorder %s80, 3
      %p746 = por %p744, %p745
      %p748 = scmp.ne.s32.totalorder %s733, %s747
      %p749 = scmp.eq.s32.totalorder %s80, 0
      %p750 = por %p748, %p749
      %s752 = sadd.s32 %s751, 1
      %p755 = scmp.eq.s32.totalorder %s74, 3
      %p756 = scmp.ne.s32.totalorder %s751, %s753
      %p757 = scmp.eq.s32.totalorder %s74, 0
      %p758 = por %p756, %p757
      %p759 = scmp.ne.s32.totalorder %s751, %s753
      %p760 = scmp.eq.s32.totalorder %s79, 3
      %p761 = por %p759, %p760
      %p762 = scmp.ne.s32.totalorder %s753, %s754
      %p763 = scmp.eq.s32.totalorder %s79, 0
      %p764 = por %p762, %p763
      %p765 = scmp.ne.s32.totalorder %s753, %s754
      %p766 = scmp.eq.s32.totalorder %s80, 3
      %p767 = por %p765, %p766
      %p769 = scmp.ne.s32.totalorder %s754, %s768
      %p770 = scmp.eq.s32.totalorder %s80, 0
      %p771 = por %p769, %p770
      %s773 = sadd.s32 %s772, 1
      %p776 = scmp.eq.s32.totalorder %s74, 3
      %p777 = scmp.ne.s32.totalorder %s772, %s774
      %p778 = scmp.eq.s32.totalorder %s74, 0
      %p779 = por %p777, %p778
      %p780 = scmp.ne.s32.totalorder %s772, %s774
      %p781 = scmp.eq.s32.totalorder %s79, 3
      %p782 = por %p780, %p781
      %p783 = scmp.ne.s32.totalorder %s774, %s775
      %p784 = scmp.eq.s32.totalorder %s79, 0
      %p785 = por %p783, %p784
      %p786 = scmp.ne.s32.totalorder %s774, %s775
      %p787 = scmp.eq.s32.totalorder %s80, 3
      %p788 = por %p786, %p787
      %p790 = scmp.ne.s32.totalorder %s775, %s789
      %p791 = scmp.eq.s32.totalorder %s80, 0
      %p792 = por %p790, %p791
      %s794 = sadd.s32 %s793, 1
      %p797 = scmp.eq.s32.totalorder %s74, 3
      %p798 = scmp.ne.s32.totalorder %s793, %s795
      %p799 = scmp.eq.s32.totalorder %s74, 0
      %p800 = por %p798, %p799
      %p801 = scmp.ne.s32.totalorder %s793, %s795
      %p802 = scmp.eq.s32.totalorder %s79, 3
      %p803 = por %p801, %p802
      %p804 = scmp.ne.s32.totalorder %s795, %s796
      %p805 = scmp.eq.s32.totalorder %s79, 0
      %p806 = por %p804, %p805
      %p807 = scmp.ne.s32.totalorder %s795, %s796
      %p808 = scmp.eq.s32.totalorder %s80, 3
      %p809 = por %p807, %p808
      %p811 = scmp.ne.s32.totalorder %s796, %s810
      %p812 = scmp.eq.s32.totalorder %s80, 0
      %p813 = por %p811, %p812
      %s815 = sadd.s32 %s814, 1
      %p818 = scmp.eq.s32.totalorder %s74, 3
      %p819 = scmp.ne.s32.totalorder %s814, %s816
      %p820 = scmp.eq.s32.totalorder %s74, 0
      %p821 = por %p819, %p820
      %p822 = scmp.ne.s32.totalorder %s814, %s816
      %p823 = scmp.eq.s32.totalorder %s79, 3
      %p824 = por %p822, %p823
      %p825 = scmp.ne.s32.totalorder %s816, %s817
      %p826 = scmp.eq.s32.totalorder %s79, 0
      %p827 = por %p825, %p826
      %p828 = scmp.ne.s32.totalorder %s816, %s817
      %p829 = scmp.eq.s32.totalorder %s80, 3
      %p830 = por %p828, %p829
      %p832 = scmp.ne.s32.totalorder %s817, %s831
      %p833 = scmp.eq.s32.totalorder %s80, 0
      %p834 = por %p832, %p833
      %s835 = ssub.s32 %s81, %s93
      %p836 = scmp.eq.s32.totalorder %s835, 0
      %s838 = sadd.s32 %s837, 1
      %s839 = scalar_select %p836, %s837, %s838
      %p842 = pneg %p836
      %p843 = scmp.eq.s32.totalorder %s74, 3
      %p844 = por %p842, %p843
      %p845 = scmp.ne.s32.totalorder %s837, %s840
      %p846 = scmp.eq.s32.totalorder %s74, 0
      %p847 = por %p845, %p846
      %p848 = scmp.ne.s32.totalorder %s837, %s840
      %p849 = scmp.eq.s32.totalorder %s79, 3
      %p850 = por %p848, %p849
      %p851 = scmp.ne.s32.totalorder %s840, %s841
      %p852 = scmp.eq.s32.totalorder %s79, 0
      %p853 = por %p851, %p852
      %p854 = scmp.ne.s32.totalorder %s840, %s841
      %p855 = scmp.eq.s32.totalorder %s80, 3
      %p856 = por %p854, %p855
      %p858 = scmp.ne.s32.totalorder %s841, %s857
      %p859 = scmp.eq.s32.totalorder %s80, 0
      %p860 = por %p858, %p859
      %p861 = scmp.le.s32.totalorder 1, %s74
      %p862 = scmp.lt.s32.totalorder %s74, 5
      %p863 = pnand %p861, %p862
      %p864 = pneg %p863
      // Predicated region
      $region9: #{tf_model_forward.1} parent=5 // pred_check
        _
      $region10: #{tf_model_forward.1} parent=5 // pred_check_branch
        %866 = sbr.rel (%p863) target = $region12
      $region11: #{tf_model_forward.1} parent=5 // pred_region
        %s867 = ssub.s32 %s74, 1
        // Predicated region
        $region13: #{tf_model_forward.1} parent=11 // pred_check
          %p868 = pneg %p107
        $region14: #{tf_model_forward.1} parent=11 // pred_check_branch
          %870 = sbr.rel (%p868) target = $region16
        $region15: #{tf_model_forward.1} parent=11 // pred_region
          _
        $region16: #{tf_model_forward.1} parent=11 // pred_fallthru
          _
        // Predicated region
        $region17: #{tf_model_forward.1} parent=11 // pred_check
          %p871 = pneg %p180
        $region18: #{tf_model_forward.1} parent=11 // pred_check_branch
          %873 = sbr.rel (%p871) target = $region20
        $region19: #{tf_model_forward.1} parent=11 // pred_region
          _
        $region20: #{tf_model_forward.1} parent=11 // pred_fallthru
          _
        // Predicated region
        $region21: #{tf_model_forward.1} parent=11 // pred_check
          %p874 = pneg %p201
        $region22: #{tf_model_forward.1} parent=11 // pred_check_branch
          %876 = sbr.rel (%p874) target = $region24
        $region23: #{tf_model_forward.1} parent=11 // pred_region
          _
        $region24: #{tf_model_forward.1} parent=11 // pred_fallthru
          _
        // Predicated region
        $region25: #{tf_model_forward.1} parent=11 // pred_check
          %p877 = pneg %p222
        $region26: #{tf_model_forward.1} parent=11 // pred_check_branch
          %879 = sbr.rel (%p877) target = $region28
        $region27: #{tf_model_forward.1} parent=11 // pred_region
          _
        $region28: #{tf_model_forward.1} parent=11 // pred_fallthru
          _
        // Predicated region
        $region29: #{tf_model_forward.1} parent=11 // pred_check
          %p880 = pneg %p243
        $region30: #{tf_model_forward.1} parent=11 // pred_check_branch
          %882 = sbr.rel (%p880) target = $region32
        $region31: #{tf_model_forward.1} parent=11 // pred_region
          _
        $region32: #{tf_model_forward.1} parent=11 // pred_fallthru
          _
        // Predicated region
        $region33: #{tf_model_forward.1} parent=11 // pred_check
          %p883 = pneg %p680
        $region34: #{tf_model_forward.1} parent=11 // pred_check_branch
          %885 = sbr.rel (%p883) target = $region36
        $region35: #{tf_model_forward.1} parent=11 // pred_region
          _
        $region36: #{tf_model_forward.1} parent=11 // pred_fallthru
          _
        // Predicated region
        $region37: #{tf_model_forward.1} parent=11 // pred_check
          %p886 = pneg %p701
        $region38: #{tf_model_forward.1} parent=11 // pred_check_branch
          %888 = sbr.rel (%p886) target = $region40
        $region39: #{tf_model_forward.1} parent=11 // pred_region
          _
        $region40: #{tf_model_forward.1} parent=11 // pred_fallthru
          _
        // Predicated region
        $region41: #{tf_model_forward.1} parent=11 // pred_check
          %p889 = pneg %p722
        $region42: #{tf_model_forward.1} parent=11 // pred_check_branch
          %891 = sbr.rel (%p889) target = $region44
        $region43: #{tf_model_forward.1} parent=11 // pred_region
          _
        $region44: #{tf_model_forward.1} parent=11 // pred_fallthru
          _
        // Predicated region
        $region45: #{tf_model_forward.1} parent=11 // pred_check
          %p892 = pneg %p743
        $region46: #{tf_model_forward.1} parent=11 // pred_check_branch
          %894 = sbr.rel (%p892) target = $region48
        $region47: #{tf_model_forward.1} parent=11 // pred_region
          _
        $region48: #{tf_model_forward.1} parent=11 // pred_fallthru
          _
        // Predicated region
        $region49: #{tf_model_forward.1} parent=11 // pred_check
          %p895 = pneg %p764
        $region50: #{tf_model_forward.1} parent=11 // pred_check_branch
          %897 = sbr.rel (%p895) target = $region52
        $region51: #{tf_model_forward.1} parent=11 // pred_region
          _
        $region52: #{tf_model_forward.1} parent=11 // pred_fallthru
          _
        // Predicated region
        $region53: #{tf_model_forward.1} parent=11 // pred_check
          %p898 = pneg %p785
        $region54: #{tf_model_forward.1} parent=11 // pred_check_branch
          %900 = sbr.rel (%p898) target = $region56
        $region55: #{tf_model_forward.1} parent=11 // pred_region
          _
        $region56: #{tf_model_forward.1} parent=11 // pred_fallthru
          _
        // Predicated region
        $region57: #{tf_model_forward.1} parent=11 // pred_check
          %p901 = pneg %p806
        $region58: #{tf_model_forward.1} parent=11 // pred_check_branch
          %903 = sbr.rel (%p901) target = $region60
        $region59: #{tf_model_forward.1} parent=11 // pred_region
          _
        $region60: #{tf_model_forward.1} parent=11 // pred_fallthru
          _
        // Predicated region
        $region61: #{tf_model_forward.1} parent=11 // pred_check
          %p904 = pneg %p827
        $region62: #{tf_model_forward.1} parent=11 // pred_check_branch
          %906 = sbr.rel (%p904) target = $region64
        $region63: #{tf_model_forward.1} parent=11 // pred_region
          _
        $region64: #{tf_model_forward.1} parent=11 // pred_fallthru
          _
      $region12: #{tf_model_forward.1} parent=5 // pred_fallthru
        _
      %p907 = scmp.lt.s32.totalorder %s74, 4
      // Predicated region
      $region65: #{tf_model_forward.1} parent=5 // pred_check
        %p908 = pneg %p907
      $region66: #{tf_model_forward.1} parent=5 // pred_check_branch
        %910 = sbr.rel (%p908) target = $region68
      $region67: #{tf_model_forward.1} parent=5 // pred_region
        // Predicated region
        $region69: #{tf_model_forward.1} parent=67 // pred_check
          %p911 = pneg %p127
        $region70: #{tf_model_forward.1} parent=67 // pred_check_branch
          %913 = sbr.rel (%p911) target = $region72
        $region71: #{tf_model_forward.1} parent=67 // pred_region
          %p914 = scmp.lt.s32.totalorder %s81, 1
          %s915 = scalar_select %p914, %s81, 1
          %s916 = smul.addr %s915, 2
          %s917 = smul.addr %s916, 8
          %s918 = scalar_lea.vmem %s3, %s917
        $region72: #{tf_model_forward.1} parent=67 // pred_fallthru
          _
        // Predicated region
        $region73: #{tf_model_forward.1} parent=67 // pred_check
          %p919 = pneg %p153
        $region74: #{tf_model_forward.1} parent=67 // pred_check_branch
          %921 = sbr.rel (%p919) target = $region76
        $region75: #{tf_model_forward.1} parent=67 // pred_region
          %p922 = scmp.lt.s32.totalorder %s81, 1
          %s923 = scalar_select %p922, %s81, 1
          %s924 = scalar_lea.vmem %s5, %s923
        $region76: #{tf_model_forward.1} parent=67 // pred_fallthru
          _
        // Predicated region
        $region77: #{tf_model_forward.1} parent=67 // pred_check
          %p925 = pneg %p263
        $region78: #{tf_model_forward.1} parent=67 // pred_check_branch
          %927 = sbr.rel (%p925) target = $region80
        $region79: #{tf_model_forward.1} parent=67 // pred_region
          %p928 = scmp.lt.s32.totalorder %s82, 1
          %s929 = scalar_select %p928, %s82, 1
          %s930 = smul.addr %s929, 4
          %s931 = smul.addr %s930, 4
          %s932 = scalar_lea.vmem %s15, %s931
        $region80: #{tf_model_forward.1} parent=67 // pred_fallthru
          _
        // Predicated region
        $region81: #{tf_model_forward.1} parent=67 // pred_check
          %p933 = pneg %p289
        $region82: #{tf_model_forward.1} parent=67 // pred_check_branch
          %935 = sbr.rel (%p933) target = $region84
        $region83: #{tf_model_forward.1} parent=67 // pred_region
          %p936 = scmp.lt.s32.totalorder %s82, 1
          %s937 = scalar_select %p936, %s82, 1
          %s938 = smul.addr %s937, 4
          %s939 = smul.addr %s938, 4
          %s940 = scalar_lea.vmem %s17, %s939
        $region84: #{tf_model_forward.1} parent=67 // pred_fallthru
          _
        // Predicated region
        $region85: #{tf_model_forward.1} parent=67 // pred_check
          %p941 = pneg %p315
        $region86: #{tf_model_forward.1} parent=67 // pred_check_branch
          %943 = sbr.rel (%p941) target = $region88
        $region87: #{tf_model_forward.1} parent=67 // pred_region
          %p944 = scmp.lt.s32.totalorder %s82, 1
          %s945 = scalar_select %p944, %s82, 1
          %s946 = smul.addr %s945, 4
          %s947 = smul.addr %s946, 4
          %s948 = scalar_lea.vmem %s19, %s947
        $region88: #{tf_model_forward.1} parent=67 // pred_fallthru
          _
        // Predicated region
        $region89: #{tf_model_forward.1} parent=67 // pred_check
          %p949 = pneg %p341
        $region90: #{tf_model_forward.1} parent=67 // pred_check_branch
          %951 = sbr.rel (%p949) target = $region92
        $region91: #{tf_model_forward.1} parent=67 // pred_region
          %p952 = scmp.lt.s32.totalorder %s82, 1
          %s953 = scalar_select %p952, %s82, 1
          %s954 = scalar_lea.vmem %s21, %s953
        $region92: #{tf_model_forward.1} parent=67 // pred_fallthru
          _
        // Predicated region
        $region93: #{tf_model_forward.1} parent=67 // pred_check
          %p955 = pneg %p367
        $region94: #{tf_model_forward.1} parent=67 // pred_check_branch
          %957 = sbr.rel (%p955) target = $region96
        $region95: #{tf_model_forward.1} parent=67 // pred_region
          %p958 = scmp.lt.s32.totalorder %s82, 1
          %s959 = scalar_select %p958, %s82, 1
          %s960 = scalar_lea.vmem %s23, %s959
        $region96: #{tf_model_forward.1} parent=67 // pred_fallthru
          _
        // Predicated region
        $region97: #{tf_model_forward.1} parent=67 // pred_check
          %p961 = pneg %p393
        $region98: #{tf_model_forward.1} parent=67 // pred_check_branch
          %963 = sbr.rel (%p961) target = $region100
        $region99: #{tf_model_forward.1} parent=67 // pred_region
          %p964 = scmp.lt.s32.totalorder %s82, 1
          %s965 = scalar_select %p964, %s82, 1
          %s966 = scalar_lea.vmem %s25, %s965
        $region100: #{tf_model_forward.1} parent=67 // pred_fallthru
          _
        // Predicated region
        $region101: #{tf_model_forward.1} parent=67 // pred_check
          %p967 = pneg %p419
        $region102: #{tf_model_forward.1} parent=67 // pred_check_branch
          %969 = sbr.rel (%p967) target = $region104
        $region103: #{tf_model_forward.1} parent=67 // pred_region
          %p970 = scmp.lt.s32.totalorder %s82, 1
          %s971 = scalar_select %p970, %s82, 1
          %s972 = smul.addr %s971, 4
          %s973 = smul.addr %s972, 4
          %s974 = scalar_lea.vmem %s27, %s973
        $region104: #{tf_model_forward.1} parent=67 // pred_fallthru
          _
        // Predicated region
        $region105: #{tf_model_forward.1} parent=67 // pred_check
          %p975 = pneg %p445
        $region106: #{tf_model_forward.1} parent=67 // pred_check_branch
          %977 = sbr.rel (%p975) target = $region108
        $region107: #{tf_model_forward.1} parent=67 // pred_region
          %p978 = scmp.lt.s32.totalorder %s82, 1
          %s979 = scalar_select %p978, %s82, 1
          %s980 = scalar_lea.vmem %s29, %s979
        $region108: #{tf_model_forward.1} parent=67 // pred_fallthru
          _
        // Predicated region
        $region109: #{tf_model_forward.1} parent=67 // pred_check
          %p981 = pneg %p471
        $region110: #{tf_model_forward.1} parent=67 // pred_check_branch
          %983 = sbr.rel (%p981) target = $region112
        $region111: #{tf_model_forward.1} parent=67 // pred_region
          %p984 = scmp.lt.s32.totalorder %s82, 1
          %s985 = scalar_select %p984, %s82, 1
          %s986 = smul.addr %s985, 64
          %s987 = smul.addr %s986, 4
          %s988 = scalar_lea.vmem %s31, %s987
        $region112: #{tf_model_forward.1} parent=67 // pred_fallthru
          _
        // Predicated region
        $region113: #{tf_model_forward.1} parent=67 // pred_check
          %p989 = pneg %p497
        $region114: #{tf_model_forward.1} parent=67 // pred_check_branch
          %991 = sbr.rel (%p989) target = $region116
        $region115: #{tf_model_forward.1} parent=67 // pred_region
          %p992 = scmp.lt.s32.totalorder %s82, 1
          %s993 = scalar_select %p992, %s82, 1
          %s994 = smul.addr %s993, 16
          %s995 = scalar_lea.vmem %s33, %s994
        $region116: #{tf_model_forward.1} parent=67 // pred_fallthru
          _
        // Predicated region
        $region117: #{tf_model_forward.1} parent=67 // pred_check
          %p996 = pneg %p523
        $region118: #{tf_model_forward.1} parent=67 // pred_check_branch
          %998 = sbr.rel (%p996) target = $region120
        $region119: #{tf_model_forward.1} parent=67 // pred_region
          %p999 = scmp.lt.s32.totalorder %s82, 1
          %s1000 = scalar_select %p999, %s82, 1
          %s1001 = smul.addr %s1000, 256
          %s1002 = smul.addr %s1001, 4
          %s1003 = scalar_lea.vmem %s35, %s1002
        $region120: #{tf_model_forward.1} parent=67 // pred_fallthru
          _
        // Predicated region
        $region121: #{tf_model_forward.1} parent=67 // pred_check
          %p1004 = pneg %p549
        $region122: #{tf_model_forward.1} parent=67 // pred_check_branch
          %1006 = sbr.rel (%p1004) target = $region124
        $region123: #{tf_model_forward.1} parent=67 // pred_region
          %p1007 = scmp.lt.s32.totalorder %s82, 1
          %s1008 = scalar_select %p1007, %s82, 1
          %s1009 = scalar_lea.vmem %s37, %s1008
        $region124: #{tf_model_forward.1} parent=67 // pred_fallthru
          _
        // Predicated region
        $region125: #{tf_model_forward.1} parent=67 // pred_check
          %p1010 = pneg %p575
        $region126: #{tf_model_forward.1} parent=67 // pred_check_branch
          %1012 = sbr.rel (%p1010) target = $region128
        $region127: #{tf_model_forward.1} parent=67 // pred_region
          %p1013 = scmp.lt.s32.totalorder %s82, 1
          %s1014 = scalar_select %p1013, %s82, 1
          %s1015 = scalar_lea.vmem %s39, %s1014
        $region128: #{tf_model_forward.1} parent=67 // pred_fallthru
          _
        // Predicated region
        $region129: #{tf_model_forward.1} parent=67 // pred_check
          %p1016 = pneg %p601
        $region130: #{tf_model_forward.1} parent=67 // pred_check_branch
          %1018 = sbr.rel (%p1016) target = $region132
        $region131: #{tf_model_forward.1} parent=67 // pred_region
          %p1019 = scmp.lt.s32.totalorder %s82, 1
          %s1020 = scalar_select %p1019, %s82, 1
          %s1021 = scalar_lea.vmem %s41, %s1020
        $region132: #{tf_model_forward.1} parent=67 // pred_fallthru
          _
        // Predicated region
        $region133: #{tf_model_forward.1} parent=67 // pred_check
          %p1022 = pneg %p627
        $region134: #{tf_model_forward.1} parent=67 // pred_check_branch
          %1024 = sbr.rel (%p1022) target = $region136
        $region135: #{tf_model_forward.1} parent=67 // pred_region
          %p1025 = scmp.lt.s32.totalorder %s82, 1
          %s1026 = scalar_select %p1025, %s82, 1
          %s1027 = scalar_lea.vmem %s43, %s1026
        $region136: #{tf_model_forward.1} parent=67 // pred_fallthru
          _
        // Predicated region
        $region137: #{tf_model_forward.1} parent=67 // pred_check
          %p1028 = pneg %p653
        $region138: #{tf_model_forward.1} parent=67 // pred_check_branch
          %1030 = sbr.rel (%p1028) target = $region140
        $region139: #{tf_model_forward.1} parent=67 // pred_region
          %p1031 = scmp.lt.s32.totalorder %s82, 1
          %s1032 = scalar_select %p1031, %s82, 1
          %s1033 = scalar_lea.vmem %s45, %s1032
        $region140: #{tf_model_forward.1} parent=67 // pred_fallthru
          _
      $region68: #{tf_model_forward.1} parent=5 // pred_fallthru
        _
      %p1034 = scmp.le.s32.totalorder 1, %s74
      %p1035 = scmp.lt.s32.totalorder %s74, 5
      %p1036 = pnand %p1034, %p1035
      %p1037 = pneg %p1036
      // Predicated region
      $region141: #{tf_model_forward.1} parent=5 // pred_check
        _
      $region142: #{tf_model_forward.1} parent=5 // pred_check_branch
        %1039 = sbr.rel (%p1036) target = $region144
      $region143: #{tf_model_forward.1} parent=5 // pred_region
        %s1040 = ssub.s32 %s74, 1
        %p1041 = pneg %p107
        %p1042 = pneg %p104
        %p1043 = scmp.lt.s32.totalorder %s83, 1
        %s1044 = scalar_select %p1043, %s83, 1
        %s1045 = smul.addr %s1044, 2
        %s1046 = smul.addr %s1045, 8
        %s1047 = scalar_lea.vmem %s3, %s1046
        %p1048 = pneg %p133
        %p1049 = pneg %p130
        %p1050 = scmp.lt.s32.totalorder %s83, 1
        %s1051 = scalar_select %p1050, %s83, 1
        %s1052 = scalar_lea.vmem %s5, %s1051
        %p1053 = pneg %p159
        %p1054 = pneg %p156
        %p1055 = pneg %p180
        %p1056 = pneg %p177
        %p1057 = pneg %p201
        %p1058 = pneg %p198
        %p1059 = pneg %p222
        %p1060 = pneg %p219
        %p1061 = pneg %p243
        %p1062 = pneg %p240
        %p1063 = scmp.lt.s32.totalorder %s84, 1
        %s1064 = scalar_select %p1063, %s84, 1
        %s1065 = smul.addr %s1064, 4
        %s1066 = smul.addr %s1065, 4
        %s1067 = scalar_lea.vmem %s15, %s1066
        %p1068 = pneg %p269
        %p1069 = pneg %p266
        %p1070 = scmp.lt.s32.totalorder %s84, 1
        %s1071 = scalar_select %p1070, %s84, 1
        %s1072 = smul.addr %s1071, 4
        %s1073 = smul.addr %s1072, 4
        %s1074 = scalar_lea.vmem %s17, %s1073
        %p1075 = pneg %p295
        %p1076 = pneg %p292
        %p1077 = scmp.lt.s32.totalorder %s84, 1
        %s1078 = scalar_select %p1077, %s84, 1
        %s1079 = smul.addr %s1078, 4
        %s1080 = smul.addr %s1079, 4
        %s1081 = scalar_lea.vmem %s19, %s1080
        %p1082 = pneg %p321
        %p1083 = pneg %p318
        %p1084 = scmp.lt.s32.totalorder %s84, 1
        %s1085 = scalar_select %p1084, %s84, 1
        %s1086 = scalar_lea.vmem %s21, %s1085
        %p1087 = pneg %p347
        %p1088 = pneg %p344
        %p1089 = scmp.lt.s32.totalorder %s84, 1
        %s1090 = scalar_select %p1089, %s84, 1
        %s1091 = scalar_lea.vmem %s23, %s1090
        %p1092 = pneg %p373
        %p1093 = pneg %p370
        %p1094 = scmp.lt.s32.totalorder %s84, 1
        %s1095 = scalar_select %p1094, %s84, 1
        %s1096 = scalar_lea.vmem %s25, %s1095
        %p1097 = pneg %p399
        %p1098 = pneg %p396
        %p1099 = scmp.lt.s32.totalorder %s84, 1
        %s1100 = scalar_select %p1099, %s84, 1
        %s1101 = smul.addr %s1100, 4
        %s1102 = smul.addr %s1101, 4
        %s1103 = scalar_lea.vmem %s27, %s1102
        %p1104 = pneg %p425
        %p1105 = pneg %p422
        %p1106 = scmp.lt.s32.totalorder %s84, 1
        %s1107 = scalar_select %p1106, %s84, 1
        %s1108 = scalar_lea.vmem %s29, %s1107
        %p1109 = pneg %p451
        %p1110 = pneg %p448
        %p1111 = scmp.lt.s32.totalorder %s84, 1
        %s1112 = scalar_select %p1111, %s84, 1
        %s1113 = smul.addr %s1112, 64
        %s1114 = smul.addr %s1113, 4
        %s1115 = scalar_lea.vmem %s31, %s1114
        %p1116 = pneg %p477
        %p1117 = pneg %p474
        %p1118 = scmp.lt.s32.totalorder %s84, 1
        %s1119 = scalar_select %p1118, %s84, 1
        %s1120 = smul.addr %s1119, 16
        %s1121 = scalar_lea.vmem %s33, %s1120
        %p1122 = pneg %p503
        %p1123 = pneg %p500
        %p1124 = scmp.lt.s32.totalorder %s84, 1
        %s1125 = scalar_select %p1124, %s84, 1
        %s1126 = smul.addr %s1125, 256
        %s1127 = smul.addr %s1126, 4
        %s1128 = scalar_lea.vmem %s35, %s1127
        %p1129 = pneg %p529
        %p1130 = pneg %p526
        %p1131 = scmp.lt.s32.totalorder %s84, 1
        %s1132 = scalar_select %p1131, %s84, 1
        %s1133 = scalar_lea.vmem %s37, %s1132
        %p1134 = pneg %p555
        %p1135 = pneg %p552
        %p1136 = scmp.lt.s32.totalorder %s84, 1
        %s1137 = scalar_select %p1136, %s84, 1
        %s1138 = scalar_lea.vmem %s39, %s1137
        %p1139 = pneg %p581
        %p1140 = pneg %p578
        %p1141 = scmp.lt.s32.totalorder %s84, 1
        %s1142 = scalar_select %p1141, %s84, 1
        %s1143 = scalar_lea.vmem %s41, %s1142
        %p1144 = pneg %p607
        %p1145 = pneg %p604
        %p1146 = scmp.lt.s32.totalorder %s84, 1
        %s1147 = scalar_select %p1146, %s84, 1
        %s1148 = scalar_lea.vmem %s43, %s1147
        %p1149 = pneg %p633
        %p1150 = pneg %p630
        %p1151 = scmp.lt.s32.totalorder %s84, 1
        %s1152 = scalar_select %p1151, %s84, 1
        %s1153 = scalar_lea.vmem %s45, %s1152
        %p1154 = pneg %p659
        %p1155 = pneg %p656
        %p1156 = pneg %p680
        %p1157 = pneg %p677
        %p1158 = pneg %p701
        %p1159 = pneg %p698
        %p1160 = pneg %p722
        %p1161 = pneg %p719
        %p1162 = pneg %p743
        %p1163 = pneg %p740
        %p1164 = pneg %p764
        %p1165 = pneg %p761
        %p1166 = pneg %p785
        %p1167 = pneg %p782
        %p1168 = pneg %p806
        %p1169 = pneg %p803
        %p1170 = pneg %p827
        %p1171 = pneg %p824
        %p1172 = pneg %p853
        %p1173 = pneg %p850
        %s1174 = sand.u32 %s840, 1
        %s1175 = scalar_lea.sflag [#allocation5], %s1174
        %s1176 = sand.u32 %s840, 1
        %s1177 = scalar_lea.vmem [#allocation4], %s1176
        %p1178 = scmp.lt.s32.totalorder %s83, 1
        %s1179 = scalar_select %p1178, %s83, 1
        %s1180 = smul.addr %s1179, 2
        %s1181 = smul.addr %s1180, 8
        %s1182 = scalar_lea.vmem %s3, %s1181
        %p1183 = scmp.lt.s32.totalorder %s83, 1
        %s1184 = scalar_select %p1183, %s83, 1
        %s1185 = scalar_lea.vmem %s5, %s1184
        %p1186 = scmp.lt.s32.totalorder %s84, 1
        %s1187 = scalar_select %p1186, %s84, 1
        %s1188 = smul.addr %s1187, 4
        %s1189 = smul.addr %s1188, 4
        %s1190 = scalar_lea.vmem %s15, %s1189
        %p1191 = scmp.lt.s32.totalorder %s84, 1
        %s1192 = scalar_select %p1191, %s84, 1
        %s1193 = smul.addr %s1192, 4
        %s1194 = smul.addr %s1193, 4
        %s1195 = scalar_lea.vmem %s17, %s1194
        %p1196 = scmp.lt.s32.totalorder %s84, 1
        %s1197 = scalar_select %p1196, %s84, 1
        %s1198 = smul.addr %s1197, 4
        %s1199 = smul.addr %s1198, 4
        %s1200 = scalar_lea.vmem %s19, %s1199
        %p1201 = scmp.lt.s32.totalorder %s84, 1
        %s1202 = scalar_select %p1201, %s84, 1
        %s1203 = scalar_lea.vmem %s21, %s1202
        %p1204 = scmp.lt.s32.totalorder %s84, 1
        %s1205 = scalar_select %p1204, %s84, 1
        %s1206 = scalar_lea.vmem %s23, %s1205
        %p1207 = scmp.lt.s32.totalorder %s84, 1
        %s1208 = scalar_select %p1207, %s84, 1
        %s1209 = scalar_lea.vmem %s25, %s1208
        %p1210 = scmp.lt.s32.totalorder %s84, 1
        %s1211 = scalar_select %p1210, %s84, 1
        %s1212 = smul.addr %s1211, 4
        %s1213 = smul.addr %s1212, 4
        %s1214 = scalar_lea.vmem %s27, %s1213
        %p1215 = scmp.lt.s32.totalorder %s84, 1
        %s1216 = scalar_select %p1215, %s84, 1
        %s1217 = scalar_lea.vmem %s29, %s1216
        %p1218 = scmp.lt.s32.totalorder %s84, 1
        %s1219 = scalar_select %p1218, %s84, 1
        %s1220 = smul.addr %s1219, 64
        %s1221 = smul.addr %s1220, 4
        %s1222 = scalar_lea.vmem %s31, %s1221
        %p1223 = scmp.lt.s32.totalorder %s84, 1
        %s1224 = scalar_select %p1223, %s84, 1
        %s1225 = smul.addr %s1224, 16
        %s1226 = scalar_lea.vmem %s33, %s1225
        %p1227 = scmp.lt.s32.totalorder %s84, 1
        %s1228 = scalar_select %p1227, %s84, 1
        %s1229 = smul.addr %s1228, 256
        %s1230 = smul.addr %s1229, 4
        %s1231 = scalar_lea.vmem %s35, %s1230
        %p1232 = scmp.lt.s32.totalorder %s84, 1
        %s1233 = scalar_select %p1232, %s84, 1
        %s1234 = scalar_lea.vmem %s37, %s1233
        %p1235 = scmp.lt.s32.totalorder %s84, 1
        %s1236 = scalar_select %p1235, %s84, 1
        %s1237 = scalar_lea.vmem %s39, %s1236
        %p1238 = scmp.lt.s32.totalorder %s84, 1
        %s1239 = scalar_select %p1238, %s84, 1
        %s1240 = scalar_lea.vmem %s41, %s1239
        %p1241 = scmp.lt.s32.totalorder %s84, 1
        %s1242 = scalar_select %p1241, %s84, 1
        %s1243 = scalar_lea.vmem %s43, %s1242
        %p1244 = scmp.lt.s32.totalorder %s84, 1
        %s1245 = scalar_select %p1244, %s84, 1
        %s1246 = scalar_lea.vmem %s45, %s1245
        %p1248 = scmp.eq.s32.totalorder %s84, 0
        // Predicated region
        $region145: #{tf_model_forward.1} parent=143 // pred_check
          %p1249 = pneg %p1248
        $region146: #{tf_model_forward.1} parent=143 // pred_check_branch
          %1251 = sbr.rel (%p1249) target = $region148
        $region147: #{tf_model_forward.1} parent=143 // pred_region
          %v1252 = vld [vmem:[%s1182] sm:$0xff]
          %v1253 = vld [vmem:[%s1182 + $0x8] sm:$0xff]
          %v1254 = vld [vmem:[%s7] sm:$0x1]
          %1256 = vset.pattern.permute.xlu0 0
          %1257 = vperm.xlu0 %1256, %v1252
          %v1258 = vpop.permute.xlu0 %1257
          %1261 = vset.pattern.permute.xlu0 0
          %1262 = vperm.xlu0 %1261, %v1253
          %v1263 = vpop.permute.xlu0 %1262
          %v1266 = vlaneseq
          %v1267 = vshrl.u32 %v1266, 7
          %v1268 = vsub.s32 0, %v1267
          %v1269 = vrot.slane %v1254, %v1268
          %v1271 = vmul.f32 %v1258, %v1269
          %v1272 = vmul.f32 %v1263, %v1269
          %v1273 = vld [vmem:[%s9] sm:$0x1]
          %v1275 = vlaneseq
          %v1276 = vshrl.u32 %v1275, 7
          %v1277 = vsub.s32 0, %v1276
          %v1278 = vrot.slane %v1273, %v1277
          %v1280 = vadd.f32 %v1271, %v1278
          %v1281 = vadd.f32 %v1272, %v1278
          %v1282 = vmax.f32 %v1280, 0.0
          %v1283 = vmax.f32 %v1281, 0.0
          %v1284 = vld [vmem:[%s11] sm:$0xff]
          %v1285 = vld [vmem:[%s11 + $0x8] sm:$0xff]
          %v1286 = vld [vmem:[%s13] sm:$0x1]
          %v1288 = vlaneseq
          %v1289 = vshrl.u32 %v1288, 7
          %v1290 = vsub.s32 0, %v1289
          %v1291 = vrot.slane %v1286, %v1290
          %vm1293 = vcmask 130048
          %v1295 = vsel %vm1293, %v1282, 0
          %v1298 = vsel %vm1293, %v1283, 0
          %1300 = vmatprep.subr.mxu0 0.0
          %1301 = vmatpush1.msra.mxu0 0.0
          %1302 = vmatprep.subr.mxu0 0.0
          %1303 = vmatpush1.msra.mxu0 0.0
          %1304 = vmatprep.subr.mxu0 0.0
          %1305 = vmatpush1.msra.mxu0 0.0
          %1306 = vmatprep.subr.mxu0 0.0
          %1307 = vmatpush1.msra.mxu0 0.0
          %1308 = vmatprep.subr.mxu0 0.0
          %1309 = vmatpush1.msra.mxu0 0.0
          %1310 = vmatprep.subr.mxu0 0.0
          %1311 = vmatpush1.msra.mxu0 0.0
          %1312 = vmatprep.subr.mxu0 0.0
          %1313 = vmatpush1.msra.mxu0 0.0
          %1314 = vmatprep.subr.mxu0 0.0
          %1315 = vmatpush1.msra.mxu0 0.0
          %1316 = vmatprep.subr.mxu0 0.0
          %1317 = vmatpush1.msra.mxu0 0.0
          %1318 = vmatprep.subr.mxu0 0.0
          %1319 = vmatpush1.msra.mxu0 0.0
          %1320 = vmatprep.subr.mxu0 0.0
          %1321 = vmatpush1.msra.mxu0 0.0
          %1322 = vmatprep.subr.mxu0 0.0
          %1323 = vmatpush1.msra.mxu0 0.0
          %1324 = vmatprep.subr.mxu0 0.0
          %1325 = vmatpush1.msra.mxu0 0.0
          %1326 = vmatprep.subr.mxu0 0.0
          %1327 = vmatpush1.msra.mxu0 0.0
          %1328 = vmatprep.subr.mxu0 0.0
          %1329 = vmatpush1.msra.mxu0 %v1285
          %1330 = vmatprep.subr.mxu0 0.0
          %1331 = vmatpush1.msra.mxu0 %v1284
          %1332 = vmatprep.subr.mxu0 0.0
          %1333 = vmatpush2.msra.mxu0 0.0
          %1334 = vmatprep.subr.mxu0 0.0
          %1335 = vmatpush2.msra.mxu0 0.0
          %1336 = vmatprep.subr.mxu0 0.0
          %1337 = vmatpush2.msra.mxu0 0.0
          %1338 = vmatprep.subr.mxu0 0.0
          %1339 = vmatpush2.msra.mxu0 0.0
          %1340 = vmatprep.subr.mxu0 0.0
          %1341 = vmatpush2.msra.mxu0 0.0
          %1342 = vmatprep.subr.mxu0 0.0
          %1343 = vmatpush2.msra.mxu0 0.0
          %1344 = vmatprep.subr.mxu0 0.0
          %1345 = vmatpush2.msra.mxu0 0.0
          %1346 = vmatprep.subr.mxu0 0.0
          %1347 = vmatpush2.msra.mxu0 0.0
          %1348 = vmatprep.subr.mxu0 0.0
          %1349 = vmatpush2.msra.mxu0 0.0
          %1350 = vmatprep.subr.mxu0 0.0
          %1351 = vmatpush2.msra.mxu0 0.0
          %1352 = vmatprep.subr.mxu0 0.0
          %1353 = vmatpush2.msra.mxu0 0.0
          %1354 = vmatprep.subr.mxu0 0.0
          %1355 = vmatpush2.msra.mxu0 0.0
          %1356 = vmatprep.subr.mxu0 0.0
          %1357 = vmatpush2.msra.mxu0 0.0
          %1358 = vmatprep.subr.mxu0 0.0
          %1359 = vmatpush2.msra.mxu0 0.0
          %1360 = vmatprep.subr.mxu0 0.0
          %1361 = vmatpush2.msra.mxu0 0.0
          %1362 = vmatprep.subr.mxu0 0.0
          %1363 = vmatpush2.msra.mxu0 0.0
          %1364 = vmatprep.mubr.f32.mxu0 0.0
          %1365 = vmatmul.mubr.f32.gmra.mxu0 %v1295
          %v1366 = vpop.f32.mrf.mxu0
          %v1367 = vadd.f32 %v1291, %v1366
          %v1368 = vpop.f32.mrf.mxu0
          %1369 = vmatprep.mubr.f32.mxu0 0.0
          %1370 = vmatmul.mubr.f32.gmra.mxu0 %v1298
          %v1371 = vpop.f32.mrf.mxu0
          %v1372 = vadd.f32 %v1291, %v1371
          %v1373 = vpop.f32.mrf.mxu0
          %1374 = vdwg.mxu0
          %v1375 = vld [vmem:[%s1185] sm:$0x1]
          %v1377 = vlaneseq
          %v1378 = vshrl.u32 %v1377, 7
          %v1379 = vsub.s32 0, %v1378
          %v1380 = vrot.slane %v1375, %v1379
          %v1382 = vadd.f32 %v1367, %v1380
          %v1383 = vadd.f32 %v1372, %v1380
          %vm1384 = vcmask 261120
          %1385 = vst.msk [vmem:[#allocation2] sm:$0xff] %vm1384, %v1382
          %1386 = vst.msk [vmem:[#allocation2 + $0x8] sm:$0xff] %vm1384, %v1383
        $region148: #{tf_model_forward.1} parent=143 // pred_fallthru
          _
        %v1387 = vld [vmem:[#allocation2] sm:$0xff]
        %v1388 = vld [vmem:[#allocation2 + $0x8] sm:$0xff]
        %v1389 = vpack.c.bf16 %v1388, %v1387
        %v1390 = vld [vmem:[%s1] sm:$0xff]
        %v1391 = vld [vmem:[%s1 + $0x8] sm:$0xff]
        %v1392 = vld [vmem:[%s1190] sm:$0xf]
        %v1393 = vld [vmem:[%s1190 + $0x4] sm:$0xf]
        %v1394 = vld [vmem:[%s1190 + $0x8] sm:$0xf]
        %v1395 = vld [vmem:[%s1190 + $0xc] sm:$0xf]
        %v1396 = vld [vmem:[%s1203] sm:$0x1]
        %v1398 = vlaneseq
        %v1399 = vshrl.u32 %v1398, 7
        %v1400 = vsub.s32 0, %v1399
        %v1401 = vrot.slane %v1396, %v1400
        %v1407 = vunpack.c.l.b16 %v1392
        %v1408 = vunpack.c.l.b16 %v1393
        %v1409 = vunpack.c.l.b16 %v1394
        %v1410 = vunpack.c.l.b16 %v1395
        %v1411 = vpack.c.b16 %v1408, %v1407
        %v1412 = vpack.c.b16 %v1410, %v1409
        %vm1415 = vcmask 261120
        %v1417 = vsel %vm1415, %v1389, 0
        %1419 = vmatprep.subr.bf16.mxu0 0
        %1420 = vmatpush1.bf16.msra.mxu0 0
        %1421 = vmatprep.subr.bf16.mxu0 0
        %1422 = vmatpush1.bf16.msra.mxu0 0
        %1423 = vmatprep.subr.bf16.mxu0 0
        %1424 = vmatpush1.bf16.msra.mxu0 0
        %1425 = vmatprep.subr.bf16.mxu0 0
        %1426 = vmatpush1.bf16.msra.mxu0 0
        %1427 = vmatprep.subr.bf16.mxu0 0
        %1428 = vmatpush1.bf16.msra.mxu0 0
        %1429 = vmatprep.subr.bf16.mxu0 0
        %1430 = vmatpush1.bf16.msra.mxu0 0
        %1431 = vmatprep.subr.bf16.mxu0 0
        %1432 = vmatpush1.bf16.msra.mxu0 %v1412
        %1433 = vmatprep.subr.bf16.mxu0 0
        %1434 = vmatpush1.bf16.msra.mxu0 %v1411
        %1435 = vmatprep.subr.bf16.mxu0 0
        %1436 = vmatpush2.bf16.msra.mxu0 0
        %1437 = vmatprep.subr.bf16.mxu0 0
        %1438 = vmatpush2.bf16.msra.mxu0 0
        %1439 = vmatprep.subr.bf16.mxu0 0
        %1440 = vmatpush2.bf16.msra.mxu0 0
        %1441 = vmatprep.subr.bf16.mxu0 0
        %1442 = vmatpush2.bf16.msra.mxu0 0
        %1443 = vmatprep.subr.bf16.mxu0 0
        %1444 = vmatpush2.bf16.msra.mxu0 0
        %1445 = vmatprep.subr.bf16.mxu0 0
        %1446 = vmatpush2.bf16.msra.mxu0 0
        %1447 = vmatprep.subr.bf16.mxu0 0
        %1448 = vmatpush2.bf16.msra.mxu0 0
        %1449 = vmatprep.subr.bf16.mxu0 0
        %1450 = vmatpush2.bf16.msra.mxu0 0
        %1451 = vmatprep.mubr.bf16.mxu0 0
        %1452 = vmatmul.mubr.bf16.gmra.mxu0 %v1417
        %v1453 = vpop.f32.mrf.mxu0
        %v1454 = vadd.f32 %v1401, %v1453
        %v1455 = vpop.f32.mrf.mxu0
        %v1456 = vpop.f32.mrf.mxu0
        %v1457 = vadd.f32 %v1401, %v1456
        %v1458 = vpop.f32.mrf.mxu0
        %1459 = vdwg.mxu0
        %v1460 = vld [vmem:[%s1195] sm:$0xf]
        %v1461 = vld [vmem:[%s1195 + $0x4] sm:$0xf]
        %v1462 = vld [vmem:[%s1195 + $0x8] sm:$0xf]
        %v1463 = vld [vmem:[%s1195 + $0xc] sm:$0xf]
        %v1464 = vld [vmem:[%s1206] sm:$0x1]
        %v1466 = vlaneseq
        %v1467 = vshrl.u32 %v1466, 7
        %v1468 = vsub.s32 0, %v1467
        %v1469 = vrot.slane %v1464, %v1468
        %v1475 = vunpack.c.l.b16 %v1460
        %v1476 = vunpack.c.l.b16 %v1461
        %v1477 = vunpack.c.l.b16 %v1462
        %v1478 = vunpack.c.l.b16 %v1463
        %v1479 = vpack.c.b16 %v1476, %v1475
        %v1480 = vpack.c.b16 %v1478, %v1477
        %1483 = vmatprep.subr.bf16.mxu0 0
        %1484 = vmatpush1.bf16.msra.mxu0 0
        %1485 = vmatprep.subr.bf16.mxu0 0
        %1486 = vmatpush1.bf16.msra.mxu0 0
        %1487 = vmatprep.subr.bf16.mxu0 0
        %1488 = vmatpush1.bf16.msra.mxu0 0
        %1489 = vmatprep.subr.bf16.mxu0 0
        %1490 = vmatpush1.bf16.msra.mxu0 0
        %1491 = vmatprep.subr.bf16.mxu0 0
        %1492 = vmatpush1.bf16.msra.mxu0 0
        %1493 = vmatprep.subr.bf16.mxu0 0
        %1494 = vmatpush1.bf16.msra.mxu0 0
        %1495 = vmatprep.subr.bf16.mxu0 0
        %1496 = vmatpush1.bf16.msra.mxu0 %v1480
        %1497 = vmatprep.subr.bf16.mxu0 0
        %1498 = vmatpush1.bf16.msra.mxu0 %v1479
        %1499 = vmatprep.subr.bf16.mxu0 0
        %1500 = vmatpush2.bf16.msra.mxu0 0
        %1501 = vmatprep.subr.bf16.mxu0 0
        %1502 = vmatpush2.bf16.msra.mxu0 0
        %1503 = vmatprep.subr.bf16.mxu0 0
        %1504 = vmatpush2.bf16.msra.mxu0 0
        %1505 = vmatprep.subr.bf16.mxu0 0
        %1506 = vmatpush2.bf16.msra.mxu0 0
        %1507 = vmatprep.subr.bf16.mxu0 0
        %1508 = vmatpush2.bf16.msra.mxu0 0
        %1509 = vmatprep.subr.bf16.mxu0 0
        %1510 = vmatpush2.bf16.msra.mxu0 0
        %1511 = vmatprep.subr.bf16.mxu0 0
        %1512 = vmatpush2.bf16.msra.mxu0 0
        %1513 = vmatprep.subr.bf16.mxu0 0
        %1514 = vmatpush2.bf16.msra.mxu0 0
        %1515 = vmatprep.mubr.bf16.mxu0 0
        %1516 = vmatmul.mubr.bf16.gmra.mxu0 %v1417
        %v1517 = vpop.f32.mrf.mxu0
        %v1518 = vadd.f32 %v1469, %v1517
        %v1519 = vpop.f32.mrf.mxu0
        %v1520 = vpop.f32.mrf.mxu0
        %v1521 = vadd.f32 %v1469, %v1520
        %v1522 = vpop.f32.mrf.mxu0
        %1523 = vdwg.mxu0
        %v1524 = vld [vmem:[%s1200] sm:$0xf]
        %v1525 = vld [vmem:[%s1200 + $0x4] sm:$0xf]
        %v1526 = vld [vmem:[%s1200 + $0x8] sm:$0xf]
        %v1527 = vld [vmem:[%s1200 + $0xc] sm:$0xf]
        %v1528 = vld [vmem:[%s1209] sm:$0x1]
        %v1530 = vlaneseq
        %v1531 = vshrl.u32 %v1530, 7
        %v1532 = vsub.s32 0, %v1531
        %v1533 = vrot.slane %v1528, %v1532
        %v1539 = vunpack.c.l.b16 %v1524
        %v1540 = vunpack.c.l.b16 %v1525
        %v1541 = vunpack.c.l.b16 %v1526
        %v1542 = vunpack.c.l.b16 %v1527
        %v1543 = vpack.c.b16 %v1540, %v1539
        %v1544 = vpack.c.b16 %v1542, %v1541
        %1547 = vmatprep.subr.bf16.mxu0 0
        %1548 = vmatpush1.bf16.msra.mxu0 0
        %1549 = vmatprep.subr.bf16.mxu0 0
        %1550 = vmatpush1.bf16.msra.mxu0 0
        %1551 = vmatprep.subr.bf16.mxu0 0
        %1552 = vmatpush1.bf16.msra.mxu0 0
        %1553 = vmatprep.subr.bf16.mxu0 0
        %1554 = vmatpush1.bf16.msra.mxu0 0
        %1555 = vmatprep.subr.bf16.mxu0 0
        %1556 = vmatpush1.bf16.msra.mxu0 0
        %1557 = vmatprep.subr.bf16.mxu0 0
        %1558 = vmatpush1.bf16.msra.mxu0 0
        %1559 = vmatprep.subr.bf16.mxu0 0
        %1560 = vmatpush1.bf16.msra.mxu0 %v1544
        %1561 = vmatprep.subr.bf16.mxu0 0
        %1562 = vmatpush1.bf16.msra.mxu0 %v1543
        %1563 = vmatprep.subr.bf16.mxu0 0
        %1564 = vmatpush2.bf16.msra.mxu0 0
        %1565 = vmatprep.subr.bf16.mxu0 0
        %1566 = vmatpush2.bf16.msra.mxu0 0
        %1567 = vmatprep.subr.bf16.mxu0 0
        %1568 = vmatpush2.bf16.msra.mxu0 0
        %1569 = vmatprep.subr.bf16.mxu0 0
        %1570 = vmatpush2.bf16.msra.mxu0 0
        %1571 = vmatprep.subr.bf16.mxu0 0
        %1572 = vmatpush2.bf16.msra.mxu0 0
        %1573 = vmatprep.subr.bf16.mxu0 0
        %1574 = vmatpush2.bf16.msra.mxu0 0
        %1575 = vmatprep.subr.bf16.mxu0 0
        %1576 = vmatpush2.bf16.msra.mxu0 0
        %1577 = vmatprep.subr.bf16.mxu0 0
        %1578 = vmatpush2.bf16.msra.mxu0 0
        %1579 = vmatprep.mubr.bf16.mxu0 0
        %1580 = vmatmul.mubr.bf16.gmra.mxu0 %v1417
        %v1581 = vpop.f32.mrf.mxu0
        %v1582 = vadd.f32 %v1533, %v1581
        %v1583 = vpop.f32.mrf.mxu0
        %v1584 = vpop.f32.mrf.mxu0
        %v1585 = vadd.f32 %v1533, %v1584
        %v1586 = vpop.f32.mrf.mxu0
        %1587 = vdwg.mxu0
        %v1588 = vld [vmem:[%s1214] sm:$0xf]
        %v1589 = vld [vmem:[%s1214 + $0x4] sm:$0xf]
        %v1590 = vld [vmem:[%s1214 + $0x8] sm:$0xf]
        %v1591 = vld [vmem:[%s1214 + $0xc] sm:$0xf]
        %vm1592 = vcmask 64512
        %v1594 = vsel %vm1592, %v1454, 0
        %v1597 = vsel %vm1592, %v1457, 0
        %v1600 = vsel %vm1592, %v1518, 0
        %v1603 = vsel %vm1592, %v1521, 0
        %1605 = vmatprep.subr.mxu0 0.0
        %1606 = vmatpush1.xpose.msra.mxu0 0.0
        %1607 = vmatprep.subr.mxu0 0.0
        %1608 = vmatpush1.xpose.msra.mxu0 0.0
        %1609 = vmatprep.subr.mxu0 0.0
        %1610 = vmatpush1.xpose.msra.mxu0 0.0
        %1611 = vmatprep.subr.mxu0 0.0
        %1612 = vmatpush1.xpose.msra.mxu0 0.0
        %1613 = vmatprep.subr.mxu0 0.0
        %1614 = vmatpush1.xpose.msra.mxu0 0.0
        %1615 = vmatprep.subr.mxu0 0.0
        %1616 = vmatpush1.xpose.msra.mxu0 0.0
        %1617 = vmatprep.subr.mxu0 0.0
        %1618 = vmatpush1.xpose.msra.mxu0 0.0
        %1619 = vmatprep.subr.mxu0 0.0
        %1620 = vmatpush1.xpose.msra.mxu0 0.0
        %1621 = vmatprep.subr.mxu0 0.0
        %1622 = vmatpush1.xpose.msra.mxu0 0.0
        %1623 = vmatprep.subr.mxu0 0.0
        %1624 = vmatpush1.xpose.msra.mxu0 0.0
        %1625 = vmatprep.subr.mxu0 0.0
        %1626 = vmatpush1.xpose.msra.mxu0 0.0
        %1627 = vmatprep.subr.mxu0 0.0
        %1628 = vmatpush1.xpose.msra.mxu0 0.0
        %1629 = vmatprep.subr.mxu0 0.0
        %1630 = vmatpush1.xpose.msra.mxu0 0.0
        %1631 = vmatprep.subr.mxu0 0.0
        %1632 = vmatpush1.xpose.msra.mxu0 0.0
        %1633 = vmatprep.subr.mxu0 0.0
        %1634 = vmatpush1.xpose.msra.mxu0 %v1603
        %1635 = vmatprep.subr.mxu0 0.0
        %1636 = vmatpush1.xpose.msra.mxu0 %v1600
        %1637 = vmatprep.subr.mxu0 0.0
        %1638 = vmatpush2.xpose.msra.mxu0 0.0
        %1639 = vmatprep.subr.mxu0 0.0
        %1640 = vmatpush2.xpose.msra.mxu0 0.0
        %1641 = vmatprep.subr.mxu0 0.0
        %1642 = vmatpush2.xpose.msra.mxu0 0.0
        %1643 = vmatprep.subr.mxu0 0.0
        %1644 = vmatpush2.xpose.msra.mxu0 0.0
        %1645 = vmatprep.subr.mxu0 0.0
        %1646 = vmatpush2.xpose.msra.mxu0 0.0
        %1647 = vmatprep.subr.mxu0 0.0
        %1648 = vmatpush2.xpose.msra.mxu0 0.0
        %1649 = vmatprep.subr.mxu0 0.0
        %1650 = vmatpush2.xpose.msra.mxu0 0.0
        %1651 = vmatprep.subr.mxu0 0.0
        %1652 = vmatpush2.xpose.msra.mxu0 0.0
        %1653 = vmatprep.subr.mxu0 0.0
        %1654 = vmatpush2.xpose.msra.mxu0 0.0
        %1655 = vmatprep.subr.mxu0 0.0
        %1656 = vmatpush2.xpose.msra.mxu0 0.0
        %1657 = vmatprep.subr.mxu0 0.0
        %1658 = vmatpush2.xpose.msra.mxu0 0.0
        %1659 = vmatprep.subr.mxu0 0.0
        %1660 = vmatpush2.xpose.msra.mxu0 0.0
        %1661 = vmatprep.subr.mxu0 0.0
        %1662 = vmatpush2.xpose.msra.mxu0 0.0
        %1663 = vmatprep.subr.mxu0 0.0
        %1664 = vmatpush2.xpose.msra.mxu0 0.0
        %1665 = vmatprep.subr.mxu0 0.0
        %1666 = vmatpush2.xpose.msra.mxu0 0.0
        %1667 = vmatprep.subr.mxu0 0.0
        %1668 = vmatpush2.xpose.msra.mxu0 0.0
        %1669 = vmatprep.mubr.f32.mxu0 0.0
        %1670 = vmatmul.mubr.f32.gmra.mxu0 %v1594
        %v1671 = vpop.f32.mrf.mxu0
        %v1672 = vadd.f32 %v1390, %v1671
        %v1673 = vpop.f32.mrf.mxu0
        %1674 = vmatprep.mubr.f32.mxu0 0.0
        %1675 = vmatmul.mubr.f32.gmra.mxu0 %v1597
        %v1676 = vpop.f32.mrf.mxu0
        %v1677 = vadd.f32 %v1391, %v1676
        %v1678 = vpop.f32.mrf.mxu0
        %1679 = vdwg.mxu0
        %vm1680 = vcmask 130048
        %v1681 = vsel %vm1680, %v1672, -inf
        %1682 = vmax.xlane.f32.xlu0 %v1681
        %v1683 = vpop.xlane.xlu0 %1682
        %v1684 = vsel %vm1680, %v1677, -inf
        %1685 = vmax.xlane.f32.xlu0 %v1684
        %v1686 = vpop.xlane.xlu0 %1685
        %v1687 = vsub.f32 %v1672, %v1683
        %v1688 = vsub.f32 %v1677, %v1686
        %v1689 = vmul.f32 %v1687, 1.442695
        %v1690 = vpow.pop %v1689
        %v1691 = vmul.f32 %v1688, 1.442695
        %v1692 = vpow.pop %v1691
        %v1693 = vsel %vm1680, %v1690, 0.0
        %1694 = vadd.xlane.f32.xlu0 %v1693
        %v1695 = vpop.xlane.xlu0 %1694
        %v1696 = vsel %vm1680, %v1692, 0.0
        %1697 = vadd.xlane.f32.xlu0 %v1696
        %v1698 = vpop.xlane.xlu0 %1697
        %v1700 = vsel %vm1680, %v1690, 0
        %v1703 = vsel %vm1680, %v1692, 0
        %1705 = vmatprep.subr.mxu0 0.0
        %1706 = vmatpush1.msra.mxu0 0.0
        %1707 = vmatprep.subr.mxu0 0.0
        %1708 = vmatpush1.msra.mxu0 0.0
        %1709 = vmatprep.subr.mxu0 0.0
        %1710 = vmatpush1.msra.mxu0 0.0
        %1711 = vmatprep.subr.mxu0 0.0
        %1712 = vmatpush1.msra.mxu0 0.0
        %1713 = vmatprep.subr.mxu0 0.0
        %1714 = vmatpush1.msra.mxu0 0.0
        %1715 = vmatprep.subr.mxu0 0.0
        %1716 = vmatpush1.msra.mxu0 0.0
        %1717 = vmatprep.subr.mxu0 0.0
        %1718 = vmatpush1.msra.mxu0 0.0
        %1719 = vmatprep.subr.mxu0 0.0
        %1720 = vmatpush1.msra.mxu0 0.0
        %1721 = vmatprep.subr.mxu0 0.0
        %1722 = vmatpush1.msra.mxu0 0.0
        %1723 = vmatprep.subr.mxu0 0.0
        %1724 = vmatpush1.msra.mxu0 0.0
        %1725 = vmatprep.subr.mxu0 0.0
        %1726 = vmatpush1.msra.mxu0 0.0
        %1727 = vmatprep.subr.mxu0 0.0
        %1728 = vmatpush1.msra.mxu0 0.0
        %1729 = vmatprep.subr.mxu0 0.0
        %1730 = vmatpush1.msra.mxu0 0.0
        %1731 = vmatprep.subr.mxu0 0.0
        %1732 = vmatpush1.msra.mxu0 0.0
        %1733 = vmatprep.subr.mxu0 0.0
        %1734 = vmatpush1.msra.mxu0 %v1585
        %1735 = vmatprep.subr.mxu0 0.0
        %1736 = vmatpush1.msra.mxu0 %v1582
        %1737 = vmatprep.subr.mxu0 0.0
        %1738 = vmatpush2.msra.mxu0 0.0
        %1739 = vmatprep.subr.mxu0 0.0
        %1740 = vmatpush2.msra.mxu0 0.0
        %1741 = vmatprep.subr.mxu0 0.0
        %1742 = vmatpush2.msra.mxu0 0.0
        %1743 = vmatprep.subr.mxu0 0.0
        %1744 = vmatpush2.msra.mxu0 0.0
        %1745 = vmatprep.subr.mxu0 0.0
        %1746 = vmatpush2.msra.mxu0 0.0
        %1747 = vmatprep.subr.mxu0 0.0
        %1748 = vmatpush2.msra.mxu0 0.0
        %1749 = vmatprep.subr.mxu0 0.0
        %1750 = vmatpush2.msra.mxu0 0.0
        %1751 = vmatprep.subr.mxu0 0.0
        %1752 = vmatpush2.msra.mxu0 0.0
        %1753 = vmatprep.subr.mxu0 0.0
        %1754 = vmatpush2.msra.mxu0 0.0
        %1755 = vmatprep.subr.mxu0 0.0
        %1756 = vmatpush2.msra.mxu0 0.0
        %1757 = vmatprep.subr.mxu0 0.0
        %1758 = vmatpush2.msra.mxu0 0.0
        %1759 = vmatprep.subr.mxu0 0.0
        %1760 = vmatpush2.msra.mxu0 0.0
        %1761 = vmatprep.subr.mxu0 0.0
        %1762 = vmatpush2.msra.mxu0 0.0
        %1763 = vmatprep.subr.mxu0 0.0
        %1764 = vmatpush2.msra.mxu0 0.0
        %1765 = vmatprep.subr.mxu0 0.0
        %1766 = vmatpush2.msra.mxu0 0.0
        %1767 = vmatprep.subr.mxu0 0.0
        %1768 = vmatpush2.msra.mxu0 0.0
        %1769 = vmatprep.mubr.f32.mxu0 0.0
        %1770 = vmatmul.mubr.f32.gmra.mxu0 %v1700
        %v1771 = vpop.f32.mrf.mxu0
        %v1772 = vadd.f32 0.0, %v1771
        %v1773 = vpop.f32.mrf.mxu0
        %1774 = vmatprep.mubr.f32.mxu0 0.0
        %1775 = vmatmul.mubr.f32.gmra.mxu0 %v1703
        %v1776 = vpop.f32.mrf.mxu0
        %v1777 = vadd.f32 0.0, %v1776
        %v1778 = vpop.f32.mrf.mxu0
        %1779 = vdwg.mxu0
        %v1780 = vrcp.pop %v1695
        %v1781 = vmul.f32 %v1772, %v1780
        %v1782 = vrcp.pop %v1698
        %v1783 = vmul.f32 %v1777, %v1782
        %v1784 = vpack.c.bf16 %v1783, %v1781
        %1785 = vrot.lane.b32.xlu0 %v1454, 120
        %v1786 = vpop.permute.xlu0 %1785
        %1787 = vrot.lane.b32.xlu0 %v1457, 120
        %v1788 = vpop.permute.xlu0 %1787
        %1789 = vrot.lane.b32.xlu0 %v1518, 120
        %v1790 = vpop.permute.xlu0 %1789
        %1791 = vrot.lane.b32.xlu0 %v1521, 120
        %v1792 = vpop.permute.xlu0 %1791
        %v1793 = vsel %vm1592, %v1786, 0
        %v1795 = vsel %vm1592, %v1788, 0
        %v1797 = vsel %vm1592, %v1790, 0
        %v1799 = vsel %vm1592, %v1792, 0
        %1801 = vmatprep.subr.mxu0 0.0
        %1802 = vmatpush1.xpose.msra.mxu0 0.0
        %1803 = vmatprep.subr.mxu0 0.0
        %1804 = vmatpush1.xpose.msra.mxu0 0.0
        %1805 = vmatprep.subr.mxu0 0.0
        %1806 = vmatpush1.xpose.msra.mxu0 0.0
        %1807 = vmatprep.subr.mxu0 0.0
        %1808 = vmatpush1.xpose.msra.mxu0 0.0
        %1809 = vmatprep.subr.mxu0 0.0
        %1810 = vmatpush1.xpose.msra.mxu0 0.0
        %1811 = vmatprep.subr.mxu0 0.0
        %1812 = vmatpush1.xpose.msra.mxu0 0.0
        %1813 = vmatprep.subr.mxu0 0.0
        %1814 = vmatpush1.xpose.msra.mxu0 0.0
        %1815 = vmatprep.subr.mxu0 0.0
        %1816 = vmatpush1.xpose.msra.mxu0 0.0
        %1817 = vmatprep.subr.mxu0 0.0
        %1818 = vmatpush1.xpose.msra.mxu0 0.0
        %1819 = vmatprep.subr.mxu0 0.0
        %1820 = vmatpush1.xpose.msra.mxu0 0.0
        %1821 = vmatprep.subr.mxu0 0.0
        %1822 = vmatpush1.xpose.msra.mxu0 0.0
        %1823 = vmatprep.subr.mxu0 0.0
        %1824 = vmatpush1.xpose.msra.mxu0 0.0
        %1825 = vmatprep.subr.mxu0 0.0
        %1826 = vmatpush1.xpose.msra.mxu0 0.0
        %1827 = vmatprep.subr.mxu0 0.0
        %1828 = vmatpush1.xpose.msra.mxu0 0.0
        %1829 = vmatprep.subr.mxu0 0.0
        %1830 = vmatpush1.xpose.msra.mxu0 %v1799
        %1831 = vmatprep.subr.mxu0 0.0
        %1832 = vmatpush1.xpose.msra.mxu0 %v1797
        %1833 = vmatprep.subr.mxu0 0.0
        %1834 = vmatpush2.xpose.msra.mxu0 0.0
        %1835 = vmatprep.subr.mxu0 0.0
        %1836 = vmatpush2.xpose.msra.mxu0 0.0
        %1837 = vmatprep.subr.mxu0 0.0
        %1838 = vmatpush2.xpose.msra.mxu0 0.0
        %1839 = vmatprep.subr.mxu0 0.0
        %1840 = vmatpush2.xpose.msra.mxu0 0.0
        %1841 = vmatprep.subr.mxu0 0.0
        %1842 = vmatpush2.xpose.msra.mxu0 0.0
        %1843 = vmatprep.subr.mxu0 0.0
        %1844 = vmatpush2.xpose.msra.mxu0 0.0
        %1845 = vmatprep.subr.mxu0 0.0
        %1846 = vmatpush2.xpose.msra.mxu0 0.0
        %1847 = vmatprep.subr.mxu0 0.0
        %1848 = vmatpush2.xpose.msra.mxu0 0.0
        %1849 = vmatprep.subr.mxu0 0.0
        %1850 = vmatpush2.xpose.msra.mxu0 0.0
        %1851 = vmatprep.subr.mxu0 0.0
        %1852 = vmatpush2.xpose.msra.mxu0 0.0
        %1853 = vmatprep.subr.mxu0 0.0
        %1854 = vmatpush2.xpose.msra.mxu0 0.0
        %1855 = vmatprep.subr.mxu0 0.0
        %1856 = vmatpush2.xpose.msra.mxu0 0.0
        %1857 = vmatprep.subr.mxu0 0.0
        %1858 = vmatpush2.xpose.msra.mxu0 0.0
        %1859 = vmatprep.subr.mxu0 0.0
        %1860 = vmatpush2.xpose.msra.mxu0 0.0
        %1861 = vmatprep.subr.mxu0 0.0
        %1862 = vmatpush2.xpose.msra.mxu0 0.0
        %1863 = vmatprep.subr.mxu0 0.0
        %1864 = vmatpush2.xpose.msra.mxu0 0.0
        %1865 = vmatprep.mubr.f32.mxu0 0.0
        %1866 = vmatmul.mubr.f32.gmra.mxu0 %v1793
        %v1867 = vpop.f32.mrf.mxu0
        %v1868 = vadd.f32 %v1390, %v1867
        %v1869 = vpop.f32.mrf.mxu0
        %1870 = vmatprep.mubr.f32.mxu0 0.0
        %1871 = vmatmul.mubr.f32.gmra.mxu0 %v1795
        %v1872 = vpop.f32.mrf.mxu0
        %v1873 = vadd.f32 %v1391, %v1872
        %v1874 = vpop.f32.mrf.mxu0
        %1875 = vdwg.mxu0
        %v1876 = vsel %vm1680, %v1868, -inf
        %1877 = vmax.xlane.f32.xlu0 %v1876
        %v1878 = vpop.xlane.xlu0 %1877
        %v1879 = vsel %vm1680, %v1873, -inf
        %1880 = vmax.xlane.f32.xlu0 %v1879
        %v1881 = vpop.xlane.xlu0 %1880
        %v1882 = vsub.f32 %v1868, %v1878
        %v1883 = vsub.f32 %v1873, %v1881
        %v1884 = vmul.f32 %v1882, 1.442695
        %v1885 = vpow.pop %v1884
        %v1886 = vmul.f32 %v1883, 1.442695
        %v1887 = vpow.pop %v1886
        %v1888 = vsel %vm1680, %v1885, 0.0
        %1889 = vadd.xlane.f32.xlu0 %v1888
        %v1890 = vpop.xlane.xlu0 %1889
        %v1891 = vsel %vm1680, %v1887, 0.0
        %1892 = vadd.xlane.f32.xlu0 %v1891
        %v1893 = vpop.xlane.xlu0 %1892
        %1896 = vrot.lane.b32.xlu0 %v1582, 120
        %v1897 = vpop.permute.xlu0 %1896
        %1898 = vrot.lane.b32.xlu0 %v1585, 120
        %v1899 = vpop.permute.xlu0 %1898
        %v1903 = vsel %vm1680, %v1885, 0
        %v1906 = vsel %vm1680, %v1887, 0
        %1908 = vmatprep.subr.mxu0 0.0
        %1909 = vmatpush1.msra.mxu0 0.0
        %1910 = vmatprep.subr.mxu0 0.0
        %1911 = vmatpush1.msra.mxu0 0.0
        %1912 = vmatprep.subr.mxu0 0.0
        %1913 = vmatpush1.msra.mxu0 0.0
        %1914 = vmatprep.subr.mxu0 0.0
        %1915 = vmatpush1.msra.mxu0 0.0
        %1916 = vmatprep.subr.mxu0 0.0
        %1917 = vmatpush1.msra.mxu0 0.0
        %1918 = vmatprep.subr.mxu0 0.0
        %1919 = vmatpush1.msra.mxu0 0.0
        %1920 = vmatprep.subr.mxu0 0.0
        %1921 = vmatpush1.msra.mxu0 0.0
        %1922 = vmatprep.subr.mxu0 0.0
        %1923 = vmatpush1.msra.mxu0 0.0
        %1924 = vmatprep.subr.mxu0 0.0
        %1925 = vmatpush1.msra.mxu0 0.0
        %1926 = vmatprep.subr.mxu0 0.0
        %1927 = vmatpush1.msra.mxu0 0.0
        %1928 = vmatprep.subr.mxu0 0.0
        %1929 = vmatpush1.msra.mxu0 0.0
        %1930 = vmatprep.subr.mxu0 0.0
        %1931 = vmatpush1.msra.mxu0 0.0
        %1932 = vmatprep.subr.mxu0 0.0
        %1933 = vmatpush1.msra.mxu0 0.0
        %1934 = vmatprep.subr.mxu0 0.0
        %1935 = vmatpush1.msra.mxu0 0.0
        %1936 = vmatprep.subr.mxu0 0.0
        %1937 = vmatpush1.msra.mxu0 %v1899
        %1938 = vmatprep.subr.mxu0 0.0
        %1939 = vmatpush1.msra.mxu0 %v1897
        %1940 = vmatprep.subr.mxu0 0.0
        %1941 = vmatpush2.msra.mxu0 0.0
        %1942 = vmatprep.subr.mxu0 0.0
        %1943 = vmatpush2.msra.mxu0 0.0
        %1944 = vmatprep.subr.mxu0 0.0
        %1945 = vmatpush2.msra.mxu0 0.0
        %1946 = vmatprep.subr.mxu0 0.0
        %1947 = vmatpush2.msra.mxu0 0.0
        %1948 = vmatprep.subr.mxu0 0.0
        %1949 = vmatpush2.msra.mxu0 0.0
        %1950 = vmatprep.subr.mxu0 0.0
        %1951 = vmatpush2.msra.mxu0 0.0
        %1952 = vmatprep.subr.mxu0 0.0
        %1953 = vmatpush2.msra.mxu0 0.0
        %1954 = vmatprep.subr.mxu0 0.0
        %1955 = vmatpush2.msra.mxu0 0.0
        %1956 = vmatprep.subr.mxu0 0.0
        %1957 = vmatpush2.msra.mxu0 0.0
        %1958 = vmatprep.subr.mxu0 0.0
        %1959 = vmatpush2.msra.mxu0 0.0
        %1960 = vmatprep.subr.mxu0 0.0
        %1961 = vmatpush2.msra.mxu0 0.0
        %1962 = vmatprep.subr.mxu0 0.0
        %1963 = vmatpush2.msra.mxu0 0.0
        %1964 = vmatprep.subr.mxu0 0.0
        %1965 = vmatpush2.msra.mxu0 0.0
        %1966 = vmatprep.subr.mxu0 0.0
        %1967 = vmatpush2.msra.mxu0 0.0
        %1968 = vmatprep.subr.mxu0 0.0
        %1969 = vmatpush2.msra.mxu0 0.0
        %1970 = vmatprep.subr.mxu0 0.0
        %1971 = vmatpush2.msra.mxu0 0.0
        %1972 = vmatprep.mubr.f32.mxu0 0.0
        %1973 = vmatmul.mubr.f32.gmra.mxu0 %v1903
        %v1974 = vpop.f32.mrf.mxu0
        %v1975 = vadd.f32 0.0, %v1974
        %v1976 = vpop.f32.mrf.mxu0
        %1977 = vmatprep.mubr.f32.mxu0 0.0
        %1978 = vmatmul.mubr.f32.gmra.mxu0 %v1906
        %v1979 = vpop.f32.mrf.mxu0
        %v1980 = vadd.f32 0.0, %v1979
        %v1981 = vpop.f32.mrf.mxu0
        %1982 = vdwg.mxu0
        %v1983 = vrcp.pop %v1890
        %v1984 = vmul.f32 %v1975, %v1983
        %v1985 = vrcp.pop %v1893
        %v1986 = vmul.f32 %v1980, %v1985
        %v1987 = vpack.c.bf16 %v1986, %v1984
        %v1989 = vsel %vm1592, %v1987, 0
        %vm1991 = vcmask 1043456
        %v1993 = vsel %vm1991, %v1589, 0
        %1995 = vmatprep.subr.bf16.mxu0 0
        %1996 = vmatpush1.bf16.msra.mxu0 0
        %1997 = vmatprep.subr.bf16.mxu0 0
        %1998 = vmatpush1.bf16.msra.mxu0 0
        %1999 = vmatprep.subr.bf16.mxu0 0
        %2000 = vmatpush1.bf16.msra.mxu0 0
        %2001 = vmatprep.subr.bf16.mxu0 0
        %2002 = vmatpush1.bf16.msra.mxu0 0
        %2003 = vmatprep.subr.bf16.mxu0 0
        %2004 = vmatpush1.bf16.msra.mxu0 0
        %2005 = vmatprep.subr.bf16.mxu0 0
        %2006 = vmatpush1.bf16.msra.mxu0 0
        %2007 = vmatprep.subr.bf16.mxu0 0
        %2008 = vmatpush1.bf16.msra.mxu0 0
        %2009 = vmatprep.subr.bf16.mxu0 0
        %2010 = vmatpush1.bf16.msra.mxu0 %v1993
        %2011 = vmatprep.subr.bf16.mxu0 0
        %2012 = vmatpush2.bf16.msra.mxu0 0
        %2013 = vmatprep.subr.bf16.mxu0 0
        %2014 = vmatpush2.bf16.msra.mxu0 0
        %2015 = vmatprep.subr.bf16.mxu0 0
        %2016 = vmatpush2.bf16.msra.mxu0 0
        %2017 = vmatprep.subr.bf16.mxu0 0
        %2018 = vmatpush2.bf16.msra.mxu0 0
        %2019 = vmatprep.subr.bf16.mxu0 0
        %2020 = vmatpush2.bf16.msra.mxu0 0
        %2021 = vmatprep.subr.bf16.mxu0 0
        %2022 = vmatpush2.bf16.msra.mxu0 0
        %2023 = vmatprep.subr.bf16.mxu0 0
        %2024 = vmatpush2.bf16.msra.mxu0 0
        %2025 = vmatprep.subr.bf16.mxu0 0
        %2026 = vmatpush2.bf16.msra.mxu0 0
        %2027 = vmatprep.mubr.bf16.mxu0 0
        %2028 = vmatmul.mubr.bf16.gmra.mxu0 %v1989
        %v2029 = vpop.f32.mrf.mxu0
        %v2030 = vadd.f32 0.0, %v2029
        %v2031 = vpop.f32.mrf.mxu0
        %v2032 = vpop.f32.mrf.mxu0
        %v2033 = vadd.f32 0.0, %v2032
        %v2034 = vpop.f32.mrf.mxu0
        %2035 = vdwg.mxu0
        %v2037 = vsel %vm1592, %v1784, 0
        %v2040 = vsel %vm1991, %v1588, 0
        %2042 = vmatprep.subr.bf16.mxu0 0
        %2043 = vmatpush1.bf16.msra.mxu0 0
        %2044 = vmatprep.subr.bf16.mxu0 0
        %2045 = vmatpush1.bf16.msra.mxu0 0
        %2046 = vmatprep.subr.bf16.mxu0 0
        %2047 = vmatpush1.bf16.msra.mxu0 0
        %2048 = vmatprep.subr.bf16.mxu0 0
        %2049 = vmatpush1.bf16.msra.mxu0 0
        %2050 = vmatprep.subr.bf16.mxu0 0
        %2051 = vmatpush1.bf16.msra.mxu0 0
        %2052 = vmatprep.subr.bf16.mxu0 0
        %2053 = vmatpush1.bf16.msra.mxu0 0
        %2054 = vmatprep.subr.bf16.mxu0 0
        %2055 = vmatpush1.bf16.msra.mxu0 0
        %2056 = vmatprep.subr.bf16.mxu0 0
        %2057 = vmatpush1.bf16.msra.mxu0 %v2040
        %2058 = vmatprep.subr.bf16.mxu0 0
        %2059 = vmatpush2.bf16.msra.mxu0 0
        %2060 = vmatprep.subr.bf16.mxu0 0
        %2061 = vmatpush2.bf16.msra.mxu0 0
        %2062 = vmatprep.subr.bf16.mxu0 0
        %2063 = vmatpush2.bf16.msra.mxu0 0
        %2064 = vmatprep.subr.bf16.mxu0 0
        %2065 = vmatpush2.bf16.msra.mxu0 0
        %2066 = vmatprep.subr.bf16.mxu0 0
        %2067 = vmatpush2.bf16.msra.mxu0 0
        %2068 = vmatprep.subr.bf16.mxu0 0
        %2069 = vmatpush2.bf16.msra.mxu0 0
        %2070 = vmatprep.subr.bf16.mxu0 0
        %2071 = vmatpush2.bf16.msra.mxu0 0
        %2072 = vmatprep.subr.bf16.mxu0 0
        %2073 = vmatpush2.bf16.msra.mxu0 0
        %2074 = vmatprep.mubr.bf16.mxu0 0
        %2075 = vmatmul.mubr.bf16.gmra.mxu0 %v2037
        %v2076 = vpop.f32.mrf.mxu0
        %v2077 = vadd.f32 %v2030, %v2076
        %v2078 = vpop.f32.mrf.mxu0
        %v2079 = vpop.f32.mrf.mxu0
        %v2080 = vadd.f32 %v2033, %v2079
        %v2081 = vpop.f32.mrf.mxu0
        %2082 = vdwg.mxu0
        %2083 = vrot.lane.b32.xlu0 %v1454, 112
        %v2084 = vpop.permute.xlu0 %2083
        %2085 = vrot.lane.b32.xlu0 %v1457, 112
        %v2086 = vpop.permute.xlu0 %2085
        %2087 = vrot.lane.b32.xlu0 %v1518, 112
        %v2088 = vpop.permute.xlu0 %2087
        %2089 = vrot.lane.b32.xlu0 %v1521, 112
        %v2090 = vpop.permute.xlu0 %2089
        %v2091 = vsel %vm1592, %v2084, 0
        %v2093 = vsel %vm1592, %v2086, 0
        %v2095 = vsel %vm1592, %v2088, 0
        %v2097 = vsel %vm1592, %v2090, 0
        %2099 = vmatprep.subr.mxu0 0.0
        %2100 = vmatpush1.xpose.msra.mxu0 0.0
        %2101 = vmatprep.subr.mxu0 0.0
        %2102 = vmatpush1.xpose.msra.mxu0 0.0
        %2103 = vmatprep.subr.mxu0 0.0
        %2104 = vmatpush1.xpose.msra.mxu0 0.0
        %2105 = vmatprep.subr.mxu0 0.0
        %2106 = vmatpush1.xpose.msra.mxu0 0.0
        %2107 = vmatprep.subr.mxu0 0.0
        %2108 = vmatpush1.xpose.msra.mxu0 0.0
        %2109 = vmatprep.subr.mxu0 0.0
        %2110 = vmatpush1.xpose.msra.mxu0 0.0
        %2111 = vmatprep.subr.mxu0 0.0
        %2112 = vmatpush1.xpose.msra.mxu0 0.0
        %2113 = vmatprep.subr.mxu0 0.0
        %2114 = vmatpush1.xpose.msra.mxu0 0.0
        %2115 = vmatprep.subr.mxu0 0.0
        %2116 = vmatpush1.xpose.msra.mxu0 0.0
        %2117 = vmatprep.subr.mxu0 0.0
        %2118 = vmatpush1.xpose.msra.mxu0 0.0
        %2119 = vmatprep.subr.mxu0 0.0
        %2120 = vmatpush1.xpose.msra.mxu0 0.0
        %2121 = vmatprep.subr.mxu0 0.0
        %2122 = vmatpush1.xpose.msra.mxu0 0.0
        %2123 = vmatprep.subr.mxu0 0.0
        %2124 = vmatpush1.xpose.msra.mxu0 0.0
        %2125 = vmatprep.subr.mxu0 0.0
        %2126 = vmatpush1.xpose.msra.mxu0 0.0
        %2127 = vmatprep.subr.mxu0 0.0
        %2128 = vmatpush1.xpose.msra.mxu0 %v2097
        %2129 = vmatprep.subr.mxu0 0.0
        %2130 = vmatpush1.xpose.msra.mxu0 %v2095
        %2131 = vmatprep.subr.mxu0 0.0
        %2132 = vmatpush2.xpose.msra.mxu0 0.0
        %2133 = vmatprep.subr.mxu0 0.0
        %2134 = vmatpush2.xpose.msra.mxu0 0.0
        %2135 = vmatprep.subr.mxu0 0.0
        %2136 = vmatpush2.xpose.msra.mxu0 0.0
        %2137 = vmatprep.subr.mxu0 0.0
        %2138 = vmatpush2.xpose.msra.mxu0 0.0
        %2139 = vmatprep.subr.mxu0 0.0
        %2140 = vmatpush2.xpose.msra.mxu0 0.0
        %2141 = vmatprep.subr.mxu0 0.0
        %2142 = vmatpush2.xpose.msra.mxu0 0.0
        %2143 = vmatprep.subr.mxu0 0.0
        %2144 = vmatpush2.xpose.msra.mxu0 0.0
        %2145 = vmatprep.subr.mxu0 0.0
        %2146 = vmatpush2.xpose.msra.mxu0 0.0
        %2147 = vmatprep.subr.mxu0 0.0
        %2148 = vmatpush2.xpose.msra.mxu0 0.0
        %2149 = vmatprep.subr.mxu0 0.0
        %2150 = vmatpush2.xpose.msra.mxu0 0.0
        %2151 = vmatprep.subr.mxu0 0.0
        %2152 = vmatpush2.xpose.msra.mxu0 0.0
        %2153 = vmatprep.subr.mxu0 0.0
        %2154 = vmatpush2.xpose.msra.mxu0 0.0
        %2155 = vmatprep.subr.mxu0 0.0
        %2156 = vmatpush2.xpose.msra.mxu0 0.0
        %2157 = vmatprep.subr.mxu0 0.0
        %2158 = vmatpush2.xpose.msra.mxu0 0.0
        %2159 = vmatprep.subr.mxu0 0.0
        %2160 = vmatpush2.xpose.msra.mxu0 0.0
        %2161 = vmatprep.subr.mxu0 0.0
        %2162 = vmatpush2.xpose.msra.mxu0 0.0
        %2163 = vmatprep.mubr.f32.mxu0 0.0
        %2164 = vmatmul.mubr.f32.gmra.mxu0 %v2091
        %v2165 = vpop.f32.mrf.mxu0
        %v2166 = vadd.f32 %v1390, %v2165
        %v2167 = vpop.f32.mrf.mxu0
        %2168 = vmatprep.mubr.f32.mxu0 0.0
        %2169 = vmatmul.mubr.f32.gmra.mxu0 %v2093
        %v2170 = vpop.f32.mrf.mxu0
        %v2171 = vadd.f32 %v1391, %v2170
        %v2172 = vpop.f32.mrf.mxu0
        %2173 = vdwg.mxu0
        %v2174 = vsel %vm1680, %v2166, -inf
        %2175 = vmax.xlane.f32.xlu0 %v2174
        %v2176 = vpop.xlane.xlu0 %2175
        %v2177 = vsel %vm1680, %v2171, -inf
        %2178 = vmax.xlane.f32.xlu0 %v2177
        %v2179 = vpop.xlane.xlu0 %2178
        %v2180 = vsub.f32 %v2166, %v2176
        %v2181 = vsub.f32 %v2171, %v2179
        %v2182 = vmul.f32 %v2180, 1.442695
        %v2183 = vpow.pop %v2182
        %v2184 = vmul.f32 %v2181, 1.442695
        %v2185 = vpow.pop %v2184
        %v2186 = vsel %vm1680, %v2183, 0.0
        %2187 = vadd.xlane.f32.xlu0 %v2186
        %v2188 = vpop.xlane.xlu0 %2187
        %v2189 = vsel %vm1680, %v2185, 0.0
        %2190 = vadd.xlane.f32.xlu0 %v2189
        %v2191 = vpop.xlane.xlu0 %2190
        %2192 = vrot.lane.b32.xlu0 %v1582, 112
        %v2193 = vpop.permute.xlu0 %2192
        %2194 = vrot.lane.b32.xlu0 %v1585, 112
        %v2195 = vpop.permute.xlu0 %2194
        %v2199 = vsel %vm1680, %v2183, 0
        %v2202 = vsel %vm1680, %v2185, 0
        %2204 = vmatprep.subr.mxu0 0.0
        %2205 = vmatpush1.msra.mxu0 0.0
        %2206 = vmatprep.subr.mxu0 0.0
        %2207 = vmatpush1.msra.mxu0 0.0
        %2208 = vmatprep.subr.mxu0 0.0
        %2209 = vmatpush1.msra.mxu0 0.0
        %2210 = vmatprep.subr.mxu0 0.0
        %2211 = vmatpush1.msra.mxu0 0.0
        %2212 = vmatprep.subr.mxu0 0.0
        %2213 = vmatpush1.msra.mxu0 0.0
        %2214 = vmatprep.subr.mxu0 0.0
        %2215 = vmatpush1.msra.mxu0 0.0
        %2216 = vmatprep.subr.mxu0 0.0
        %2217 = vmatpush1.msra.mxu0 0.0
        %2218 = vmatprep.subr.mxu0 0.0
        %2219 = vmatpush1.msra.mxu0 0.0
        %2220 = vmatprep.subr.mxu0 0.0
        %2221 = vmatpush1.msra.mxu0 0.0
        %2222 = vmatprep.subr.mxu0 0.0
        %2223 = vmatpush1.msra.mxu0 0.0
        %2224 = vmatprep.subr.mxu0 0.0
        %2225 = vmatpush1.msra.mxu0 0.0
        %2226 = vmatprep.subr.mxu0 0.0
        %2227 = vmatpush1.msra.mxu0 0.0
        %2228 = vmatprep.subr.mxu0 0.0
        %2229 = vmatpush1.msra.mxu0 0.0
        %2230 = vmatprep.subr.mxu0 0.0
        %2231 = vmatpush1.msra.mxu0 0.0
        %2232 = vmatprep.subr.mxu0 0.0
        %2233 = vmatpush1.msra.mxu0 %v2195
        %2234 = vmatprep.subr.mxu0 0.0
        %2235 = vmatpush1.msra.mxu0 %v2193
        %2236 = vmatprep.subr.mxu0 0.0
        %2237 = vmatpush2.msra.mxu0 0.0
        %2238 = vmatprep.subr.mxu0 0.0
        %2239 = vmatpush2.msra.mxu0 0.0
        %2240 = vmatprep.subr.mxu0 0.0
        %2241 = vmatpush2.msra.mxu0 0.0
        %2242 = vmatprep.subr.mxu0 0.0
        %2243 = vmatpush2.msra.mxu0 0.0
        %2244 = vmatprep.subr.mxu0 0.0
        %2245 = vmatpush2.msra.mxu0 0.0
        %2246 = vmatprep.subr.mxu0 0.0
        %2247 = vmatpush2.msra.mxu0 0.0
        %2248 = vmatprep.subr.mxu0 0.0
        %2249 = vmatpush2.msra.mxu0 0.0
        %2250 = vmatprep.subr.mxu0 0.0
        %2251 = vmatpush2.msra.mxu0 0.0
        %2252 = vmatprep.subr.mxu0 0.0
        %2253 = vmatpush2.msra.mxu0 0.0
        %2254 = vmatprep.subr.mxu0 0.0
        %2255 = vmatpush2.msra.mxu0 0.0
        %2256 = vmatprep.subr.mxu0 0.0
        %2257 = vmatpush2.msra.mxu0 0.0
        %2258 = vmatprep.subr.mxu0 0.0
        %2259 = vmatpush2.msra.mxu0 0.0
        %2260 = vmatprep.subr.mxu0 0.0
        %2261 = vmatpush2.msra.mxu0 0.0
        %2262 = vmatprep.subr.mxu0 0.0
        %2263 = vmatpush2.msra.mxu0 0.0
        %2264 = vmatprep.subr.mxu0 0.0
        %2265 = vmatpush2.msra.mxu0 0.0
        %2266 = vmatprep.subr.mxu0 0.0
        %2267 = vmatpush2.msra.mxu0 0.0
        %2268 = vmatprep.mubr.f32.mxu0 0.0
        %2269 = vmatmul.mubr.f32.gmra.mxu0 %v2199
        %v2270 = vpop.f32.mrf.mxu0
        %v2271 = vadd.f32 0.0, %v2270
        %v2272 = vpop.f32.mrf.mxu0
        %2273 = vmatprep.mubr.f32.mxu0 0.0
        %2274 = vmatmul.mubr.f32.gmra.mxu0 %v2202
        %v2275 = vpop.f32.mrf.mxu0
        %v2276 = vadd.f32 0.0, %v2275
        %v2277 = vpop.f32.mrf.mxu0
        %2278 = vdwg.mxu0
        %v2279 = vrcp.pop %v2188
        %v2280 = vmul.f32 %v2271, %v2279
        %v2281 = vrcp.pop %v2191
        %v2282 = vmul.f32 %v2276, %v2281
        %v2283 = vpack.c.bf16 %v2282, %v2280
        %v2285 = vsel %vm1592, %v2283, 0
        %v2288 = vsel %vm1991, %v1590, 0
        %2290 = vmatprep.subr.bf16.mxu0 0
        %2291 = vmatpush1.bf16.msra.mxu0 0
        %2292 = vmatprep.subr.bf16.mxu0 0
        %2293 = vmatpush1.bf16.msra.mxu0 0
        %2294 = vmatprep.subr.bf16.mxu0 0
        %2295 = vmatpush1.bf16.msra.mxu0 0
        %2296 = vmatprep.subr.bf16.mxu0 0
        %2297 = vmatpush1.bf16.msra.mxu0 0
        %2298 = vmatprep.subr.bf16.mxu0 0
        %2299 = vmatpush1.bf16.msra.mxu0 0
        %2300 = vmatprep.subr.bf16.mxu0 0
        %2301 = vmatpush1.bf16.msra.mxu0 0
        %2302 = vmatprep.subr.bf16.mxu0 0
        %2303 = vmatpush1.bf16.msra.mxu0 0
        %2304 = vmatprep.subr.bf16.mxu0 0
        %2305 = vmatpush1.bf16.msra.mxu0 %v2288
        %2306 = vmatprep.subr.bf16.mxu0 0
        %2307 = vmatpush2.bf16.msra.mxu0 0
        %2308 = vmatprep.subr.bf16.mxu0 0
        %2309 = vmatpush2.bf16.msra.mxu0 0
        %2310 = vmatprep.subr.bf16.mxu0 0
        %2311 = vmatpush2.bf16.msra.mxu0 0
        %2312 = vmatprep.subr.bf16.mxu0 0
        %2313 = vmatpush2.bf16.msra.mxu0 0
        %2314 = vmatprep.subr.bf16.mxu0 0
        %2315 = vmatpush2.bf16.msra.mxu0 0
        %2316 = vmatprep.subr.bf16.mxu0 0
        %2317 = vmatpush2.bf16.msra.mxu0 0
        %2318 = vmatprep.subr.bf16.mxu0 0
        %2319 = vmatpush2.bf16.msra.mxu0 0
        %2320 = vmatprep.subr.bf16.mxu0 0
        %2321 = vmatpush2.bf16.msra.mxu0 0
        %2322 = vmatprep.mubr.bf16.mxu0 0
        %2323 = vmatmul.mubr.bf16.gmra.mxu0 %v2285
        %v2324 = vpop.f32.mrf.mxu0
        %v2325 = vadd.f32 0.0, %v2324
        %v2326 = vpop.f32.mrf.mxu0
        %v2327 = vpop.f32.mrf.mxu0
        %v2328 = vadd.f32 0.0, %v2327
        %v2329 = vpop.f32.mrf.mxu0
        %2330 = vdwg.mxu0
        %v2331 = vadd.f32 %v2077, %v2325
        %v2332 = vadd.f32 %v2080, %v2328
        %2333 = vrot.lane.b32.xlu0 %v1454, 104
        %v2334 = vpop.permute.xlu0 %2333
        %2335 = vrot.lane.b32.xlu0 %v1457, 104
        %v2336 = vpop.permute.xlu0 %2335
        %2337 = vrot.lane.b32.xlu0 %v1518, 104
        %v2338 = vpop.permute.xlu0 %2337
        %2339 = vrot.lane.b32.xlu0 %v1521, 104
        %v2340 = vpop.permute.xlu0 %2339
        %v2341 = vsel %vm1592, %v2334, 0
        %v2343 = vsel %vm1592, %v2336, 0
        %v2345 = vsel %vm1592, %v2338, 0
        %v2347 = vsel %vm1592, %v2340, 0
        %2349 = vmatprep.subr.mxu0 0.0
        %2350 = vmatpush1.xpose.msra.mxu0 0.0
        %2351 = vmatprep.subr.mxu0 0.0
        %2352 = vmatpush1.xpose.msra.mxu0 0.0
        %2353 = vmatprep.subr.mxu0 0.0
        %2354 = vmatpush1.xpose.msra.mxu0 0.0
        %2355 = vmatprep.subr.mxu0 0.0
        %2356 = vmatpush1.xpose.msra.mxu0 0.0
        %2357 = vmatprep.subr.mxu0 0.0
        %2358 = vmatpush1.xpose.msra.mxu0 0.0
        %2359 = vmatprep.subr.mxu0 0.0
        %2360 = vmatpush1.xpose.msra.mxu0 0.0
        %2361 = vmatprep.subr.mxu0 0.0
        %2362 = vmatpush1.xpose.msra.mxu0 0.0
        %2363 = vmatprep.subr.mxu0 0.0
        %2364 = vmatpush1.xpose.msra.mxu0 0.0
        %2365 = vmatprep.subr.mxu0 0.0
        %2366 = vmatpush1.xpose.msra.mxu0 0.0
        %2367 = vmatprep.subr.mxu0 0.0
        %2368 = vmatpush1.xpose.msra.mxu0 0.0
        %2369 = vmatprep.subr.mxu0 0.0
        %2370 = vmatpush1.xpose.msra.mxu0 0.0
        %2371 = vmatprep.subr.mxu0 0.0
        %2372 = vmatpush1.xpose.msra.mxu0 0.0
        %2373 = vmatprep.subr.mxu0 0.0
        %2374 = vmatpush1.xpose.msra.mxu0 0.0
        %2375 = vmatprep.subr.mxu0 0.0
        %2376 = vmatpush1.xpose.msra.mxu0 0.0
        %2377 = vmatprep.subr.mxu0 0.0
        %2378 = vmatpush1.xpose.msra.mxu0 %v2347
        %2379 = vmatprep.subr.mxu0 0.0
        %2380 = vmatpush1.xpose.msra.mxu0 %v2345
        %2381 = vmatprep.subr.mxu0 0.0
        %2382 = vmatpush2.xpose.msra.mxu0 0.0
        %2383 = vmatprep.subr.mxu0 0.0
        %2384 = vmatpush2.xpose.msra.mxu0 0.0
        %2385 = vmatprep.subr.mxu0 0.0
        %2386 = vmatpush2.xpose.msra.mxu0 0.0
        %2387 = vmatprep.subr.mxu0 0.0
        %2388 = vmatpush2.xpose.msra.mxu0 0.0
        %2389 = vmatprep.subr.mxu0 0.0
        %2390 = vmatpush2.xpose.msra.mxu0 0.0
        %2391 = vmatprep.subr.mxu0 0.0
        %2392 = vmatpush2.xpose.msra.mxu0 0.0
        %2393 = vmatprep.subr.mxu0 0.0
        %2394 = vmatpush2.xpose.msra.mxu0 0.0
        %2395 = vmatprep.subr.mxu0 0.0
        %2396 = vmatpush2.xpose.msra.mxu0 0.0
        %2397 = vmatprep.subr.mxu0 0.0
        %2398 = vmatpush2.xpose.msra.mxu0 0.0
        %2399 = vmatprep.subr.mxu0 0.0
        %2400 = vmatpush2.xpose.msra.mxu0 0.0
        %2401 = vmatprep.subr.mxu0 0.0
        %2402 = vmatpush2.xpose.msra.mxu0 0.0
        %2403 = vmatprep.subr.mxu0 0.0
        %2404 = vmatpush2.xpose.msra.mxu0 0.0
        %2405 = vmatprep.subr.mxu0 0.0
        %2406 = vmatpush2.xpose.msra.mxu0 0.0
        %2407 = vmatprep.subr.mxu0 0.0
        %2408 = vmatpush2.xpose.msra.mxu0 0.0
        %2409 = vmatprep.subr.mxu0 0.0
        %2410 = vmatpush2.xpose.msra.mxu0 0.0
        %2411 = vmatprep.subr.mxu0 0.0
        %2412 = vmatpush2.xpose.msra.mxu0 0.0
        %2413 = vmatprep.mubr.f32.mxu0 0.0
        %2414 = vmatmul.mubr.f32.gmra.mxu0 %v2341
        %v2415 = vpop.f32.mrf.mxu0
        %v2416 = vadd.f32 %v1390, %v2415
        %v2417 = vpop.f32.mrf.mxu0
        %2418 = vmatprep.mubr.f32.mxu0 0.0
        %2419 = vmatmul.mubr.f32.gmra.mxu0 %v2343
        %v2420 = vpop.f32.mrf.mxu0
        %v2421 = vadd.f32 %v1391, %v2420
        %v2422 = vpop.f32.mrf.mxu0
        %2423 = vdwg.mxu0
        %v2424 = vsel %vm1680, %v2416, -inf
        %2425 = vmax.xlane.f32.xlu0 %v2424
        %v2426 = vpop.xlane.xlu0 %2425
        %v2427 = vsel %vm1680, %v2421, -inf
        %2428 = vmax.xlane.f32.xlu0 %v2427
        %v2429 = vpop.xlane.xlu0 %2428
        %v2430 = vsub.f32 %v2416, %v2426
        %v2431 = vsub.f32 %v2421, %v2429
        %v2432 = vmul.f32 %v2430, 1.442695
        %v2433 = vpow.pop %v2432
        %v2434 = vmul.f32 %v2431, 1.442695
        %v2435 = vpow.pop %v2434
        %v2436 = vsel %vm1680, %v2433, 0.0
        %2437 = vadd.xlane.f32.xlu0 %v2436
        %v2438 = vpop.xlane.xlu0 %2437
        %v2439 = vsel %vm1680, %v2435, 0.0
        %2440 = vadd.xlane.f32.xlu0 %v2439
        %v2441 = vpop.xlane.xlu0 %2440
        %2442 = vrot.lane.b32.xlu0 %v1582, 104
        %v2443 = vpop.permute.xlu0 %2442
        %2444 = vrot.lane.b32.xlu0 %v1585, 104
        %v2445 = vpop.permute.xlu0 %2444
        %v2449 = vsel %vm1680, %v2433, 0
        %v2452 = vsel %vm1680, %v2435, 0
        %2454 = vmatprep.subr.mxu0 0.0
        %2455 = vmatpush1.msra.mxu0 0.0
        %2456 = vmatprep.subr.mxu0 0.0
        %2457 = vmatpush1.msra.mxu0 0.0
        %2458 = vmatprep.subr.mxu0 0.0
        %2459 = vmatpush1.msra.mxu0 0.0
        %2460 = vmatprep.subr.mxu0 0.0
        %2461 = vmatpush1.msra.mxu0 0.0
        %2462 = vmatprep.subr.mxu0 0.0
        %2463 = vmatpush1.msra.mxu0 0.0
        %2464 = vmatprep.subr.mxu0 0.0
        %2465 = vmatpush1.msra.mxu0 0.0
        %2466 = vmatprep.subr.mxu0 0.0
        %2467 = vmatpush1.msra.mxu0 0.0
        %2468 = vmatprep.subr.mxu0 0.0
        %2469 = vmatpush1.msra.mxu0 0.0
        %2470 = vmatprep.subr.mxu0 0.0
        %2471 = vmatpush1.msra.mxu0 0.0
        %2472 = vmatprep.subr.mxu0 0.0
        %2473 = vmatpush1.msra.mxu0 0.0
        %2474 = vmatprep.subr.mxu0 0.0
        %2475 = vmatpush1.msra.mxu0 0.0
        %2476 = vmatprep.subr.mxu0 0.0
        %2477 = vmatpush1.msra.mxu0 0.0
        %2478 = vmatprep.subr.mxu0 0.0
        %2479 = vmatpush1.msra.mxu0 0.0
        %2480 = vmatprep.subr.mxu0 0.0
        %2481 = vmatpush1.msra.mxu0 0.0
        %2482 = vmatprep.subr.mxu0 0.0
        %2483 = vmatpush1.msra.mxu0 %v2445
        %2484 = vmatprep.subr.mxu0 0.0
        %2485 = vmatpush1.msra.mxu0 %v2443
        %2486 = vmatprep.subr.mxu0 0.0
        %2487 = vmatpush2.msra.mxu0 0.0
        %2488 = vmatprep.subr.mxu0 0.0
        %2489 = vmatpush2.msra.mxu0 0.0
        %2490 = vmatprep.subr.mxu0 0.0
        %2491 = vmatpush2.msra.mxu0 0.0
        %2492 = vmatprep.subr.mxu0 0.0
        %2493 = vmatpush2.msra.mxu0 0.0
        %2494 = vmatprep.subr.mxu0 0.0
        %2495 = vmatpush2.msra.mxu0 0.0
        %2496 = vmatprep.subr.mxu0 0.0
        %2497 = vmatpush2.msra.mxu0 0.0
        %2498 = vmatprep.subr.mxu0 0.0
        %2499 = vmatpush2.msra.mxu0 0.0
        %2500 = vmatprep.subr.mxu0 0.0
        %2501 = vmatpush2.msra.mxu0 0.0
        %2502 = vmatprep.subr.mxu0 0.0
        %2503 = vmatpush2.msra.mxu0 0.0
        %2504 = vmatprep.subr.mxu0 0.0
        %2505 = vmatpush2.msra.mxu0 0.0
        %2506 = vmatprep.subr.mxu0 0.0
        %2507 = vmatpush2.msra.mxu0 0.0
        %2508 = vmatprep.subr.mxu0 0.0
        %2509 = vmatpush2.msra.mxu0 0.0
        %2510 = vmatprep.subr.mxu0 0.0
        %2511 = vmatpush2.msra.mxu0 0.0
        %2512 = vmatprep.subr.mxu0 0.0
        %2513 = vmatpush2.msra.mxu0 0.0
        %2514 = vmatprep.subr.mxu0 0.0
        %2515 = vmatpush2.msra.mxu0 0.0
        %2516 = vmatprep.subr.mxu0 0.0
        %2517 = vmatpush2.msra.mxu0 0.0
        %2518 = vmatprep.mubr.f32.mxu0 0.0
        %2519 = vmatmul.mubr.f32.gmra.mxu0 %v2449
        %v2520 = vpop.f32.mrf.mxu0
        %v2521 = vadd.f32 0.0, %v2520
        %v2522 = vpop.f32.mrf.mxu0
        %2523 = vmatprep.mubr.f32.mxu0 0.0
        %2524 = vmatmul.mubr.f32.gmra.mxu0 %v2452
        %v2525 = vpop.f32.mrf.mxu0
        %v2526 = vadd.f32 0.0, %v2525
        %v2527 = vpop.f32.mrf.mxu0
        %2528 = vdwg.mxu0
        %v2529 = vrcp.pop %v2438
        %v2530 = vmul.f32 %v2521, %v2529
        %v2531 = vrcp.pop %v2441
        %v2532 = vmul.f32 %v2526, %v2531
        %v2533 = vpack.c.bf16 %v2532, %v2530
        %v2535 = vsel %vm1592, %v2533, 0
        %v2538 = vsel %vm1991, %v1591, 0
        %2540 = vmatprep.subr.bf16.mxu0 0
        %2541 = vmatpush1.bf16.msra.mxu0 0
        %2542 = vmatprep.subr.bf16.mxu0 0
        %2543 = vmatpush1.bf16.msra.mxu0 0
        %2544 = vmatprep.subr.bf16.mxu0 0
        %2545 = vmatpush1.bf16.msra.mxu0 0
        %2546 = vmatprep.subr.bf16.mxu0 0
        %2547 = vmatpush1.bf16.msra.mxu0 0
        %2548 = vmatprep.subr.bf16.mxu0 0
        %2549 = vmatpush1.bf16.msra.mxu0 0
        %2550 = vmatprep.subr.bf16.mxu0 0
        %2551 = vmatpush1.bf16.msra.mxu0 0
        %2552 = vmatprep.subr.bf16.mxu0 0
        %2553 = vmatpush1.bf16.msra.mxu0 0
        %2554 = vmatprep.subr.bf16.mxu0 0
        %2555 = vmatpush1.bf16.msra.mxu0 %v2538
        %2556 = vmatprep.subr.bf16.mxu0 0
        %2557 = vmatpush2.bf16.msra.mxu0 0
        %2558 = vmatprep.subr.bf16.mxu0 0
        %2559 = vmatpush2.bf16.msra.mxu0 0
        %2560 = vmatprep.subr.bf16.mxu0 0
        %2561 = vmatpush2.bf16.msra.mxu0 0
        %2562 = vmatprep.subr.bf16.mxu0 0
        %2563 = vmatpush2.bf16.msra.mxu0 0
        %2564 = vmatprep.subr.bf16.mxu0 0
        %2565 = vmatpush2.bf16.msra.mxu0 0
        %2566 = vmatprep.subr.bf16.mxu0 0
        %2567 = vmatpush2.bf16.msra.mxu0 0
        %2568 = vmatprep.subr.bf16.mxu0 0
        %2569 = vmatpush2.bf16.msra.mxu0 0
        %2570 = vmatprep.subr.bf16.mxu0 0
        %2571 = vmatpush2.bf16.msra.mxu0 0
        %2572 = vmatprep.mubr.bf16.mxu0 0
        %2573 = vmatmul.mubr.bf16.gmra.mxu0 %v2535
        %v2574 = vpop.f32.mrf.mxu0
        %v2575 = vadd.f32 0.0, %v2574
        %v2576 = vpop.f32.mrf.mxu0
        %v2577 = vpop.f32.mrf.mxu0
        %v2578 = vadd.f32 0.0, %v2577
        %v2579 = vpop.f32.mrf.mxu0
        %2580 = vdwg.mxu0
        %v2581 = vadd.f32 %v2331, %v2575
        %v2582 = vadd.f32 %v2332, %v2578
        %v2583 = vld [vmem:[%s1217] sm:$0x1]
        %v2585 = vlaneseq
        %v2586 = vshrl.u32 %v2585, 7
        %v2587 = vsub.s32 0, %v2586
        %v2588 = vrot.slane %v2583, %v2587
        %v2590 = vadd.f32 %v2581, %v2588
        %v2591 = vadd.f32 %v2582, %v2588
        %v2592 = vadd.f32 %v1387, %v2590
        %v2593 = vadd.f32 %v1388, %v2591
        %v2594 = vsel %vm1415, %v2592, 0.0
        %2595 = vadd.xlane.f32.xlu0 %v2594
        %v2596 = vpop.xlane.xlu0 %2595
        %v2597 = vsel %vm1415, %v2593, 0.0
        %2598 = vadd.xlane.f32.xlu0 %v2597
        %v2599 = vpop.xlane.xlu0 %2598
        %v2600 = vrcp.pop 32.0
        %v2601 = vmul.f32 %v2596, %v2600
        %v2602 = vmul.f32 %v2599, %v2600
        %v2603 = vsub.f32 %v2592, %v2601
        %v2604 = vsub.f32 %v2593, %v2602
        %v2605 = vmul.f32 %v2603, %v2603
        %v2606 = vmul.f32 %v2604, %v2604
        %v2607 = vsel %vm1415, %v2605, 0.0
        %2608 = vadd.xlane.f32.xlu0 %v2607
        %v2609 = vpop.xlane.xlu0 %2608
        %v2610 = vsel %vm1415, %v2606, 0.0
        %2611 = vadd.xlane.f32.xlu0 %v2610
        %v2612 = vpop.xlane.xlu0 %2611
        %v2613 = vmul.f32 %v2609, %v2600
        %v2614 = vmul.f32 %v2612, %v2600
        %v2615 = vadd.f32 %v2613, 1e-05
        %v2616 = vadd.f32 %v2614, 1e-05
        %v2617 = vrsqrt.pop %v2615
        %v2618 = vrsqrt.pop %v2616
        %v2619 = vmul.f32 %v2603, %v2617
        %v2620 = vmul.f32 %v2604, %v2618
        %v2621 = vld [vmem:[%s1237] sm:$0x1]
        %v2623 = vlaneseq
        %v2624 = vshrl.u32 %v2623, 7
        %v2625 = vsub.s32 0, %v2624
        %v2626 = vrot.slane %v2621, %v2625
        %v2628 = vmul.f32 %v2619, %v2626
        %v2629 = vmul.f32 %v2620, %v2626
        %v2630 = vld [vmem:[%s1240] sm:$0x1]
        %v2632 = vlaneseq
        %v2633 = vshrl.u32 %v2632, 7
        %v2634 = vsub.s32 0, %v2633
        %v2635 = vrot.slane %v2630, %v2634
        %v2637 = vadd.f32 %v2628, %v2635
        %v2638 = vadd.f32 %v2629, %v2635
        %v2639 = vpack.c.bf16 %v2638, %v2637
        %v2640 = vld [vmem:[%s1222] sm:$0xff]
        %v2641 = vld [vmem:[%s1222 + $0x8] sm:$0xff]
        %v2642 = vld [vmem:[%s1222 + $0x10] sm:$0xff]
        %v2643 = vld [vmem:[%s1222 + $0x18] sm:$0xff]
        %v2644 = vld [vmem:[%s1222 + $0x20] sm:$0xff]
        %v2645 = vld [vmem:[%s1222 + $0x28] sm:$0xff]
        %v2646 = vld [vmem:[%s1222 + $0x30] sm:$0xff]
        %v2647 = vld [vmem:[%s1222 + $0x38] sm:$0xff]
        %v2648 = vld [vmem:[%s1222 + $0x40] sm:$0xff]
        %v2649 = vld [vmem:[%s1222 + $0x48] sm:$0xff]
        %v2650 = vld [vmem:[%s1222 + $0x50] sm:$0xff]
        %v2651 = vld [vmem:[%s1222 + $0x58] sm:$0xff]
        %v2652 = vld [vmem:[%s1222 + $0x60] sm:$0xff]
        %v2653 = vld [vmem:[%s1222 + $0x68] sm:$0xff]
        %v2654 = vld [vmem:[%s1222 + $0x70] sm:$0xff]
        %v2655 = vld [vmem:[%s1222 + $0x78] sm:$0xff]
        %v2656 = vld [vmem:[%s1222 + $0x80] sm:$0xff]
        %v2657 = vld [vmem:[%s1222 + $0x88] sm:$0xff]
        %v2658 = vld [vmem:[%s1222 + $0x90] sm:$0xff]
        %v2659 = vld [vmem:[%s1222 + $0x98] sm:$0xff]
        %v2660 = vld [vmem:[%s1222 + $0xa0] sm:$0xff]
        %v2661 = vld [vmem:[%s1222 + $0xa8] sm:$0xff]
        %v2662 = vld [vmem:[%s1222 + $0xb0] sm:$0xff]
        %v2663 = vld [vmem:[%s1222 + $0xb8] sm:$0xff]
        %v2664 = vld [vmem:[%s1222 + $0xc0] sm:$0xff]
        %v2665 = vld [vmem:[%s1222 + $0xc8] sm:$0xff]
        %v2666 = vld [vmem:[%s1222 + $0xd0] sm:$0xff]
        %v2667 = vld [vmem:[%s1222 + $0xd8] sm:$0xff]
        %v2668 = vld [vmem:[%s1222 + $0xe0] sm:$0xff]
        %v2669 = vld [vmem:[%s1222 + $0xe8] sm:$0xff]
        %v2670 = vld [vmem:[%s1222 + $0xf0] sm:$0xff]
        %v2671 = vld [vmem:[%s1222 + $0xf8] sm:$0xff]
        %v2672 = vld [vmem:[%s1226] sm:$0xff]
        %v2673 = vld [vmem:[%s1226 + $0x8] sm:$0xff]
        %v2676 = vlaneseq
        %v2677 = vshrl.u32 %v2676, 7
        %v2678 = vsub.s32 0, %v2677
        %v2679 = vrot.slane %v2672, %v2678
        %v2680 = vlaneseq
        %v2681 = vshrl.u32 %v2680, 7
        %v2682 = vsub.s32 1, %v2681
        %v2683 = vrot.slane %v2672, %v2682
        %v2684 = vlaneseq
        %v2685 = vshrl.u32 %v2684, 7
        %v2686 = vsub.s32 2, %v2685
        %v2687 = vrot.slane %v2672, %v2686
        %v2688 = vlaneseq
        %v2689 = vshrl.u32 %v2688, 7
        %v2690 = vsub.s32 3, %v2689
        %v2691 = vrot.slane %v2672, %v2690
        %v2692 = vlaneseq
        %v2693 = vshrl.u32 %v2692, 7
        %v2694 = vsub.s32 4, %v2693
        %v2695 = vrot.slane %v2672, %v2694
        %v2696 = vlaneseq
        %v2697 = vshrl.u32 %v2696, 7
        %v2698 = vsub.s32 5, %v2697
        %v2699 = vrot.slane %v2672, %v2698
        %v2700 = vlaneseq
        %v2701 = vshrl.u32 %v2700, 7
        %v2702 = vsub.s32 6, %v2701
        %v2703 = vrot.slane %v2672, %v2702
        %v2704 = vlaneseq
        %v2705 = vshrl.u32 %v2704, 7
        %v2706 = vsub.s32 7, %v2705
        %v2707 = vrot.slane %v2672, %v2706
        %v2708 = vlaneseq
        %v2709 = vshrl.u32 %v2708, 7
        %v2710 = vsub.s32 0, %v2709
        %v2711 = vrot.slane %v2673, %v2710
        %v2712 = vlaneseq
        %v2713 = vshrl.u32 %v2712, 7
        %v2714 = vsub.s32 1, %v2713
        %v2715 = vrot.slane %v2673, %v2714
        %v2716 = vlaneseq
        %v2717 = vshrl.u32 %v2716, 7
        %v2718 = vsub.s32 2, %v2717
        %v2719 = vrot.slane %v2673, %v2718
        %v2720 = vlaneseq
        %v2721 = vshrl.u32 %v2720, 7
        %v2722 = vsub.s32 3, %v2721
        %v2723 = vrot.slane %v2673, %v2722
        %v2724 = vlaneseq
        %v2725 = vshrl.u32 %v2724, 7
        %v2726 = vsub.s32 4, %v2725
        %v2727 = vrot.slane %v2673, %v2726
        %v2728 = vlaneseq
        %v2729 = vshrl.u32 %v2728, 7
        %v2730 = vsub.s32 5, %v2729
        %v2731 = vrot.slane %v2673, %v2730
        %v2732 = vlaneseq
        %v2733 = vshrl.u32 %v2732, 7
        %v2734 = vsub.s32 6, %v2733
        %v2735 = vrot.slane %v2673, %v2734
        %v2736 = vlaneseq
        %v2737 = vshrl.u32 %v2736, 7
        %v2738 = vsub.s32 7, %v2737
        %v2739 = vrot.slane %v2673, %v2738
        %v2788 = vunpack.c.l.b16 %v2640
        %v2789 = vunpack.c.h.b16 %v2640
        %v2790 = vunpack.c.l.b16 %v2641
        %v2791 = vunpack.c.h.b16 %v2641
        %v2792 = vunpack.c.l.b16 %v2642
        %v2793 = vunpack.c.h.b16 %v2642
        %v2794 = vunpack.c.l.b16 %v2643
        %v2795 = vunpack.c.h.b16 %v2643
        %v2796 = vunpack.c.l.b16 %v2644
        %v2797 = vunpack.c.h.b16 %v2644
        %v2798 = vunpack.c.l.b16 %v2645
        %v2799 = vunpack.c.h.b16 %v2645
        %v2800 = vunpack.c.l.b16 %v2646
        %v2801 = vunpack.c.h.b16 %v2646
        %v2802 = vunpack.c.l.b16 %v2647
        %v2803 = vunpack.c.h.b16 %v2647
        %v2804 = vunpack.c.l.b16 %v2648
        %v2805 = vunpack.c.h.b16 %v2648
        %v2806 = vunpack.c.l.b16 %v2649
        %v2807 = vunpack.c.h.b16 %v2649
        %v2808 = vunpack.c.l.b16 %v2650
        %v2809 = vunpack.c.h.b16 %v2650
        %v2810 = vunpack.c.l.b16 %v2651
        %v2811 = vunpack.c.h.b16 %v2651
        %v2812 = vunpack.c.l.b16 %v2652
        %v2813 = vunpack.c.h.b16 %v2652
        %v2814 = vunpack.c.l.b16 %v2653
        %v2815 = vunpack.c.h.b16 %v2653
        %v2816 = vunpack.c.l.b16 %v2654
        %v2817 = vunpack.c.h.b16 %v2654
        %v2818 = vunpack.c.l.b16 %v2655
        %v2819 = vunpack.c.h.b16 %v2655
        %v2820 = vunpack.c.l.b16 %v2656
        %v2821 = vunpack.c.h.b16 %v2656
        %v2822 = vunpack.c.l.b16 %v2657
        %v2823 = vunpack.c.h.b16 %v2657
        %v2824 = vunpack.c.l.b16 %v2658
        %v2825 = vunpack.c.h.b16 %v2658
        %v2826 = vunpack.c.l.b16 %v2659
        %v2827 = vunpack.c.h.b16 %v2659
        %v2828 = vunpack.c.l.b16 %v2660
        %v2829 = vunpack.c.h.b16 %v2660
        %v2830 = vunpack.c.l.b16 %v2661
        %v2831 = vunpack.c.h.b16 %v2661
        %v2832 = vunpack.c.l.b16 %v2662
        %v2833 = vunpack.c.h.b16 %v2662
        %v2834 = vunpack.c.l.b16 %v2663
        %v2835 = vunpack.c.h.b16 %v2663
        %v2836 = vunpack.c.l.b16 %v2664
        %v2837 = vunpack.c.h.b16 %v2664
        %v2838 = vunpack.c.l.b16 %v2665
        %v2839 = vunpack.c.h.b16 %v2665
        %v2840 = vunpack.c.l.b16 %v2666
        %v2841 = vunpack.c.h.b16 %v2666
        %v2842 = vunpack.c.l.b16 %v2667
        %v2843 = vunpack.c.h.b16 %v2667
        %v2844 = vunpack.c.l.b16 %v2668
        %v2845 = vunpack.c.h.b16 %v2668
        %v2846 = vunpack.c.l.b16 %v2669
        %v2847 = vunpack.c.h.b16 %v2669
        %v2848 = vunpack.c.l.b16 %v2670
        %v2849 = vunpack.c.h.b16 %v2670
        %v2850 = vunpack.c.l.b16 %v2671
        %v2851 = vunpack.c.h.b16 %v2671
        %v2852 = vpack.c.b16 %v2804, %v2788
        %v2853 = vpack.c.b16 %v2805, %v2789
        %v2854 = vpack.c.b16 %v2806, %v2790
        %v2855 = vpack.c.b16 %v2807, %v2791
        %v2856 = vpack.c.b16 %v2808, %v2792
        %v2857 = vpack.c.b16 %v2809, %v2793
        %v2858 = vpack.c.b16 %v2810, %v2794
        %v2859 = vpack.c.b16 %v2811, %v2795
        %v2860 = vpack.c.b16 %v2812, %v2796
        %v2861 = vpack.c.b16 %v2813, %v2797
        %v2862 = vpack.c.b16 %v2814, %v2798
        %v2863 = vpack.c.b16 %v2815, %v2799
        %v2864 = vpack.c.b16 %v2816, %v2800
        %v2865 = vpack.c.b16 %v2817, %v2801
        %v2866 = vpack.c.b16 %v2818, %v2802
        %v2867 = vpack.c.b16 %v2819, %v2803
        %v2868 = vpack.c.b16 %v2836, %v2820
        %v2869 = vpack.c.b16 %v2837, %v2821
        %v2870 = vpack.c.b16 %v2838, %v2822
        %v2871 = vpack.c.b16 %v2839, %v2823
        %v2872 = vpack.c.b16 %v2840, %v2824
        %v2873 = vpack.c.b16 %v2841, %v2825
        %v2874 = vpack.c.b16 %v2842, %v2826
        %v2875 = vpack.c.b16 %v2843, %v2827
        %v2876 = vpack.c.b16 %v2844, %v2828
        %v2877 = vpack.c.b16 %v2845, %v2829
        %v2878 = vpack.c.b16 %v2846, %v2830
        %v2879 = vpack.c.b16 %v2847, %v2831
        %v2880 = vpack.c.b16 %v2848, %v2832
        %v2881 = vpack.c.b16 %v2849, %v2833
        %v2882 = vpack.c.b16 %v2850, %v2834
        %v2883 = vpack.c.b16 %v2851, %v2835
        %v2917 = vsel %vm1415, %v2639, 0
        %2919 = vmatprep.subr.bf16.mxu0 0
        %2920 = vmatpush1.bf16.msra.mxu0 0
        %2921 = vmatprep.subr.bf16.mxu0 0
        %2922 = vmatpush1.bf16.msra.mxu0 0
        %2923 = vmatprep.subr.bf16.mxu0 0
        %2924 = vmatpush1.bf16.msra.mxu0 0
        %2925 = vmatprep.subr.bf16.mxu0 0
        %2926 = vmatpush1.bf16.msra.mxu0 0
        %2927 = vmatprep.subr.bf16.mxu0 0
        %2928 = vmatpush1.bf16.msra.mxu0 0
        %2929 = vmatprep.subr.bf16.mxu0 0
        %2930 = vmatpush1.bf16.msra.mxu0 0
        %2931 = vmatprep.subr.bf16.mxu0 %v2869
        %2932 = vmatpush1.bf16.msra.mxu0 %v2868
        %2933 = vmatprep.subr.bf16.mxu0 %v2853
        %2934 = vmatpush1.bf16.msra.mxu0 %v2852
        %2935 = vmatprep.subr.bf16.mxu0 0
        %2936 = vmatpush2.bf16.msra.mxu0 0
        %2937 = vmatprep.subr.bf16.mxu0 0
        %2938 = vmatpush2.bf16.msra.mxu0 0
        %2939 = vmatprep.subr.bf16.mxu0 0
        %2940 = vmatpush2.bf16.msra.mxu0 0
        %2941 = vmatprep.subr.bf16.mxu0 0
        %2942 = vmatpush2.bf16.msra.mxu0 0
        %2943 = vmatprep.subr.bf16.mxu0 0
        %2944 = vmatpush2.bf16.msra.mxu0 0
        %2945 = vmatprep.subr.bf16.mxu0 0
        %2946 = vmatpush2.bf16.msra.mxu0 0
        %2947 = vmatprep.subr.bf16.mxu0 0
        %2948 = vmatpush2.bf16.msra.mxu0 0
        %2949 = vmatprep.subr.bf16.mxu0 0
        %2950 = vmatpush2.bf16.msra.mxu0 0
        %2951 = vmatprep.mubr.bf16.mxu0 0
        %2952 = vmatmul.mubr.bf16.gmra.mxu0 %v2917
        %v2953 = vpop.f32.mrf.mxu0
        %v2954 = vadd.f32 %v2679, %v2953
        %v2955 = vpop.f32.mrf.mxu0
        %v2956 = vadd.f32 %v2683, %v2955
        %v2957 = vpop.f32.mrf.mxu0
        %v2958 = vadd.f32 %v2679, %v2957
        %v2959 = vpop.f32.mrf.mxu0
        %v2960 = vadd.f32 %v2683, %v2959
        %2961 = vdwg.mxu0
        %2962 = vmatprep.subr.bf16.mxu0 0
        %2963 = vmatpush1.bf16.msra.mxu0 0
        %2964 = vmatprep.subr.bf16.mxu0 0
        %2965 = vmatpush1.bf16.msra.mxu0 0
        %2966 = vmatprep.subr.bf16.mxu0 0
        %2967 = vmatpush1.bf16.msra.mxu0 0
        %2968 = vmatprep.subr.bf16.mxu0 0
        %2969 = vmatpush1.bf16.msra.mxu0 0
        %2970 = vmatprep.subr.bf16.mxu0 0
        %2971 = vmatpush1.bf16.msra.mxu0 0
        %2972 = vmatprep.subr.bf16.mxu0 0
        %2973 = vmatpush1.bf16.msra.mxu0 0
        %2974 = vmatprep.subr.bf16.mxu0 %v2871
        %2975 = vmatpush1.bf16.msra.mxu0 %v2870
        %2976 = vmatprep.subr.bf16.mxu0 %v2855
        %2977 = vmatpush1.bf16.msra.mxu0 %v2854
        %2978 = vmatprep.subr.bf16.mxu0 0
        %2979 = vmatpush2.bf16.msra.mxu0 0
        %2980 = vmatprep.subr.bf16.mxu0 0
        %2981 = vmatpush2.bf16.msra.mxu0 0
        %2982 = vmatprep.subr.bf16.mxu0 0
        %2983 = vmatpush2.bf16.msra.mxu0 0
        %2984 = vmatprep.subr.bf16.mxu0 0
        %2985 = vmatpush2.bf16.msra.mxu0 0
        %2986 = vmatprep.subr.bf16.mxu0 0
        %2987 = vmatpush2.bf16.msra.mxu0 0
        %2988 = vmatprep.subr.bf16.mxu0 0
        %2989 = vmatpush2.bf16.msra.mxu0 0
        %2990 = vmatprep.subr.bf16.mxu0 0
        %2991 = vmatpush2.bf16.msra.mxu0 0
        %2992 = vmatprep.subr.bf16.mxu0 0
        %2993 = vmatpush2.bf16.msra.mxu0 0
        %2994 = vmatprep.mubr.bf16.mxu0 0
        %2995 = vmatmul.mubr.bf16.gmra.mxu0 %v2917
        %v2996 = vpop.f32.mrf.mxu0
        %v2997 = vadd.f32 %v2687, %v2996
        %v2998 = vpop.f32.mrf.mxu0
        %v2999 = vadd.f32 %v2691, %v2998
        %v3000 = vpop.f32.mrf.mxu0
        %v3001 = vadd.f32 %v2687, %v3000
        %v3002 = vpop.f32.mrf.mxu0
        %v3003 = vadd.f32 %v2691, %v3002
        %3004 = vdwg.mxu0
        %3005 = vmatprep.subr.bf16.mxu0 0
        %3006 = vmatpush1.bf16.msra.mxu0 0
        %3007 = vmatprep.subr.bf16.mxu0 0
        %3008 = vmatpush1.bf16.msra.mxu0 0
        %3009 = vmatprep.subr.bf16.mxu0 0
        %3010 = vmatpush1.bf16.msra.mxu0 0
        %3011 = vmatprep.subr.bf16.mxu0 0
        %3012 = vmatpush1.bf16.msra.mxu0 0
        %3013 = vmatprep.subr.bf16.mxu0 0
        %3014 = vmatpush1.bf16.msra.mxu0 0
        %3015 = vmatprep.subr.bf16.mxu0 0
        %3016 = vmatpush1.bf16.msra.mxu0 0
        %3017 = vmatprep.subr.bf16.mxu0 %v2873
        %3018 = vmatpush1.bf16.msra.mxu0 %v2872
        %3019 = vmatprep.subr.bf16.mxu0 %v2857
        %3020 = vmatpush1.bf16.msra.mxu0 %v2856
        %3021 = vmatprep.subr.bf16.mxu0 0
        %3022 = vmatpush2.bf16.msra.mxu0 0
        %3023 = vmatprep.subr.bf16.mxu0 0
        %3024 = vmatpush2.bf16.msra.mxu0 0
        %3025 = vmatprep.subr.bf16.mxu0 0
        %3026 = vmatpush2.bf16.msra.mxu0 0
        %3027 = vmatprep.subr.bf16.mxu0 0
        %3028 = vmatpush2.bf16.msra.mxu0 0
        %3029 = vmatprep.subr.bf16.mxu0 0
        %3030 = vmatpush2.bf16.msra.mxu0 0
        %3031 = vmatprep.subr.bf16.mxu0 0
        %3032 = vmatpush2.bf16.msra.mxu0 0
        %3033 = vmatprep.subr.bf16.mxu0 0
        %3034 = vmatpush2.bf16.msra.mxu0 0
        %3035 = vmatprep.subr.bf16.mxu0 0
        %3036 = vmatpush2.bf16.msra.mxu0 0
        %3037 = vmatprep.mubr.bf16.mxu0 0
        %3038 = vmatmul.mubr.bf16.gmra.mxu0 %v2917
        %v3039 = vpop.f32.mrf.mxu0
        %v3040 = vadd.f32 %v2695, %v3039
        %v3041 = vpop.f32.mrf.mxu0
        %v3042 = vadd.f32 %v2699, %v3041
        %v3043 = vpop.f32.mrf.mxu0
        %v3044 = vadd.f32 %v2695, %v3043
        %v3045 = vpop.f32.mrf.mxu0
        %v3046 = vadd.f32 %v2699, %v3045
        %3047 = vdwg.mxu0
        %3048 = vmatprep.subr.bf16.mxu0 0
        %3049 = vmatpush1.bf16.msra.mxu0 0
        %3050 = vmatprep.subr.bf16.mxu0 0
        %3051 = vmatpush1.bf16.msra.mxu0 0
        %3052 = vmatprep.subr.bf16.mxu0 0
        %3053 = vmatpush1.bf16.msra.mxu0 0
        %3054 = vmatprep.subr.bf16.mxu0 0
        %3055 = vmatpush1.bf16.msra.mxu0 0
        %3056 = vmatprep.subr.bf16.mxu0 0
        %3057 = vmatpush1.bf16.msra.mxu0 0
        %3058 = vmatprep.subr.bf16.mxu0 0
        %3059 = vmatpush1.bf16.msra.mxu0 0
        %3060 = vmatprep.subr.bf16.mxu0 %v2875
        %3061 = vmatpush1.bf16.msra.mxu0 %v2874
        %3062 = vmatprep.subr.bf16.mxu0 %v2859
        %3063 = vmatpush1.bf16.msra.mxu0 %v2858
        %3064 = vmatprep.subr.bf16.mxu0 0
        %3065 = vmatpush2.bf16.msra.mxu0 0
        %3066 = vmatprep.subr.bf16.mxu0 0
        %3067 = vmatpush2.bf16.msra.mxu0 0
        %3068 = vmatprep.subr.bf16.mxu0 0
        %3069 = vmatpush2.bf16.msra.mxu0 0
        %3070 = vmatprep.subr.bf16.mxu0 0
        %3071 = vmatpush2.bf16.msra.mxu0 0
        %3072 = vmatprep.subr.bf16.mxu0 0
        %3073 = vmatpush2.bf16.msra.mxu0 0
        %3074 = vmatprep.subr.bf16.mxu0 0
        %3075 = vmatpush2.bf16.msra.mxu0 0
        %3076 = vmatprep.subr.bf16.mxu0 0
        %3077 = vmatpush2.bf16.msra.mxu0 0
        %3078 = vmatprep.subr.bf16.mxu0 0
        %3079 = vmatpush2.bf16.msra.mxu0 0
        %3080 = vmatprep.mubr.bf16.mxu0 0
        %3081 = vmatmul.mubr.bf16.gmra.mxu0 %v2917
        %v3082 = vpop.f32.mrf.mxu0
        %v3083 = vadd.f32 %v2703, %v3082
        %v3084 = vpop.f32.mrf.mxu0
        %v3085 = vadd.f32 %v2707, %v3084
        %v3086 = vpop.f32.mrf.mxu0
        %v3087 = vadd.f32 %v2703, %v3086
        %v3088 = vpop.f32.mrf.mxu0
        %v3089 = vadd.f32 %v2707, %v3088
        %3090 = vdwg.mxu0
        %3091 = vmatprep.subr.bf16.mxu0 0
        %3092 = vmatpush1.bf16.msra.mxu0 0
        %3093 = vmatprep.subr.bf16.mxu0 0
        %3094 = vmatpush1.bf16.msra.mxu0 0
        %3095 = vmatprep.subr.bf16.mxu0 0
        %3096 = vmatpush1.bf16.msra.mxu0 0
        %3097 = vmatprep.subr.bf16.mxu0 0
        %3098 = vmatpush1.bf16.msra.mxu0 0
        %3099 = vmatprep.subr.bf16.mxu0 0
        %3100 = vmatpush1.bf16.msra.mxu0 0
        %3101 = vmatprep.subr.bf16.mxu0 0
        %3102 = vmatpush1.bf16.msra.mxu0 0
        %3103 = vmatprep.subr.bf16.mxu0 %v2877
        %3104 = vmatpush1.bf16.msra.mxu0 %v2876
        %3105 = vmatprep.subr.bf16.mxu0 %v2861
        %3106 = vmatpush1.bf16.msra.mxu0 %v2860
        %3107 = vmatprep.subr.bf16.mxu0 0
        %3108 = vmatpush2.bf16.msra.mxu0 0
        %3109 = vmatprep.subr.bf16.mxu0 0
        %3110 = vmatpush2.bf16.msra.mxu0 0
        %3111 = vmatprep.subr.bf16.mxu0 0
        %3112 = vmatpush2.bf16.msra.mxu0 0
        %3113 = vmatprep.subr.bf16.mxu0 0
        %3114 = vmatpush2.bf16.msra.mxu0 0
        %3115 = vmatprep.subr.bf16.mxu0 0
        %3116 = vmatpush2.bf16.msra.mxu0 0
        %3117 = vmatprep.subr.bf16.mxu0 0
        %3118 = vmatpush2.bf16.msra.mxu0 0
        %3119 = vmatprep.subr.bf16.mxu0 0
        %3120 = vmatpush2.bf16.msra.mxu0 0
        %3121 = vmatprep.subr.bf16.mxu0 0
        %3122 = vmatpush2.bf16.msra.mxu0 0
        %3123 = vmatprep.mubr.bf16.mxu0 0
        %3124 = vmatmul.mubr.bf16.gmra.mxu0 %v2917
        %v3125 = vpop.f32.mrf.mxu0
        %v3126 = vadd.f32 %v2711, %v3125
        %v3127 = vpop.f32.mrf.mxu0
        %v3128 = vadd.f32 %v2715, %v3127
        %v3129 = vpop.f32.mrf.mxu0
        %v3130 = vadd.f32 %v2711, %v3129
        %v3131 = vpop.f32.mrf.mxu0
        %v3132 = vadd.f32 %v2715, %v3131
        %3133 = vdwg.mxu0
        %3134 = vmatprep.subr.bf16.mxu0 0
        %3135 = vmatpush1.bf16.msra.mxu0 0
        %3136 = vmatprep.subr.bf16.mxu0 0
        %3137 = vmatpush1.bf16.msra.mxu0 0
        %3138 = vmatprep.subr.bf16.mxu0 0
        %3139 = vmatpush1.bf16.msra.mxu0 0
        %3140 = vmatprep.subr.bf16.mxu0 0
        %3141 = vmatpush1.bf16.msra.mxu0 0
        %3142 = vmatprep.subr.bf16.mxu0 0
        %3143 = vmatpush1.bf16.msra.mxu0 0
        %3144 = vmatprep.subr.bf16.mxu0 0
        %3145 = vmatpush1.bf16.msra.mxu0 0
        %3146 = vmatprep.subr.bf16.mxu0 %v2879
        %3147 = vmatpush1.bf16.msra.mxu0 %v2878
        %3148 = vmatprep.subr.bf16.mxu0 %v2863
        %3149 = vmatpush1.bf16.msra.mxu0 %v2862
        %3150 = vmatprep.subr.bf16.mxu0 0
        %3151 = vmatpush2.bf16.msra.mxu0 0
        %3152 = vmatprep.subr.bf16.mxu0 0
        %3153 = vmatpush2.bf16.msra.mxu0 0
        %3154 = vmatprep.subr.bf16.mxu0 0
        %3155 = vmatpush2.bf16.msra.mxu0 0
        %3156 = vmatprep.subr.bf16.mxu0 0
        %3157 = vmatpush2.bf16.msra.mxu0 0
        %3158 = vmatprep.subr.bf16.mxu0 0
        %3159 = vmatpush2.bf16.msra.mxu0 0
        %3160 = vmatprep.subr.bf16.mxu0 0
        %3161 = vmatpush2.bf16.msra.mxu0 0
        %3162 = vmatprep.subr.bf16.mxu0 0
        %3163 = vmatpush2.bf16.msra.mxu0 0
        %3164 = vmatprep.subr.bf16.mxu0 0
        %3165 = vmatpush2.bf16.msra.mxu0 0
        %3166 = vmatprep.mubr.bf16.mxu0 0
        %3167 = vmatmul.mubr.bf16.gmra.mxu0 %v2917
        %v3168 = vpop.f32.mrf.mxu0
        %v3169 = vadd.f32 %v2719, %v3168
        %v3170 = vpop.f32.mrf.mxu0
        %v3171 = vadd.f32 %v2723, %v3170
        %v3172 = vpop.f32.mrf.mxu0
        %v3173 = vadd.f32 %v2719, %v3172
        %v3174 = vpop.f32.mrf.mxu0
        %v3175 = vadd.f32 %v2723, %v3174
        %3176 = vdwg.mxu0
        %3177 = vmatprep.subr.bf16.mxu0 0
        %3178 = vmatpush1.bf16.msra.mxu0 0
        %3179 = vmatprep.subr.bf16.mxu0 0
        %3180 = vmatpush1.bf16.msra.mxu0 0
        %3181 = vmatprep.subr.bf16.mxu0 0
        %3182 = vmatpush1.bf16.msra.mxu0 0
        %3183 = vmatprep.subr.bf16.mxu0 0
        %3184 = vmatpush1.bf16.msra.mxu0 0
        %3185 = vmatprep.subr.bf16.mxu0 0
        %3186 = vmatpush1.bf16.msra.mxu0 0
        %3187 = vmatprep.subr.bf16.mxu0 0
        %3188 = vmatpush1.bf16.msra.mxu0 0
        %3189 = vmatprep.subr.bf16.mxu0 %v2881
        %3190 = vmatpush1.bf16.msra.mxu0 %v2880
        %3191 = vmatprep.subr.bf16.mxu0 %v2865
        %3192 = vmatpush1.bf16.msra.mxu0 %v2864
        %3193 = vmatprep.subr.bf16.mxu0 0
        %3194 = vmatpush2.bf16.msra.mxu0 0
        %3195 = vmatprep.subr.bf16.mxu0 0
        %3196 = vmatpush2.bf16.msra.mxu0 0
        %3197 = vmatprep.subr.bf16.mxu0 0
        %3198 = vmatpush2.bf16.msra.mxu0 0
        %3199 = vmatprep.subr.bf16.mxu0 0
        %3200 = vmatpush2.bf16.msra.mxu0 0
        %3201 = vmatprep.subr.bf16.mxu0 0
        %3202 = vmatpush2.bf16.msra.mxu0 0
        %3203 = vmatprep.subr.bf16.mxu0 0
        %3204 = vmatpush2.bf16.msra.mxu0 0
        %3205 = vmatprep.subr.bf16.mxu0 0
        %3206 = vmatpush2.bf16.msra.mxu0 0
        %3207 = vmatprep.subr.bf16.mxu0 0
        %3208 = vmatpush2.bf16.msra.mxu0 0
        %3209 = vmatprep.mubr.bf16.mxu0 0
        %3210 = vmatmul.mubr.bf16.gmra.mxu0 %v2917
        %v3211 = vpop.f32.mrf.mxu0
        %v3212 = vadd.f32 %v2727, %v3211
        %v3213 = vpop.f32.mrf.mxu0
        %v3214 = vadd.f32 %v2731, %v3213
        %v3215 = vpop.f32.mrf.mxu0
        %v3216 = vadd.f32 %v2727, %v3215
        %v3217 = vpop.f32.mrf.mxu0
        %v3218 = vadd.f32 %v2731, %v3217
        %3219 = vdwg.mxu0
        %3220 = vmatprep.subr.bf16.mxu0 0
        %3221 = vmatpush1.bf16.msra.mxu0 0
        %3222 = vmatprep.subr.bf16.mxu0 0
        %3223 = vmatpush1.bf16.msra.mxu0 0
        %3224 = vmatprep.subr.bf16.mxu0 0
        %3225 = vmatpush1.bf16.msra.mxu0 0
        %3226 = vmatprep.subr.bf16.mxu0 0
        %3227 = vmatpush1.bf16.msra.mxu0 0
        %3228 = vmatprep.subr.bf16.mxu0 0
        %3229 = vmatpush1.bf16.msra.mxu0 0
        %3230 = vmatprep.subr.bf16.mxu0 0
        %3231 = vmatpush1.bf16.msra.mxu0 0
        %3232 = vmatprep.subr.bf16.mxu0 %v2883
        %3233 = vmatpush1.bf16.msra.mxu0 %v2882
        %3234 = vmatprep.subr.bf16.mxu0 %v2867
        %3235 = vmatpush1.bf16.msra.mxu0 %v2866
        %3236 = vmatprep.subr.bf16.mxu0 0
        %3237 = vmatpush2.bf16.msra.mxu0 0
        %3238 = vmatprep.subr.bf16.mxu0 0
        %3239 = vmatpush2.bf16.msra.mxu0 0
        %3240 = vmatprep.subr.bf16.mxu0 0
        %3241 = vmatpush2.bf16.msra.mxu0 0
        %3242 = vmatprep.subr.bf16.mxu0 0
        %3243 = vmatpush2.bf16.msra.mxu0 0
        %3244 = vmatprep.subr.bf16.mxu0 0
        %3245 = vmatpush2.bf16.msra.mxu0 0
        %3246 = vmatprep.subr.bf16.mxu0 0
        %3247 = vmatpush2.bf16.msra.mxu0 0
        %3248 = vmatprep.subr.bf16.mxu0 0
        %3249 = vmatpush2.bf16.msra.mxu0 0
        %3250 = vmatprep.subr.bf16.mxu0 0
        %3251 = vmatpush2.bf16.msra.mxu0 0
        %3252 = vmatprep.mubr.bf16.mxu0 0
        %3253 = vmatmul.mubr.bf16.gmra.mxu0 %v2917
        %v3254 = vpop.f32.mrf.mxu0
        %v3255 = vadd.f32 %v2735, %v3254
        %v3256 = vpop.f32.mrf.mxu0
        %v3257 = vadd.f32 %v2739, %v3256
        %v3258 = vpop.f32.mrf.mxu0
        %v3259 = vadd.f32 %v2735, %v3258
        %v3260 = vpop.f32.mrf.mxu0
        %v3261 = vadd.f32 %v2739, %v3260
        %3262 = vdwg.mxu0
        %v3263 = vmax.f32 %v2954, 0.0
        %v3264 = vmax.f32 %v2956, 0.0
        %v3265 = vmax.f32 %v2997, 0.0
        %v3266 = vmax.f32 %v2999, 0.0
        %v3267 = vmax.f32 %v3040, 0.0
        %v3268 = vmax.f32 %v3042, 0.0
        %v3269 = vmax.f32 %v3083, 0.0
        %v3270 = vmax.f32 %v3085, 0.0
        %v3271 = vmax.f32 %v3126, 0.0
        %v3272 = vmax.f32 %v3128, 0.0
        %v3273 = vmax.f32 %v3169, 0.0
        %v3274 = vmax.f32 %v3171, 0.0
        %v3275 = vmax.f32 %v3212, 0.0
        %v3276 = vmax.f32 %v3214, 0.0
        %v3277 = vmax.f32 %v3255, 0.0
        %v3278 = vmax.f32 %v3257, 0.0
        %v3279 = vmax.f32 %v2958, 0.0
        %v3280 = vmax.f32 %v2960, 0.0
        %v3281 = vmax.f32 %v3001, 0.0
        %v3282 = vmax.f32 %v3003, 0.0
        %v3283 = vmax.f32 %v3044, 0.0
        %v3284 = vmax.f32 %v3046, 0.0
        %v3285 = vmax.f32 %v3087, 0.0
        %v3286 = vmax.f32 %v3089, 0.0
        %v3287 = vmax.f32 %v3130, 0.0
        %v3288 = vmax.f32 %v3132, 0.0
        %v3289 = vmax.f32 %v3173, 0.0
        %v3290 = vmax.f32 %v3175, 0.0
        %v3291 = vmax.f32 %v3216, 0.0
        %v3292 = vmax.f32 %v3218, 0.0
        %v3293 = vmax.f32 %v3259, 0.0
        %v3294 = vmax.f32 %v3261, 0.0
        %v3295 = vpack.c.bf16 %v3279, %v3263
        %v3296 = vpack.c.bf16 %v3280, %v3264
        %v3297 = vpack.c.bf16 %v3281, %v3265
        %v3298 = vpack.c.bf16 %v3282, %v3266
        %v3299 = vpack.c.bf16 %v3283, %v3267
        %v3300 = vpack.c.bf16 %v3284, %v3268
        %v3301 = vpack.c.bf16 %v3285, %v3269
        %v3302 = vpack.c.bf16 %v3286, %v3270
        %v3303 = vpack.c.bf16 %v3287, %v3271
        %v3304 = vpack.c.bf16 %v3288, %v3272
        %v3305 = vpack.c.bf16 %v3289, %v3273
        %v3306 = vpack.c.bf16 %v3290, %v3274
        %v3307 = vpack.c.bf16 %v3291, %v3275
        %v3308 = vpack.c.bf16 %v3292, %v3276
        %v3309 = vpack.c.bf16 %v3293, %v3277
        %v3310 = vpack.c.bf16 %v3294, %v3278
        %v3311 = vld [vmem:[%s1231] sm:$0xf]
        %v3312 = vld [vmem:[%s1231 + $0x4] sm:$0xf]
        %v3313 = vld [vmem:[%s1231 + $0x8] sm:$0xf]
        %v3314 = vld [vmem:[%s1231 + $0xc] sm:$0xf]
        %v3315 = vld [vmem:[%s1231 + $0x10] sm:$0xf]
        %v3316 = vld [vmem:[%s1231 + $0x14] sm:$0xf]
        %v3317 = vld [vmem:[%s1231 + $0x18] sm:$0xf]
        %v3318 = vld [vmem:[%s1231 + $0x1c] sm:$0xf]
        %v3319 = vld [vmem:[%s1231 + $0x20] sm:$0xf]
        %v3320 = vld [vmem:[%s1231 + $0x24] sm:$0xf]
        %v3321 = vld [vmem:[%s1231 + $0x28] sm:$0xf]
        %v3322 = vld [vmem:[%s1231 + $0x2c] sm:$0xf]
        %v3323 = vld [vmem:[%s1231 + $0x30] sm:$0xf]
        %v3324 = vld [vmem:[%s1231 + $0x34] sm:$0xf]
        %v3325 = vld [vmem:[%s1231 + $0x38] sm:$0xf]
        %v3326 = vld [vmem:[%s1231 + $0x3c] sm:$0xf]
        %v3327 = vld [vmem:[%s1231 + $0x40] sm:$0xf]
        %v3328 = vld [vmem:[%s1231 + $0x44] sm:$0xf]
        %v3329 = vld [vmem:[%s1231 + $0x48] sm:$0xf]
        %v3330 = vld [vmem:[%s1231 + $0x4c] sm:$0xf]
        %v3331 = vld [vmem:[%s1231 + $0x50] sm:$0xf]
        %v3332 = vld [vmem:[%s1231 + $0x54] sm:$0xf]
        %v3333 = vld [vmem:[%s1231 + $0x58] sm:$0xf]
        %v3334 = vld [vmem:[%s1231 + $0x5c] sm:$0xf]
        %v3335 = vld [vmem:[%s1231 + $0x60] sm:$0xf]
        %v3336 = vld [vmem:[%s1231 + $0x64] sm:$0xf]
        %v3337 = vld [vmem:[%s1231 + $0x68] sm:$0xf]
        %v3338 = vld [vmem:[%s1231 + $0x6c] sm:$0xf]
        %v3339 = vld [vmem:[%s1231 + $0x70] sm:$0xf]
        %v3340 = vld [vmem:[%s1231 + $0x74] sm:$0xf]
        %v3341 = vld [vmem:[%s1231 + $0x78] sm:$0xf]
        %v3342 = vld [vmem:[%s1231 + $0x7c] sm:$0xf]
        %v3343 = vld [vmem:[%s1231 + $0x80] sm:$0xf]
        %v3344 = vld [vmem:[%s1231 + $0x84] sm:$0xf]
        %v3345 = vld [vmem:[%s1231 + $0x88] sm:$0xf]
        %v3346 = vld [vmem:[%s1231 + $0x8c] sm:$0xf]
        %v3347 = vld [vmem:[%s1231 + $0x90] sm:$0xf]
        %v3348 = vld [vmem:[%s1231 + $0x94] sm:$0xf]
        %v3349 = vld [vmem:[%s1231 + $0x98] sm:$0xf]
        %v3350 = vld [vmem:[%s1231 + $0x9c] sm:$0xf]
        %v3351 = vld [vmem:[%s1231 + $0xa0] sm:$0xf]
        %v3352 = vld [vmem:[%s1231 + $0xa4] sm:$0xf]
        %v3353 = vld [vmem:[%s1231 + $0xa8] sm:$0xf]
        %v3354 = vld [vmem:[%s1231 + $0xac] sm:$0xf]
        %v3355 = vld [vmem:[%s1231 + $0xb0] sm:$0xf]
        %v3356 = vld [vmem:[%s1231 + $0xb4] sm:$0xf]
        %v3357 = vld [vmem:[%s1231 + $0xb8] sm:$0xf]
        %v3358 = vld [vmem:[%s1231 + $0xbc] sm:$0xf]
        %v3359 = vld [vmem:[%s1231 + $0xc0] sm:$0xf]
        %v3360 = vld [vmem:[%s1231 + $0xc4] sm:$0xf]
        %v3361 = vld [vmem:[%s1231 + $0xc8] sm:$0xf]
        %v3362 = vld [vmem:[%s1231 + $0xcc] sm:$0xf]
        %v3363 = vld [vmem:[%s1231 + $0xd0] sm:$0xf]
        %v3364 = vld [vmem:[%s1231 + $0xd4] sm:$0xf]
        %v3365 = vld [vmem:[%s1231 + $0xd8] sm:$0xf]
        %v3366 = vld [vmem:[%s1231 + $0xdc] sm:$0xf]
        %v3367 = vld [vmem:[%s1231 + $0xe0] sm:$0xf]
        %v3368 = vld [vmem:[%s1231 + $0xe4] sm:$0xf]
        %v3369 = vld [vmem:[%s1231 + $0xe8] sm:$0xf]
        %v3370 = vld [vmem:[%s1231 + $0xec] sm:$0xf]
        %v3371 = vld [vmem:[%s1231 + $0xf0] sm:$0xf]
        %v3372 = vld [vmem:[%s1231 + $0xf4] sm:$0xf]
        %v3373 = vld [vmem:[%s1231 + $0xf8] sm:$0xf]
        %v3374 = vld [vmem:[%s1231 + $0xfc] sm:$0xf]
        %v3375 = vld [vmem:[%s1231 + $0x100] sm:$0xf]
        %v3376 = vld [vmem:[%s1231 + $0x104] sm:$0xf]
        %v3377 = vld [vmem:[%s1231 + $0x108] sm:$0xf]
        %v3378 = vld [vmem:[%s1231 + $0x10c] sm:$0xf]
        %v3379 = vld [vmem:[%s1231 + $0x110] sm:$0xf]
        %v3380 = vld [vmem:[%s1231 + $0x114] sm:$0xf]
        %v3381 = vld [vmem:[%s1231 + $0x118] sm:$0xf]
        %v3382 = vld [vmem:[%s1231 + $0x11c] sm:$0xf]
        %v3383 = vld [vmem:[%s1231 + $0x120] sm:$0xf]
        %v3384 = vld [vmem:[%s1231 + $0x124] sm:$0xf]
        %v3385 = vld [vmem:[%s1231 + $0x128] sm:$0xf]
        %v3386 = vld [vmem:[%s1231 + $0x12c] sm:$0xf]
        %v3387 = vld [vmem:[%s1231 + $0x130] sm:$0xf]
        %v3388 = vld [vmem:[%s1231 + $0x134] sm:$0xf]
        %v3389 = vld [vmem:[%s1231 + $0x138] sm:$0xf]
        %v3390 = vld [vmem:[%s1231 + $0x13c] sm:$0xf]
        %v3391 = vld [vmem:[%s1231 + $0x140] sm:$0xf]
        %v3392 = vld [vmem:[%s1231 + $0x144] sm:$0xf]
        %v3393 = vld [vmem:[%s1231 + $0x148] sm:$0xf]
        %v3394 = vld [vmem:[%s1231 + $0x14c] sm:$0xf]
        %v3395 = vld [vmem:[%s1231 + $0x150] sm:$0xf]
        %v3396 = vld [vmem:[%s1231 + $0x154] sm:$0xf]
        %v3397 = vld [vmem:[%s1231 + $0x158] sm:$0xf]
        %v3398 = vld [vmem:[%s1231 + $0x15c] sm:$0xf]
        %v3399 = vld [vmem:[%s1231 + $0x160] sm:$0xf]
        %v3400 = vld [vmem:[%s1231 + $0x164] sm:$0xf]
        %v3401 = vld [vmem:[%s1231 + $0x168] sm:$0xf]
        %v3402 = vld [vmem:[%s1231 + $0x16c] sm:$0xf]
        %v3403 = vld [vmem:[%s1231 + $0x170] sm:$0xf]
        %v3404 = vld [vmem:[%s1231 + $0x174] sm:$0xf]
        %v3405 = vld [vmem:[%s1231 + $0x178] sm:$0xf]
        %v3406 = vld [vmem:[%s1231 + $0x17c] sm:$0xf]
        %v3407 = vld [vmem:[%s1231 + $0x180] sm:$0xf]
        %v3408 = vld [vmem:[%s1231 + $0x184] sm:$0xf]
        %v3409 = vld [vmem:[%s1231 + $0x188] sm:$0xf]
        %v3410 = vld [vmem:[%s1231 + $0x18c] sm:$0xf]
        %v3411 = vld [vmem:[%s1231 + $0x190] sm:$0xf]
        %v3412 = vld [vmem:[%s1231 + $0x194] sm:$0xf]
        %v3413 = vld [vmem:[%s1231 + $0x198] sm:$0xf]
        %v3414 = vld [vmem:[%s1231 + $0x19c] sm:$0xf]
        %v3415 = vld [vmem:[%s1231 + $0x1a0] sm:$0xf]
        %v3416 = vld [vmem:[%s1231 + $0x1a4] sm:$0xf]
        %v3417 = vld [vmem:[%s1231 + $0x1a8] sm:$0xf]
        %v3418 = vld [vmem:[%s1231 + $0x1ac] sm:$0xf]
        %v3419 = vld [vmem:[%s1231 + $0x1b0] sm:$0xf]
        %v3420 = vld [vmem:[%s1231 + $0x1b4] sm:$0xf]
        %v3421 = vld [vmem:[%s1231 + $0x1b8] sm:$0xf]
        %v3422 = vld [vmem:[%s1231 + $0x1bc] sm:$0xf]
        %v3423 = vld [vmem:[%s1231 + $0x1c0] sm:$0xf]
        %v3424 = vld [vmem:[%s1231 + $0x1c4] sm:$0xf]
        %v3425 = vld [vmem:[%s1231 + $0x1c8] sm:$0xf]
        %v3426 = vld [vmem:[%s1231 + $0x1cc] sm:$0xf]
        %v3427 = vld [vmem:[%s1231 + $0x1d0] sm:$0xf]
        %v3428 = vld [vmem:[%s1231 + $0x1d4] sm:$0xf]
        %v3429 = vld [vmem:[%s1231 + $0x1d8] sm:$0xf]
        %v3430 = vld [vmem:[%s1231 + $0x1dc] sm:$0xf]
        %v3431 = vld [vmem:[%s1231 + $0x1e0] sm:$0xf]
        %v3432 = vld [vmem:[%s1231 + $0x1e4] sm:$0xf]
        %v3433 = vld [vmem:[%s1231 + $0x1e8] sm:$0xf]
        %v3434 = vld [vmem:[%s1231 + $0x1ec] sm:$0xf]
        %v3435 = vld [vmem:[%s1231 + $0x1f0] sm:$0xf]
        %v3436 = vld [vmem:[%s1231 + $0x1f4] sm:$0xf]
        %v3437 = vld [vmem:[%s1231 + $0x1f8] sm:$0xf]
        %v3438 = vld [vmem:[%s1231 + $0x1fc] sm:$0xf]
        %v3439 = vld [vmem:[%s1231 + $0x200] sm:$0xf]
        %v3440 = vld [vmem:[%s1231 + $0x204] sm:$0xf]
        %v3441 = vld [vmem:[%s1231 + $0x208] sm:$0xf]
        %v3442 = vld [vmem:[%s1231 + $0x20c] sm:$0xf]
        %v3443 = vld [vmem:[%s1231 + $0x210] sm:$0xf]
        %v3444 = vld [vmem:[%s1231 + $0x214] sm:$0xf]
        %v3445 = vld [vmem:[%s1231 + $0x218] sm:$0xf]
        %v3446 = vld [vmem:[%s1231 + $0x21c] sm:$0xf]
        %v3447 = vld [vmem:[%s1231 + $0x220] sm:$0xf]
        %v3448 = vld [vmem:[%s1231 + $0x224] sm:$0xf]
        %v3449 = vld [vmem:[%s1231 + $0x228] sm:$0xf]
        %v3450 = vld [vmem:[%s1231 + $0x22c] sm:$0xf]
        %v3451 = vld [vmem:[%s1231 + $0x230] sm:$0xf]
        %v3452 = vld [vmem:[%s1231 + $0x234] sm:$0xf]
        %v3453 = vld [vmem:[%s1231 + $0x238] sm:$0xf]
        %v3454 = vld [vmem:[%s1231 + $0x23c] sm:$0xf]
        %v3455 = vld [vmem:[%s1231 + $0x240] sm:$0xf]
        %v3456 = vld [vmem:[%s1231 + $0x244] sm:$0xf]
        %v3457 = vld [vmem:[%s1231 + $0x248] sm:$0xf]
        %v3458 = vld [vmem:[%s1231 + $0x24c] sm:$0xf]
        %v3459 = vld [vmem:[%s1231 + $0x250] sm:$0xf]
        %v3460 = vld [vmem:[%s1231 + $0x254] sm:$0xf]
        %v3461 = vld [vmem:[%s1231 + $0x258] sm:$0xf]
        %v3462 = vld [vmem:[%s1231 + $0x25c] sm:$0xf]
        %v3463 = vld [vmem:[%s1231 + $0x260] sm:$0xf]
        %v3464 = vld [vmem:[%s1231 + $0x264] sm:$0xf]
        %v3465 = vld [vmem:[%s1231 + $0x268] sm:$0xf]
        %v3466 = vld [vmem:[%s1231 + $0x26c] sm:$0xf]
        %v3467 = vld [vmem:[%s1231 + $0x270] sm:$0xf]
        %v3468 = vld [vmem:[%s1231 + $0x274] sm:$0xf]
        %v3469 = vld [vmem:[%s1231 + $0x278] sm:$0xf]
        %v3470 = vld [vmem:[%s1231 + $0x27c] sm:$0xf]
        %v3471 = vld [vmem:[%s1231 + $0x280] sm:$0xf]
        %v3472 = vld [vmem:[%s1231 + $0x284] sm:$0xf]
        %v3473 = vld [vmem:[%s1231 + $0x288] sm:$0xf]
        %v3474 = vld [vmem:[%s1231 + $0x28c] sm:$0xf]
        %v3475 = vld [vmem:[%s1231 + $0x290] sm:$0xf]
        %v3476 = vld [vmem:[%s1231 + $0x294] sm:$0xf]
        %v3477 = vld [vmem:[%s1231 + $0x298] sm:$0xf]
        %v3478 = vld [vmem:[%s1231 + $0x29c] sm:$0xf]
        %v3479 = vld [vmem:[%s1231 + $0x2a0] sm:$0xf]
        %v3480 = vld [vmem:[%s1231 + $0x2a4] sm:$0xf]
        %v3481 = vld [vmem:[%s1231 + $0x2a8] sm:$0xf]
        %v3482 = vld [vmem:[%s1231 + $0x2ac] sm:$0xf]
        %v3483 = vld [vmem:[%s1231 + $0x2b0] sm:$0xf]
        %v3484 = vld [vmem:[%s1231 + $0x2b4] sm:$0xf]
        %v3485 = vld [vmem:[%s1231 + $0x2b8] sm:$0xf]
        %v3486 = vld [vmem:[%s1231 + $0x2bc] sm:$0xf]
        %v3487 = vld [vmem:[%s1231 + $0x2c0] sm:$0xf]
        %v3488 = vld [vmem:[%s1231 + $0x2c4] sm:$0xf]
        %v3489 = vld [vmem:[%s1231 + $0x2c8] sm:$0xf]
        %v3490 = vld [vmem:[%s1231 + $0x2cc] sm:$0xf]
        %v3491 = vld [vmem:[%s1231 + $0x2d0] sm:$0xf]
        %v3492 = vld [vmem:[%s1231 + $0x2d4] sm:$0xf]
        %v3493 = vld [vmem:[%s1231 + $0x2d8] sm:$0xf]
        %v3494 = vld [vmem:[%s1231 + $0x2dc] sm:$0xf]
        %v3495 = vld [vmem:[%s1231 + $0x2e0] sm:$0xf]
        %v3496 = vld [vmem:[%s1231 + $0x2e4] sm:$0xf]
        %v3497 = vld [vmem:[%s1231 + $0x2e8] sm:$0xf]
        %v3498 = vld [vmem:[%s1231 + $0x2ec] sm:$0xf]
        %v3499 = vld [vmem:[%s1231 + $0x2f0] sm:$0xf]
        %v3500 = vld [vmem:[%s1231 + $0x2f4] sm:$0xf]
        %v3501 = vld [vmem:[%s1231 + $0x2f8] sm:$0xf]
        %v3502 = vld [vmem:[%s1231 + $0x2fc] sm:$0xf]
        %v3503 = vld [vmem:[%s1231 + $0x300] sm:$0xf]
        %v3504 = vld [vmem:[%s1231 + $0x304] sm:$0xf]
        %v3505 = vld [vmem:[%s1231 + $0x308] sm:$0xf]
        %v3506 = vld [vmem:[%s1231 + $0x30c] sm:$0xf]
        %v3507 = vld [vmem:[%s1231 + $0x310] sm:$0xf]
        %v3508 = vld [vmem:[%s1231 + $0x314] sm:$0xf]
        %v3509 = vld [vmem:[%s1231 + $0x318] sm:$0xf]
        %v3510 = vld [vmem:[%s1231 + $0x31c] sm:$0xf]
        %v3511 = vld [vmem:[%s1231 + $0x320] sm:$0xf]
        %v3512 = vld [vmem:[%s1231 + $0x324] sm:$0xf]
        %v3513 = vld [vmem:[%s1231 + $0x328] sm:$0xf]
        %v3514 = vld [vmem:[%s1231 + $0x32c] sm:$0xf]
        %v3515 = vld [vmem:[%s1231 + $0x330] sm:$0xf]
        %v3516 = vld [vmem:[%s1231 + $0x334] sm:$0xf]
        %v3517 = vld [vmem:[%s1231 + $0x338] sm:$0xf]
        %v3518 = vld [vmem:[%s1231 + $0x33c] sm:$0xf]
        %v3519 = vld [vmem:[%s1231 + $0x340] sm:$0xf]
        %v3520 = vld [vmem:[%s1231 + $0x344] sm:$0xf]
        %v3521 = vld [vmem:[%s1231 + $0x348] sm:$0xf]
        %v3522 = vld [vmem:[%s1231 + $0x34c] sm:$0xf]
        %v3523 = vld [vmem:[%s1231 + $0x350] sm:$0xf]
        %v3524 = vld [vmem:[%s1231 + $0x354] sm:$0xf]
        %v3525 = vld [vmem:[%s1231 + $0x358] sm:$0xf]
        %v3526 = vld [vmem:[%s1231 + $0x35c] sm:$0xf]
        %v3527 = vld [vmem:[%s1231 + $0x360] sm:$0xf]
        %v3528 = vld [vmem:[%s1231 + $0x364] sm:$0xf]
        %v3529 = vld [vmem:[%s1231 + $0x368] sm:$0xf]
        %v3530 = vld [vmem:[%s1231 + $0x36c] sm:$0xf]
        %v3531 = vld [vmem:[%s1231 + $0x370] sm:$0xf]
        %v3532 = vld [vmem:[%s1231 + $0x374] sm:$0xf]
        %v3533 = vld [vmem:[%s1231 + $0x378] sm:$0xf]
        %v3534 = vld [vmem:[%s1231 + $0x37c] sm:$0xf]
        %v3535 = vld [vmem:[%s1231 + $0x380] sm:$0xf]
        %v3536 = vld [vmem:[%s1231 + $0x384] sm:$0xf]
        %v3537 = vld [vmem:[%s1231 + $0x388] sm:$0xf]
        %v3538 = vld [vmem:[%s1231 + $0x38c] sm:$0xf]
        %v3539 = vld [vmem:[%s1231 + $0x390] sm:$0xf]
        %v3540 = vld [vmem:[%s1231 + $0x394] sm:$0xf]
        %v3541 = vld [vmem:[%s1231 + $0x398] sm:$0xf]
        %v3542 = vld [vmem:[%s1231 + $0x39c] sm:$0xf]
        %v3543 = vld [vmem:[%s1231 + $0x3a0] sm:$0xf]
        %v3544 = vld [vmem:[%s1231 + $0x3a4] sm:$0xf]
        %v3545 = vld [vmem:[%s1231 + $0x3a8] sm:$0xf]
        %v3546 = vld [vmem:[%s1231 + $0x3ac] sm:$0xf]
        %v3547 = vld [vmem:[%s1231 + $0x3b0] sm:$0xf]
        %v3548 = vld [vmem:[%s1231 + $0x3b4] sm:$0xf]
        %v3549 = vld [vmem:[%s1231 + $0x3b8] sm:$0xf]
        %v3550 = vld [vmem:[%s1231 + $0x3bc] sm:$0xf]
        %v3551 = vld [vmem:[%s1231 + $0x3c0] sm:$0xf]
        %v3552 = vld [vmem:[%s1231 + $0x3c4] sm:$0xf]
        %v3553 = vld [vmem:[%s1231 + $0x3c8] sm:$0xf]
        %v3554 = vld [vmem:[%s1231 + $0x3cc] sm:$0xf]
        %v3555 = vld [vmem:[%s1231 + $0x3d0] sm:$0xf]
        %v3556 = vld [vmem:[%s1231 + $0x3d4] sm:$0xf]
        %v3557 = vld [vmem:[%s1231 + $0x3d8] sm:$0xf]
        %v3558 = vld [vmem:[%s1231 + $0x3dc] sm:$0xf]
        %v3559 = vld [vmem:[%s1231 + $0x3e0] sm:$0xf]
        %v3560 = vld [vmem:[%s1231 + $0x3e4] sm:$0xf]
        %v3561 = vld [vmem:[%s1231 + $0x3e8] sm:$0xf]
        %v3562 = vld [vmem:[%s1231 + $0x3ec] sm:$0xf]
        %v3563 = vld [vmem:[%s1231 + $0x3f0] sm:$0xf]
        %v3564 = vld [vmem:[%s1231 + $0x3f4] sm:$0xf]
        %v3565 = vld [vmem:[%s1231 + $0x3f8] sm:$0xf]
        %v3566 = vld [vmem:[%s1231 + $0x3fc] sm:$0xf]
        %v3567 = vld [vmem:[%s1234] sm:$0x1]
        %v3569 = vlaneseq
        %v3570 = vshrl.u32 %v3569, 7
        %v3571 = vsub.s32 0, %v3570
        %v3572 = vrot.slane %v3567, %v3571
        %v3830 = vunpack.c.l.b16 %v3311
        %v3831 = vunpack.c.l.b16 %v3312
        %v3832 = vunpack.c.l.b16 %v3313
        %v3833 = vunpack.c.l.b16 %v3314
        %v3834 = vunpack.c.l.b16 %v3315
        %v3835 = vunpack.c.l.b16 %v3316
        %v3836 = vunpack.c.l.b16 %v3317
        %v3837 = vunpack.c.l.b16 %v3318
        %v3838 = vunpack.c.l.b16 %v3319
        %v3839 = vunpack.c.l.b16 %v3320
        %v3840 = vunpack.c.l.b16 %v3321
        %v3841 = vunpack.c.l.b16 %v3322
        %v3842 = vunpack.c.l.b16 %v3323
        %v3843 = vunpack.c.l.b16 %v3324
        %v3844 = vunpack.c.l.b16 %v3325
        %v3845 = vunpack.c.l.b16 %v3326
        %v3846 = vunpack.c.l.b16 %v3327
        %v3847 = vunpack.c.l.b16 %v3328
        %v3848 = vunpack.c.l.b16 %v3329
        %v3849 = vunpack.c.l.b16 %v3330
        %v3850 = vunpack.c.l.b16 %v3331
        %v3851 = vunpack.c.l.b16 %v3332
        %v3852 = vunpack.c.l.b16 %v3333
        %v3853 = vunpack.c.l.b16 %v3334
        %v3854 = vunpack.c.l.b16 %v3335
        %v3855 = vunpack.c.l.b16 %v3336
        %v3856 = vunpack.c.l.b16 %v3337
        %v3857 = vunpack.c.l.b16 %v3338
        %v3858 = vunpack.c.l.b16 %v3339
        %v3859 = vunpack.c.l.b16 %v3340
        %v3860 = vunpack.c.l.b16 %v3341
        %v3861 = vunpack.c.l.b16 %v3342
        %v3862 = vunpack.c.l.b16 %v3343
        %v3863 = vunpack.c.l.b16 %v3344
        %v3864 = vunpack.c.l.b16 %v3345
        %v3865 = vunpack.c.l.b16 %v3346
        %v3866 = vunpack.c.l.b16 %v3347
        %v3867 = vunpack.c.l.b16 %v3348
        %v3868 = vunpack.c.l.b16 %v3349
        %v3869 = vunpack.c.l.b16 %v3350
        %v3870 = vunpack.c.l.b16 %v3351
        %v3871 = vunpack.c.l.b16 %v3352
        %v3872 = vunpack.c.l.b16 %v3353
        %v3873 = vunpack.c.l.b16 %v3354
        %v3874 = vunpack.c.l.b16 %v3355
        %v3875 = vunpack.c.l.b16 %v3356
        %v3876 = vunpack.c.l.b16 %v3357
        %v3877 = vunpack.c.l.b16 %v3358
        %v3878 = vunpack.c.l.b16 %v3359
        %v3879 = vunpack.c.l.b16 %v3360
        %v3880 = vunpack.c.l.b16 %v3361
        %v3881 = vunpack.c.l.b16 %v3362
        %v3882 = vunpack.c.l.b16 %v3363
        %v3883 = vunpack.c.l.b16 %v3364
        %v3884 = vunpack.c.l.b16 %v3365
        %v3885 = vunpack.c.l.b16 %v3366
        %v3886 = vunpack.c.l.b16 %v3367
        %v3887 = vunpack.c.l.b16 %v3368
        %v3888 = vunpack.c.l.b16 %v3369
        %v3889 = vunpack.c.l.b16 %v3370
        %v3890 = vunpack.c.l.b16 %v3371
        %v3891 = vunpack.c.l.b16 %v3372
        %v3892 = vunpack.c.l.b16 %v3373
        %v3893 = vunpack.c.l.b16 %v3374
        %v3894 = vunpack.c.l.b16 %v3375
        %v3895 = vunpack.c.l.b16 %v3376
        %v3896 = vunpack.c.l.b16 %v3377
        %v3897 = vunpack.c.l.b16 %v3378
        %v3898 = vunpack.c.l.b16 %v3379
        %v3899 = vunpack.c.l.b16 %v3380
        %v3900 = vunpack.c.l.b16 %v3381
        %v3901 = vunpack.c.l.b16 %v3382
        %v3902 = vunpack.c.l.b16 %v3383
        %v3903 = vunpack.c.l.b16 %v3384
        %v3904 = vunpack.c.l.b16 %v3385
        %v3905 = vunpack.c.l.b16 %v3386
        %v3906 = vunpack.c.l.b16 %v3387
        %v3907 = vunpack.c.l.b16 %v3388
        %v3908 = vunpack.c.l.b16 %v3389
        %v3909 = vunpack.c.l.b16 %v3390
        %v3910 = vunpack.c.l.b16 %v3391
        %v3911 = vunpack.c.l.b16 %v3392
        %v3912 = vunpack.c.l.b16 %v3393
        %v3913 = vunpack.c.l.b16 %v3394
        %v3914 = vunpack.c.l.b16 %v3395
        %v3915 = vunpack.c.l.b16 %v3396
        %v3916 = vunpack.c.l.b16 %v3397
        %v3917 = vunpack.c.l.b16 %v3398
        %v3918 = vunpack.c.l.b16 %v3399
        %v3919 = vunpack.c.l.b16 %v3400
        %v3920 = vunpack.c.l.b16 %v3401
        %v3921 = vunpack.c.l.b16 %v3402
        %v3922 = vunpack.c.l.b16 %v3403
        %v3923 = vunpack.c.l.b16 %v3404
        %v3924 = vunpack.c.l.b16 %v3405
        %v3925 = vunpack.c.l.b16 %v3406
        %v3926 = vunpack.c.l.b16 %v3407
        %v3927 = vunpack.c.l.b16 %v3408
        %v3928 = vunpack.c.l.b16 %v3409
        %v3929 = vunpack.c.l.b16 %v3410
        %v3930 = vunpack.c.l.b16 %v3411
        %v3931 = vunpack.c.l.b16 %v3412
        %v3932 = vunpack.c.l.b16 %v3413
        %v3933 = vunpack.c.l.b16 %v3414
        %v3934 = vunpack.c.l.b16 %v3415
        %v3935 = vunpack.c.l.b16 %v3416
        %v3936 = vunpack.c.l.b16 %v3417
        %v3937 = vunpack.c.l.b16 %v3418
        %v3938 = vunpack.c.l.b16 %v3419
        %v3939 = vunpack.c.l.b16 %v3420
        %v3940 = vunpack.c.l.b16 %v3421
        %v3941 = vunpack.c.l.b16 %v3422
        %v3942 = vunpack.c.l.b16 %v3423
        %v3943 = vunpack.c.l.b16 %v3424
        %v3944 = vunpack.c.l.b16 %v3425
        %v3945 = vunpack.c.l.b16 %v3426
        %v3946 = vunpack.c.l.b16 %v3427
        %v3947 = vunpack.c.l.b16 %v3428
        %v3948 = vunpack.c.l.b16 %v3429
        %v3949 = vunpack.c.l.b16 %v3430
        %v3950 = vunpack.c.l.b16 %v3431
        %v3951 = vunpack.c.l.b16 %v3432
        %v3952 = vunpack.c.l.b16 %v3433
        %v3953 = vunpack.c.l.b16 %v3434
        %v3954 = vunpack.c.l.b16 %v3435
        %v3955 = vunpack.c.l.b16 %v3436
        %v3956 = vunpack.c.l.b16 %v3437
        %v3957 = vunpack.c.l.b16 %v3438
        %v3958 = vunpack.c.l.b16 %v3439
        %v3959 = vunpack.c.l.b16 %v3440
        %v3960 = vunpack.c.l.b16 %v3441
        %v3961 = vunpack.c.l.b16 %v3442
        %v3962 = vunpack.c.l.b16 %v3443
        %v3963 = vunpack.c.l.b16 %v3444
        %v3964 = vunpack.c.l.b16 %v3445
        %v3965 = vunpack.c.l.b16 %v3446
        %v3966 = vunpack.c.l.b16 %v3447
        %v3967 = vunpack.c.l.b16 %v3448
        %v3968 = vunpack.c.l.b16 %v3449
        %v3969 = vunpack.c.l.b16 %v3450
        %v3970 = vunpack.c.l.b16 %v3451
        %v3971 = vunpack.c.l.b16 %v3452
        %v3972 = vunpack.c.l.b16 %v3453
        %v3973 = vunpack.c.l.b16 %v3454
        %v3974 = vunpack.c.l.b16 %v3455
        %v3975 = vunpack.c.l.b16 %v3456
        %v3976 = vunpack.c.l.b16 %v3457
        %v3977 = vunpack.c.l.b16 %v3458
        %v3978 = vunpack.c.l.b16 %v3459
        %v3979 = vunpack.c.l.b16 %v3460
        %v3980 = vunpack.c.l.b16 %v3461
        %v3981 = vunpack.c.l.b16 %v3462
        %v3982 = vunpack.c.l.b16 %v3463
        %v3983 = vunpack.c.l.b16 %v3464
        %v3984 = vunpack.c.l.b16 %v3465
        %v3985 = vunpack.c.l.b16 %v3466
        %v3986 = vunpack.c.l.b16 %v3467
        %v3987 = vunpack.c.l.b16 %v3468
        %v3988 = vunpack.c.l.b16 %v3469
        %v3989 = vunpack.c.l.b16 %v3470
        %v3990 = vunpack.c.l.b16 %v3471
        %v3991 = vunpack.c.l.b16 %v3472
        %v3992 = vunpack.c.l.b16 %v3473
        %v3993 = vunpack.c.l.b16 %v3474
        %v3994 = vunpack.c.l.b16 %v3475
        %v3995 = vunpack.c.l.b16 %v3476
        %v3996 = vunpack.c.l.b16 %v3477
        %v3997 = vunpack.c.l.b16 %v3478
        %v3998 = vunpack.c.l.b16 %v3479
        %v3999 = vunpack.c.l.b16 %v3480
        %v4000 = vunpack.c.l.b16 %v3481
        %v4001 = vunpack.c.l.b16 %v3482
        %v4002 = vunpack.c.l.b16 %v3483
        %v4003 = vunpack.c.l.b16 %v3484
        %v4004 = vunpack.c.l.b16 %v3485
        %v4005 = vunpack.c.l.b16 %v3486
        %v4006 = vunpack.c.l.b16 %v3487
        %v4007 = vunpack.c.l.b16 %v3488
        %v4008 = vunpack.c.l.b16 %v3489
        %v4009 = vunpack.c.l.b16 %v3490
        %v4010 = vunpack.c.l.b16 %v3491
        %v4011 = vunpack.c.l.b16 %v3492
        %v4012 = vunpack.c.l.b16 %v3493
        %v4013 = vunpack.c.l.b16 %v3494
        %v4014 = vunpack.c.l.b16 %v3495
        %v4015 = vunpack.c.l.b16 %v3496
        %v4016 = vunpack.c.l.b16 %v3497
        %v4017 = vunpack.c.l.b16 %v3498
        %v4018 = vunpack.c.l.b16 %v3499
        %v4019 = vunpack.c.l.b16 %v3500
        %v4020 = vunpack.c.l.b16 %v3501
        %v4021 = vunpack.c.l.b16 %v3502
        %v4022 = vunpack.c.l.b16 %v3503
        %v4023 = vunpack.c.l.b16 %v3504
        %v4024 = vunpack.c.l.b16 %v3505
        %v4025 = vunpack.c.l.b16 %v3506
        %v4026 = vunpack.c.l.b16 %v3507
        %v4027 = vunpack.c.l.b16 %v3508
        %v4028 = vunpack.c.l.b16 %v3509
        %v4029 = vunpack.c.l.b16 %v3510
        %v4030 = vunpack.c.l.b16 %v3511
        %v4031 = vunpack.c.l.b16 %v3512
        %v4032 = vunpack.c.l.b16 %v3513
        %v4033 = vunpack.c.l.b16 %v3514
        %v4034 = vunpack.c.l.b16 %v3515
        %v4035 = vunpack.c.l.b16 %v3516
        %v4036 = vunpack.c.l.b16 %v3517
        %v4037 = vunpack.c.l.b16 %v3518
        %v4038 = vunpack.c.l.b16 %v3519
        %v4039 = vunpack.c.l.b16 %v3520
        %v4040 = vunpack.c.l.b16 %v3521
        %v4041 = vunpack.c.l.b16 %v3522
        %v4042 = vunpack.c.l.b16 %v3523
        %v4043 = vunpack.c.l.b16 %v3524
        %v4044 = vunpack.c.l.b16 %v3525
        %v4045 = vunpack.c.l.b16 %v3526
        %v4046 = vunpack.c.l.b16 %v3527
        %v4047 = vunpack.c.l.b16 %v3528
        %v4048 = vunpack.c.l.b16 %v3529
        %v4049 = vunpack.c.l.b16 %v3530
        %v4050 = vunpack.c.l.b16 %v3531
        %v4051 = vunpack.c.l.b16 %v3532
        %v4052 = vunpack.c.l.b16 %v3533
        %v4053 = vunpack.c.l.b16 %v3534
        %v4054 = vunpack.c.l.b16 %v3535
        %v4055 = vunpack.c.l.b16 %v3536
        %v4056 = vunpack.c.l.b16 %v3537
        %v4057 = vunpack.c.l.b16 %v3538
        %v4058 = vunpack.c.l.b16 %v3539
        %v4059 = vunpack.c.l.b16 %v3540
        %v4060 = vunpack.c.l.b16 %v3541
        %v4061 = vunpack.c.l.b16 %v3542
        %v4062 = vunpack.c.l.b16 %v3543
        %v4063 = vunpack.c.l.b16 %v3544
        %v4064 = vunpack.c.l.b16 %v3545
        %v4065 = vunpack.c.l.b16 %v3546
        %v4066 = vunpack.c.l.b16 %v3547
        %v4067 = vunpack.c.l.b16 %v3548
        %v4068 = vunpack.c.l.b16 %v3549
        %v4069 = vunpack.c.l.b16 %v3550
        %v4070 = vunpack.c.l.b16 %v3551
        %v4071 = vunpack.c.l.b16 %v3552
        %v4072 = vunpack.c.l.b16 %v3553
        %v4073 = vunpack.c.l.b16 %v3554
        %v4074 = vunpack.c.l.b16 %v3555
        %v4075 = vunpack.c.l.b16 %v3556
        %v4076 = vunpack.c.l.b16 %v3557
        %v4077 = vunpack.c.l.b16 %v3558
        %v4078 = vunpack.c.l.b16 %v3559
        %v4079 = vunpack.c.l.b16 %v3560
        %v4080 = vunpack.c.l.b16 %v3561
        %v4081 = vunpack.c.l.b16 %v3562
        %v4082 = vunpack.c.l.b16 %v3563
        %v4083 = vunpack.c.l.b16 %v3564
        %v4084 = vunpack.c.l.b16 %v3565
        %v4085 = vunpack.c.l.b16 %v3566
        %v4086 = vpack.c.b16 %v3831, %v3830
        %v4087 = vpack.c.b16 %v3833, %v3832
        %v4088 = vpack.c.b16 %v3835, %v3834
        %v4089 = vpack.c.b16 %v3837, %v3836
        %v4090 = vpack.c.b16 %v3839, %v3838
        %v4091 = vpack.c.b16 %v3841, %v3840
        %v4092 = vpack.c.b16 %v3843, %v3842
        %v4093 = vpack.c.b16 %v3845, %v3844
        %v4094 = vpack.c.b16 %v3847, %v3846
        %v4095 = vpack.c.b16 %v3849, %v3848
        %v4096 = vpack.c.b16 %v3851, %v3850
        %v4097 = vpack.c.b16 %v3853, %v3852
        %v4098 = vpack.c.b16 %v3855, %v3854
        %v4099 = vpack.c.b16 %v3857, %v3856
        %v4100 = vpack.c.b16 %v3859, %v3858
        %v4101 = vpack.c.b16 %v3861, %v3860
        %v4102 = vpack.c.b16 %v3863, %v3862
        %v4103 = vpack.c.b16 %v3865, %v3864
        %v4104 = vpack.c.b16 %v3867, %v3866
        %v4105 = vpack.c.b16 %v3869, %v3868
        %v4106 = vpack.c.b16 %v3871, %v3870
        %v4107 = vpack.c.b16 %v3873, %v3872
        %v4108 = vpack.c.b16 %v3875, %v3874
        %v4109 = vpack.c.b16 %v3877, %v3876
        %v4110 = vpack.c.b16 %v3879, %v3878
        %v4111 = vpack.c.b16 %v3881, %v3880
        %v4112 = vpack.c.b16 %v3883, %v3882
        %v4113 = vpack.c.b16 %v3885, %v3884
        %v4114 = vpack.c.b16 %v3887, %v3886
        %v4115 = vpack.c.b16 %v3889, %v3888
        %v4116 = vpack.c.b16 %v3891, %v3890
        %v4117 = vpack.c.b16 %v3893, %v3892
        %v4118 = vpack.c.b16 %v3895, %v3894
        %v4119 = vpack.c.b16 %v3897, %v3896
        %v4120 = vpack.c.b16 %v3899, %v3898
        %v4121 = vpack.c.b16 %v3901, %v3900
        %v4122 = vpack.c.b16 %v3903, %v3902
        %v4123 = vpack.c.b16 %v3905, %v3904
        %v4124 = vpack.c.b16 %v3907, %v3906
        %v4125 = vpack.c.b16 %v3909, %v3908
        %v4126 = vpack.c.b16 %v3911, %v3910
        %v4127 = vpack.c.b16 %v3913, %v3912
        %v4128 = vpack.c.b16 %v3915, %v3914
        %v4129 = vpack.c.b16 %v3917, %v3916
        %v4130 = vpack.c.b16 %v3919, %v3918
        %v4131 = vpack.c.b16 %v3921, %v3920
        %v4132 = vpack.c.b16 %v3923, %v3922
        %v4133 = vpack.c.b16 %v3925, %v3924
        %v4134 = vpack.c.b16 %v3927, %v3926
        %v4135 = vpack.c.b16 %v3929, %v3928
        %v4136 = vpack.c.b16 %v3931, %v3930
        %v4137 = vpack.c.b16 %v3933, %v3932
        %v4138 = vpack.c.b16 %v3935, %v3934
        %v4139 = vpack.c.b16 %v3937, %v3936
        %v4140 = vpack.c.b16 %v3939, %v3938
        %v4141 = vpack.c.b16 %v3941, %v3940
        %v4142 = vpack.c.b16 %v3943, %v3942
        %v4143 = vpack.c.b16 %v3945, %v3944
        %v4144 = vpack.c.b16 %v3947, %v3946
        %v4145 = vpack.c.b16 %v3949, %v3948
        %v4146 = vpack.c.b16 %v3951, %v3950
        %v4147 = vpack.c.b16 %v3953, %v3952
        %v4148 = vpack.c.b16 %v3955, %v3954
        %v4149 = vpack.c.b16 %v3957, %v3956
        %v4150 = vpack.c.b16 %v3959, %v3958
        %v4151 = vpack.c.b16 %v3961, %v3960
        %v4152 = vpack.c.b16 %v3963, %v3962
        %v4153 = vpack.c.b16 %v3965, %v3964
        %v4154 = vpack.c.b16 %v3967, %v3966
        %v4155 = vpack.c.b16 %v3969, %v3968
        %v4156 = vpack.c.b16 %v3971, %v3970
        %v4157 = vpack.c.b16 %v3973, %v3972
        %v4158 = vpack.c.b16 %v3975, %v3974
        %v4159 = vpack.c.b16 %v3977, %v3976
        %v4160 = vpack.c.b16 %v3979, %v3978
        %v4161 = vpack.c.b16 %v3981, %v3980
        %v4162 = vpack.c.b16 %v3983, %v3982
        %v4163 = vpack.c.b16 %v3985, %v3984
        %v4164 = vpack.c.b16 %v3987, %v3986
        %v4165 = vpack.c.b16 %v3989, %v3988
        %v4166 = vpack.c.b16 %v3991, %v3990
        %v4167 = vpack.c.b16 %v3993, %v3992
        %v4168 = vpack.c.b16 %v3995, %v3994
        %v4169 = vpack.c.b16 %v3997, %v3996
        %v4170 = vpack.c.b16 %v3999, %v3998
        %v4171 = vpack.c.b16 %v4001, %v4000
        %v4172 = vpack.c.b16 %v4003, %v4002
        %v4173 = vpack.c.b16 %v4005, %v4004
        %v4174 = vpack.c.b16 %v4007, %v4006
        %v4175 = vpack.c.b16 %v4009, %v4008
        %v4176 = vpack.c.b16 %v4011, %v4010
        %v4177 = vpack.c.b16 %v4013, %v4012
        %v4178 = vpack.c.b16 %v4015, %v4014
        %v4179 = vpack.c.b16 %v4017, %v4016
        %v4180 = vpack.c.b16 %v4019, %v4018
        %v4181 = vpack.c.b16 %v4021, %v4020
        %v4182 = vpack.c.b16 %v4023, %v4022
        %v4183 = vpack.c.b16 %v4025, %v4024
        %v4184 = vpack.c.b16 %v4027, %v4026
        %v4185 = vpack.c.b16 %v4029, %v4028
        %v4186 = vpack.c.b16 %v4031, %v4030
        %v4187 = vpack.c.b16 %v4033, %v4032
        %v4188 = vpack.c.b16 %v4035, %v4034
        %v4189 = vpack.c.b16 %v4037, %v4036
        %v4190 = vpack.c.b16 %v4039, %v4038
        %v4191 = vpack.c.b16 %v4041, %v4040
        %v4192 = vpack.c.b16 %v4043, %v4042
        %v4193 = vpack.c.b16 %v4045, %v4044
        %v4194 = vpack.c.b16 %v4047, %v4046
        %v4195 = vpack.c.b16 %v4049, %v4048
        %v4196 = vpack.c.b16 %v4051, %v4050
        %v4197 = vpack.c.b16 %v4053, %v4052
        %v4198 = vpack.c.b16 %v4055, %v4054
        %v4199 = vpack.c.b16 %v4057, %v4056
        %v4200 = vpack.c.b16 %v4059, %v4058
        %v4201 = vpack.c.b16 %v4061, %v4060
        %v4202 = vpack.c.b16 %v4063, %v4062
        %v4203 = vpack.c.b16 %v4065, %v4064
        %v4204 = vpack.c.b16 %v4067, %v4066
        %v4205 = vpack.c.b16 %v4069, %v4068
        %v4206 = vpack.c.b16 %v4071, %v4070
        %v4207 = vpack.c.b16 %v4073, %v4072
        %v4208 = vpack.c.b16 %v4075, %v4074
        %v4209 = vpack.c.b16 %v4077, %v4076
        %v4210 = vpack.c.b16 %v4079, %v4078
        %v4211 = vpack.c.b16 %v4081, %v4080
        %v4212 = vpack.c.b16 %v4083, %v4082
        %v4213 = vpack.c.b16 %v4085, %v4084
        %4342 = vmatprep.subr.bf16.mxu0 0
        %4343 = vmatpush1.bf16.msra.mxu0 %v4093
        %4344 = vmatprep.subr.bf16.mxu0 0
        %4345 = vmatpush1.bf16.msra.mxu0 %v4092
        %4346 = vmatprep.subr.bf16.mxu0 0
        %4347 = vmatpush1.bf16.msra.mxu0 %v4091
        %4348 = vmatprep.subr.bf16.mxu0 0
        %4349 = vmatpush1.bf16.msra.mxu0 %v4090
        %4350 = vmatprep.subr.bf16.mxu0 0
        %4351 = vmatpush1.bf16.msra.mxu0 %v4089
        %4352 = vmatprep.subr.bf16.mxu0 0
        %4353 = vmatpush1.bf16.msra.mxu0 %v4088
        %4354 = vmatprep.subr.bf16.mxu0 0
        %4355 = vmatpush1.bf16.msra.mxu0 %v4087
        %4356 = vmatprep.subr.bf16.mxu0 0
        %4357 = vmatpush1.bf16.msra.mxu0 %v4086
        %4358 = vmatprep.subr.bf16.mxu0 0
        %4359 = vmatpush2.bf16.msra.mxu0 %v4101
        %4360 = vmatprep.subr.bf16.mxu0 0
        %4361 = vmatpush2.bf16.msra.mxu0 %v4100
        %4362 = vmatprep.subr.bf16.mxu0 0
        %4363 = vmatpush2.bf16.msra.mxu0 %v4099
        %4364 = vmatprep.subr.bf16.mxu0 0
        %4365 = vmatpush2.bf16.msra.mxu0 %v4098
        %4366 = vmatprep.subr.bf16.mxu0 0
        %4367 = vmatpush2.bf16.msra.mxu0 %v4097
        %4368 = vmatprep.subr.bf16.mxu0 0
        %4369 = vmatpush2.bf16.msra.mxu0 %v4096
        %4370 = vmatprep.subr.bf16.mxu0 0
        %4371 = vmatpush2.bf16.msra.mxu0 %v4095
        %4372 = vmatprep.subr.bf16.mxu0 0
        %4373 = vmatpush2.bf16.msra.mxu0 %v4094
        %4374 = vmatprep.mubr.bf16.mxu0 %v3296
        %4375 = vmatmul.mubr.bf16.gmra.mxu0 %v3295
        %v4376 = vpop.f32.mrf.mxu0
        %v4377 = vadd.f32 %v3572, %v4376
        %v4378 = vpop.f32.mrf.mxu0
        %v4379 = vpop.f32.mrf.mxu0
        %v4380 = vadd.f32 %v3572, %v4379
        %v4381 = vpop.f32.mrf.mxu0
        %4382 = vdwg.mxu0
        %4383 = vmatprep.subr.bf16.mxu0 0
        %4384 = vmatpush1.bf16.msra.mxu0 %v4109
        %4385 = vmatprep.subr.bf16.mxu0 0
        %4386 = vmatpush1.bf16.msra.mxu0 %v4108
        %4387 = vmatprep.subr.bf16.mxu0 0
        %4388 = vmatpush1.bf16.msra.mxu0 %v4107
        %4389 = vmatprep.subr.bf16.mxu0 0
        %4390 = vmatpush1.bf16.msra.mxu0 %v4106
        %4391 = vmatprep.subr.bf16.mxu0 0
        %4392 = vmatpush1.bf16.msra.mxu0 %v4105
        %4393 = vmatprep.subr.bf16.mxu0 0
        %4394 = vmatpush1.bf16.msra.mxu0 %v4104
        %4395 = vmatprep.subr.bf16.mxu0 0
        %4396 = vmatpush1.bf16.msra.mxu0 %v4103
        %4397 = vmatprep.subr.bf16.mxu0 0
        %4398 = vmatpush1.bf16.msra.mxu0 %v4102
        %4399 = vmatprep.subr.bf16.mxu0 0
        %4400 = vmatpush2.bf16.msra.mxu0 %v4117
        %4401 = vmatprep.subr.bf16.mxu0 0
        %4402 = vmatpush2.bf16.msra.mxu0 %v4116
        %4403 = vmatprep.subr.bf16.mxu0 0
        %4404 = vmatpush2.bf16.msra.mxu0 %v4115
        %4405 = vmatprep.subr.bf16.mxu0 0
        %4406 = vmatpush2.bf16.msra.mxu0 %v4114
        %4407 = vmatprep.subr.bf16.mxu0 0
        %4408 = vmatpush2.bf16.msra.mxu0 %v4113
        %4409 = vmatprep.subr.bf16.mxu0 0
        %4410 = vmatpush2.bf16.msra.mxu0 %v4112
        %4411 = vmatprep.subr.bf16.mxu0 0
        %4412 = vmatpush2.bf16.msra.mxu0 %v4111
        %4413 = vmatprep.subr.bf16.mxu0 0
        %4414 = vmatpush2.bf16.msra.mxu0 %v4110
        %4415 = vmatprep.mubr.bf16.mxu0 %v3298
        %4416 = vmatmul.mubr.bf16.gmra.mxu0 %v3297
        %v4417 = vpop.f32.mrf.mxu0
        %v4418 = vadd.f32 %v4377, %v4417
        %v4419 = vpop.f32.mrf.mxu0
        %v4420 = vpop.f32.mrf.mxu0
        %v4421 = vadd.f32 %v4380, %v4420
        %v4422 = vpop.f32.mrf.mxu0
        %4423 = vdwg.mxu0
        %4424 = vmatprep.subr.bf16.mxu0 0
        %4425 = vmatpush1.bf16.msra.mxu0 %v4125
        %4426 = vmatprep.subr.bf16.mxu0 0
        %4427 = vmatpush1.bf16.msra.mxu0 %v4124
        %4428 = vmatprep.subr.bf16.mxu0 0
        %4429 = vmatpush1.bf16.msra.mxu0 %v4123
        %4430 = vmatprep.subr.bf16.mxu0 0
        %4431 = vmatpush1.bf16.msra.mxu0 %v4122
        %4432 = vmatprep.subr.bf16.mxu0 0
        %4433 = vmatpush1.bf16.msra.mxu0 %v4121
        %4434 = vmatprep.subr.bf16.mxu0 0
        %4435 = vmatpush1.bf16.msra.mxu0 %v4120
        %4436 = vmatprep.subr.bf16.mxu0 0
        %4437 = vmatpush1.bf16.msra.mxu0 %v4119
        %4438 = vmatprep.subr.bf16.mxu0 0
        %4439 = vmatpush1.bf16.msra.mxu0 %v4118
        %4440 = vmatprep.subr.bf16.mxu0 0
        %4441 = vmatpush2.bf16.msra.mxu0 %v4133
        %4442 = vmatprep.subr.bf16.mxu0 0
        %4443 = vmatpush2.bf16.msra.mxu0 %v4132
        %4444 = vmatprep.subr.bf16.mxu0 0
        %4445 = vmatpush2.bf16.msra.mxu0 %v4131
        %4446 = vmatprep.subr.bf16.mxu0 0
        %4447 = vmatpush2.bf16.msra.mxu0 %v4130
        %4448 = vmatprep.subr.bf16.mxu0 0
        %4449 = vmatpush2.bf16.msra.mxu0 %v4129
        %4450 = vmatprep.subr.bf16.mxu0 0
        %4451 = vmatpush2.bf16.msra.mxu0 %v4128
        %4452 = vmatprep.subr.bf16.mxu0 0
        %4453 = vmatpush2.bf16.msra.mxu0 %v4127
        %4454 = vmatprep.subr.bf16.mxu0 0
        %4455 = vmatpush2.bf16.msra.mxu0 %v4126
        %4456 = vmatprep.mubr.bf16.mxu0 %v3300
        %4457 = vmatmul.mubr.bf16.gmra.mxu0 %v3299
        %v4458 = vpop.f32.mrf.mxu0
        %v4459 = vadd.f32 %v4418, %v4458
        %v4460 = vpop.f32.mrf.mxu0
        %v4461 = vpop.f32.mrf.mxu0
        %v4462 = vadd.f32 %v4421, %v4461
        %v4463 = vpop.f32.mrf.mxu0
        %4464 = vdwg.mxu0
        %4465 = vmatprep.subr.bf16.mxu0 0
        %4466 = vmatpush1.bf16.msra.mxu0 %v4141
        %4467 = vmatprep.subr.bf16.mxu0 0
        %4468 = vmatpush1.bf16.msra.mxu0 %v4140
        %4469 = vmatprep.subr.bf16.mxu0 0
        %4470 = vmatpush1.bf16.msra.mxu0 %v4139
        %4471 = vmatprep.subr.bf16.mxu0 0
        %4472 = vmatpush1.bf16.msra.mxu0 %v4138
        %4473 = vmatprep.subr.bf16.mxu0 0
        %4474 = vmatpush1.bf16.msra.mxu0 %v4137
        %4475 = vmatprep.subr.bf16.mxu0 0
        %4476 = vmatpush1.bf16.msra.mxu0 %v4136
        %4477 = vmatprep.subr.bf16.mxu0 0
        %4478 = vmatpush1.bf16.msra.mxu0 %v4135
        %4479 = vmatprep.subr.bf16.mxu0 0
        %4480 = vmatpush1.bf16.msra.mxu0 %v4134
        %4481 = vmatprep.subr.bf16.mxu0 0
        %4482 = vmatpush2.bf16.msra.mxu0 %v4149
        %4483 = vmatprep.subr.bf16.mxu0 0
        %4484 = vmatpush2.bf16.msra.mxu0 %v4148
        %4485 = vmatprep.subr.bf16.mxu0 0
        %4486 = vmatpush2.bf16.msra.mxu0 %v4147
        %4487 = vmatprep.subr.bf16.mxu0 0
        %4488 = vmatpush2.bf16.msra.mxu0 %v4146
        %4489 = vmatprep.subr.bf16.mxu0 0
        %4490 = vmatpush2.bf16.msra.mxu0 %v4145
        %4491 = vmatprep.subr.bf16.mxu0 0
        %4492 = vmatpush2.bf16.msra.mxu0 %v4144
        %4493 = vmatprep.subr.bf16.mxu0 0
        %4494 = vmatpush2.bf16.msra.mxu0 %v4143
        %4495 = vmatprep.subr.bf16.mxu0 0
        %4496 = vmatpush2.bf16.msra.mxu0 %v4142
        %4497 = vmatprep.mubr.bf16.mxu0 %v3302
        %4498 = vmatmul.mubr.bf16.gmra.mxu0 %v3301
        %v4499 = vpop.f32.mrf.mxu0
        %v4500 = vadd.f32 %v4459, %v4499
        %v4501 = vpop.f32.mrf.mxu0
        %v4502 = vpop.f32.mrf.mxu0
        %v4503 = vadd.f32 %v4462, %v4502
        %v4504 = vpop.f32.mrf.mxu0
        %4505 = vdwg.mxu0
        %4506 = vmatprep.subr.bf16.mxu0 0
        %4507 = vmatpush1.bf16.msra.mxu0 %v4157
        %4508 = vmatprep.subr.bf16.mxu0 0
        %4509 = vmatpush1.bf16.msra.mxu0 %v4156
        %4510 = vmatprep.subr.bf16.mxu0 0
        %4511 = vmatpush1.bf16.msra.mxu0 %v4155
        %4512 = vmatprep.subr.bf16.mxu0 0
        %4513 = vmatpush1.bf16.msra.mxu0 %v4154
        %4514 = vmatprep.subr.bf16.mxu0 0
        %4515 = vmatpush1.bf16.msra.mxu0 %v4153
        %4516 = vmatprep.subr.bf16.mxu0 0
        %4517 = vmatpush1.bf16.msra.mxu0 %v4152
        %4518 = vmatprep.subr.bf16.mxu0 0
        %4519 = vmatpush1.bf16.msra.mxu0 %v4151
        %4520 = vmatprep.subr.bf16.mxu0 0
        %4521 = vmatpush1.bf16.msra.mxu0 %v4150
        %4522 = vmatprep.subr.bf16.mxu0 0
        %4523 = vmatpush2.bf16.msra.mxu0 %v4165
        %4524 = vmatprep.subr.bf16.mxu0 0
        %4525 = vmatpush2.bf16.msra.mxu0 %v4164
        %4526 = vmatprep.subr.bf16.mxu0 0
        %4527 = vmatpush2.bf16.msra.mxu0 %v4163
        %4528 = vmatprep.subr.bf16.mxu0 0
        %4529 = vmatpush2.bf16.msra.mxu0 %v4162
        %4530 = vmatprep.subr.bf16.mxu0 0
        %4531 = vmatpush2.bf16.msra.mxu0 %v4161
        %4532 = vmatprep.subr.bf16.mxu0 0
        %4533 = vmatpush2.bf16.msra.mxu0 %v4160
        %4534 = vmatprep.subr.bf16.mxu0 0
        %4535 = vmatpush2.bf16.msra.mxu0 %v4159
        %4536 = vmatprep.subr.bf16.mxu0 0
        %4537 = vmatpush2.bf16.msra.mxu0 %v4158
        %4538 = vmatprep.mubr.bf16.mxu0 %v3304
        %4539 = vmatmul.mubr.bf16.gmra.mxu0 %v3303
        %v4540 = vpop.f32.mrf.mxu0
        %v4541 = vadd.f32 %v4500, %v4540
        %v4542 = vpop.f32.mrf.mxu0
        %v4543 = vpop.f32.mrf.mxu0
        %v4544 = vadd.f32 %v4503, %v4543
        %v4545 = vpop.f32.mrf.mxu0
        %4546 = vdwg.mxu0
        %4547 = vmatprep.subr.bf16.mxu0 0
        %4548 = vmatpush1.bf16.msra.mxu0 %v4173
        %4549 = vmatprep.subr.bf16.mxu0 0
        %4550 = vmatpush1.bf16.msra.mxu0 %v4172
        %4551 = vmatprep.subr.bf16.mxu0 0
        %4552 = vmatpush1.bf16.msra.mxu0 %v4171
        %4553 = vmatprep.subr.bf16.mxu0 0
        %4554 = vmatpush1.bf16.msra.mxu0 %v4170
        %4555 = vmatprep.subr.bf16.mxu0 0
        %4556 = vmatpush1.bf16.msra.mxu0 %v4169
        %4557 = vmatprep.subr.bf16.mxu0 0
        %4558 = vmatpush1.bf16.msra.mxu0 %v4168
        %4559 = vmatprep.subr.bf16.mxu0 0
        %4560 = vmatpush1.bf16.msra.mxu0 %v4167
        %4561 = vmatprep.subr.bf16.mxu0 0
        %4562 = vmatpush1.bf16.msra.mxu0 %v4166
        %4563 = vmatprep.subr.bf16.mxu0 0
        %4564 = vmatpush2.bf16.msra.mxu0 %v4181
        %4565 = vmatprep.subr.bf16.mxu0 0
        %4566 = vmatpush2.bf16.msra.mxu0 %v4180
        %4567 = vmatprep.subr.bf16.mxu0 0
        %4568 = vmatpush2.bf16.msra.mxu0 %v4179
        %4569 = vmatprep.subr.bf16.mxu0 0
        %4570 = vmatpush2.bf16.msra.mxu0 %v4178
        %4571 = vmatprep.subr.bf16.mxu0 0
        %4572 = vmatpush2.bf16.msra.mxu0 %v4177
        %4573 = vmatprep.subr.bf16.mxu0 0
        %4574 = vmatpush2.bf16.msra.mxu0 %v4176
        %4575 = vmatprep.subr.bf16.mxu0 0
        %4576 = vmatpush2.bf16.msra.mxu0 %v4175
        %4577 = vmatprep.subr.bf16.mxu0 0
        %4578 = vmatpush2.bf16.msra.mxu0 %v4174
        %4579 = vmatprep.mubr.bf16.mxu0 %v3306
        %4580 = vmatmul.mubr.bf16.gmra.mxu0 %v3305
        %v4581 = vpop.f32.mrf.mxu0
        %v4582 = vadd.f32 %v4541, %v4581
        %v4583 = vpop.f32.mrf.mxu0
        %v4584 = vpop.f32.mrf.mxu0
        %v4585 = vadd.f32 %v4544, %v4584
        %v4586 = vpop.f32.mrf.mxu0
        %4587 = vdwg.mxu0
        %4588 = vmatprep.subr.bf16.mxu0 0
        %4589 = vmatpush1.bf16.msra.mxu0 %v4189
        %4590 = vmatprep.subr.bf16.mxu0 0
        %4591 = vmatpush1.bf16.msra.mxu0 %v4188
        %4592 = vmatprep.subr.bf16.mxu0 0
        %4593 = vmatpush1.bf16.msra.mxu0 %v4187
        %4594 = vmatprep.subr.bf16.mxu0 0
        %4595 = vmatpush1.bf16.msra.mxu0 %v4186
        %4596 = vmatprep.subr.bf16.mxu0 0
        %4597 = vmatpush1.bf16.msra.mxu0 %v4185
        %4598 = vmatprep.subr.bf16.mxu0 0
        %4599 = vmatpush1.bf16.msra.mxu0 %v4184
        %4600 = vmatprep.subr.bf16.mxu0 0
        %4601 = vmatpush1.bf16.msra.mxu0 %v4183
        %4602 = vmatprep.subr.bf16.mxu0 0
        %4603 = vmatpush1.bf16.msra.mxu0 %v4182
        %4604 = vmatprep.subr.bf16.mxu0 0
        %4605 = vmatpush2.bf16.msra.mxu0 %v4197
        %4606 = vmatprep.subr.bf16.mxu0 0
        %4607 = vmatpush2.bf16.msra.mxu0 %v4196
        %4608 = vmatprep.subr.bf16.mxu0 0
        %4609 = vmatpush2.bf16.msra.mxu0 %v4195
        %4610 = vmatprep.subr.bf16.mxu0 0
        %4611 = vmatpush2.bf16.msra.mxu0 %v4194
        %4612 = vmatprep.subr.bf16.mxu0 0
        %4613 = vmatpush2.bf16.msra.mxu0 %v4193
        %4614 = vmatprep.subr.bf16.mxu0 0
        %4615 = vmatpush2.bf16.msra.mxu0 %v4192
        %4616 = vmatprep.subr.bf16.mxu0 0
        %4617 = vmatpush2.bf16.msra.mxu0 %v4191
        %4618 = vmatprep.subr.bf16.mxu0 0
        %4619 = vmatpush2.bf16.msra.mxu0 %v4190
        %4620 = vmatprep.mubr.bf16.mxu0 %v3308
        %4621 = vmatmul.mubr.bf16.gmra.mxu0 %v3307
        %v4622 = vpop.f32.mrf.mxu0
        %v4623 = vadd.f32 %v4582, %v4622
        %v4624 = vpop.f32.mrf.mxu0
        %v4625 = vpop.f32.mrf.mxu0
        %v4626 = vadd.f32 %v4585, %v4625
        %v4627 = vpop.f32.mrf.mxu0
        %4628 = vdwg.mxu0
        %4629 = vmatprep.subr.bf16.mxu0 0
        %4630 = vmatpush1.bf16.msra.mxu0 %v4205
        %4631 = vmatprep.subr.bf16.mxu0 0
        %4632 = vmatpush1.bf16.msra.mxu0 %v4204
        %4633 = vmatprep.subr.bf16.mxu0 0
        %4634 = vmatpush1.bf16.msra.mxu0 %v4203
        %4635 = vmatprep.subr.bf16.mxu0 0
        %4636 = vmatpush1.bf16.msra.mxu0 %v4202
        %4637 = vmatprep.subr.bf16.mxu0 0
        %4638 = vmatpush1.bf16.msra.mxu0 %v4201
        %4639 = vmatprep.subr.bf16.mxu0 0
        %4640 = vmatpush1.bf16.msra.mxu0 %v4200
        %4641 = vmatprep.subr.bf16.mxu0 0
        %4642 = vmatpush1.bf16.msra.mxu0 %v4199
        %4643 = vmatprep.subr.bf16.mxu0 0
        %4644 = vmatpush1.bf16.msra.mxu0 %v4198
        %4645 = vmatprep.subr.bf16.mxu0 0
        %4646 = vmatpush2.bf16.msra.mxu0 %v4213
        %4647 = vmatprep.subr.bf16.mxu0 0
        %4648 = vmatpush2.bf16.msra.mxu0 %v4212
        %4649 = vmatprep.subr.bf16.mxu0 0
        %4650 = vmatpush2.bf16.msra.mxu0 %v4211
        %4651 = vmatprep.subr.bf16.mxu0 0
        %4652 = vmatpush2.bf16.msra.mxu0 %v4210
        %4653 = vmatprep.subr.bf16.mxu0 0
        %4654 = vmatpush2.bf16.msra.mxu0 %v4209
        %4655 = vmatprep.subr.bf16.mxu0 0
        %4656 = vmatpush2.bf16.msra.mxu0 %v4208
        %4657 = vmatprep.subr.bf16.mxu0 0
        %4658 = vmatpush2.bf16.msra.mxu0 %v4207
        %4659 = vmatprep.subr.bf16.mxu0 0
        %4660 = vmatpush2.bf16.msra.mxu0 %v4206
        %4661 = vmatprep.mubr.bf16.mxu0 %v3310
        %4662 = vmatmul.mubr.bf16.gmra.mxu0 %v3309
        %v4663 = vpop.f32.mrf.mxu0
        %v4664 = vadd.f32 %v4623, %v4663
        %v4665 = vpop.f32.mrf.mxu0
        %v4666 = vpop.f32.mrf.mxu0
        %v4667 = vadd.f32 %v4626, %v4666
        %v4668 = vpop.f32.mrf.mxu0
        %4669 = vdwg.mxu0
        %v4670 = vadd.f32 %v2637, %v4664
        %v4671 = vadd.f32 %v2638, %v4667
        %v4672 = vsel %vm1415, %v4670, 0.0
        %4673 = vadd.xlane.f32.xlu0 %v4672
        %v4674 = vpop.xlane.xlu0 %4673
        %v4675 = vsel %vm1415, %v4671, 0.0
        %4676 = vadd.xlane.f32.xlu0 %v4675
        %v4677 = vpop.xlane.xlu0 %4676
        %v4678 = vmul.f32 %v4674, %v2600
        %v4679 = vmul.f32 %v4677, %v2600
        %v4680 = vsub.f32 %v4670, %v4678
        %v4681 = vsub.f32 %v4671, %v4679
        %v4682 = vmul.f32 %v4680, %v4680
        %v4683 = vmul.f32 %v4681, %v4681
        %v4684 = vsel %vm1415, %v4682, 0.0
        %4685 = vadd.xlane.f32.xlu0 %v4684
        %v4686 = vpop.xlane.xlu0 %4685
        %v4687 = vsel %vm1415, %v4683, 0.0
        %4688 = vadd.xlane.f32.xlu0 %v4687
        %v4689 = vpop.xlane.xlu0 %4688
        %v4690 = vmul.f32 %v4686, %v2600
        %v4691 = vmul.f32 %v4689, %v2600
        %v4692 = vadd.f32 %v4690, 1e-05
        %v4693 = vadd.f32 %v4691, 1e-05
        %v4694 = vrsqrt.pop %v4692
        %v4695 = vrsqrt.pop %v4693
        %v4696 = vmul.f32 %v4680, %v4694
        %v4697 = vmul.f32 %v4681, %v4695
        %v4698 = vld [vmem:[%s1243] sm:$0x1]
        %v4700 = vlaneseq
        %v4701 = vshrl.u32 %v4700, 7
        %v4702 = vsub.s32 0, %v4701
        %v4703 = vrot.slane %v4698, %v4702
        %v4705 = vmul.f32 %v4696, %v4703
        %v4706 = vmul.f32 %v4697, %v4703
        %v4707 = vld [vmem:[%s1246] sm:$0x1]
        %v4709 = vlaneseq
        %v4710 = vshrl.u32 %v4709, 7
        %v4711 = vsub.s32 0, %v4710
        %v4712 = vrot.slane %v4707, %v4711
        %v4714 = vadd.f32 %v4705, %v4712
        %v4715 = vadd.f32 %v4706, %v4712
        %4716 = vst.msk [vmem:[#allocation2] sm:$0xff] %vm1415, %v4714
        %4717 = vst.msk [vmem:[#allocation2 + $0x8] sm:$0xff] %vm1415, %v4715
        %p4718 = scmp.eq.s32.totalorder %s84, 1
        // Predicated region
        $region149: #{tf_model_forward.1} parent=143 // pred_check
          %p4719 = pneg %p4718
        $region150: #{tf_model_forward.1} parent=143 // pred_check_branch
          %4721 = sbr.rel (%p4719) target = $region152
        $region151: #{tf_model_forward.1} parent=143 // pred_region
          %v4722 = vld [vmem:[%s47] sm:$0xff]
          %v4723 = vld [vmem:[%s47 + $0x8] sm:$0xff]
          %v4724 = vld [vmem:[%s47 + $0x10] sm:$0xff]
          %v4725 = vld [vmem:[%s47 + $0x18] sm:$0xff]
          %v4726 = vld [vmem:[%s49] sm:$0x1]
          %v4728 = vlaneseq
          %v4729 = vshrl.u32 %v4728, 7
          %v4730 = vsub.s32 0, %v4729
          %v4731 = vrot.slane %v4726, %v4730
          %v4734 = vsel %vm1415, %v4714, 0
          %v4737 = vsel %vm1415, %v4715, 0
          %4739 = vmatprep.subr.mxu0 0.0
          %4740 = vmatpush1.msra.mxu0 0.0
          %4741 = vmatprep.subr.mxu0 0.0
          %4742 = vmatpush1.msra.mxu0 0.0
          %4743 = vmatprep.subr.mxu0 0.0
          %4744 = vmatpush1.msra.mxu0 0.0
          %4745 = vmatprep.subr.mxu0 0.0
          %4746 = vmatpush1.msra.mxu0 0.0
          %4747 = vmatprep.subr.mxu0 0.0
          %4748 = vmatpush1.msra.mxu0 0.0
          %4749 = vmatprep.subr.mxu0 0.0
          %4750 = vmatpush1.msra.mxu0 0.0
          %4751 = vmatprep.subr.mxu0 0.0
          %4752 = vmatpush1.msra.mxu0 0.0
          %4753 = vmatprep.subr.mxu0 0.0
          %4754 = vmatpush1.msra.mxu0 0.0
          %4755 = vmatprep.subr.mxu0 0.0
          %4756 = vmatpush1.msra.mxu0 0.0
          %4757 = vmatprep.subr.mxu0 0.0
          %4758 = vmatpush1.msra.mxu0 0.0
          %4759 = vmatprep.subr.mxu0 0.0
          %4760 = vmatpush1.msra.mxu0 0.0
          %4761 = vmatprep.subr.mxu0 0.0
          %4762 = vmatpush1.msra.mxu0 0.0
          %4763 = vmatprep.subr.mxu0 0.0
          %4764 = vmatpush1.msra.mxu0 %v4725
          %4765 = vmatprep.subr.mxu0 0.0
          %4766 = vmatpush1.msra.mxu0 %v4724
          %4767 = vmatprep.subr.mxu0 0.0
          %4768 = vmatpush1.msra.mxu0 %v4723
          %4769 = vmatprep.subr.mxu0 0.0
          %4770 = vmatpush1.msra.mxu0 %v4722
          %4771 = vmatprep.subr.mxu0 0.0
          %4772 = vmatpush2.msra.mxu0 0.0
          %4773 = vmatprep.subr.mxu0 0.0
          %4774 = vmatpush2.msra.mxu0 0.0
          %4775 = vmatprep.subr.mxu0 0.0
          %4776 = vmatpush2.msra.mxu0 0.0
          %4777 = vmatprep.subr.mxu0 0.0
          %4778 = vmatpush2.msra.mxu0 0.0
          %4779 = vmatprep.subr.mxu0 0.0
          %4780 = vmatpush2.msra.mxu0 0.0
          %4781 = vmatprep.subr.mxu0 0.0
          %4782 = vmatpush2.msra.mxu0 0.0
          %4783 = vmatprep.subr.mxu0 0.0
          %4784 = vmatpush2.msra.mxu0 0.0
          %4785 = vmatprep.subr.mxu0 0.0
          %4786 = vmatpush2.msra.mxu0 0.0
          %4787 = vmatprep.subr.mxu0 0.0
          %4788 = vmatpush2.msra.mxu0 0.0
          %4789 = vmatprep.subr.mxu0 0.0
          %4790 = vmatpush2.msra.mxu0 0.0
          %4791 = vmatprep.subr.mxu0 0.0
          %4792 = vmatpush2.msra.mxu0 0.0
          %4793 = vmatprep.subr.mxu0 0.0
          %4794 = vmatpush2.msra.mxu0 0.0
          %4795 = vmatprep.subr.mxu0 0.0
          %4796 = vmatpush2.msra.mxu0 0.0
          %4797 = vmatprep.subr.mxu0 0.0
          %4798 = vmatpush2.msra.mxu0 0.0
          %4799 = vmatprep.subr.mxu0 0.0
          %4800 = vmatpush2.msra.mxu0 0.0
          %4801 = vmatprep.subr.mxu0 0.0
          %4802 = vmatpush2.msra.mxu0 0.0
          %4803 = vmatprep.mubr.f32.mxu0 0.0
          %4804 = vmatmul.mubr.f32.gmra.mxu0 %v4734
          %v4805 = vpop.f32.mrf.mxu0
          %v4806 = vadd.f32 %v4731, %v4805
          %v4807 = vpop.f32.mrf.mxu0
          %4808 = vmatprep.mubr.f32.mxu0 0.0
          %4809 = vmatmul.mubr.f32.gmra.mxu0 %v4737
          %v4810 = vpop.f32.mrf.mxu0
          %v4811 = vadd.f32 %v4731, %v4810
          %v4812 = vpop.f32.mrf.mxu0
          %4813 = vdwg.mxu0
          %v4814 = vmax.f32 %v4806, 0.0
          %v4815 = vmax.f32 %v4811, 0.0
          %v4816 = vld [vmem:[%s51] sm:$0x1]
          %v4817 = vld [vmem:[#allocation3] sm:$0x1]
          %4819 = vset.pattern.permute.xlu0 0
          %4820 = vperm.xlu0 %4819, %v4817
          %v4821 = vpop.permute.xlu0 %4820
          %v4823 = vlaneseq
          %v4824 = vshrl.u32 %v4823, 7
          %v4825 = vsub.s32 0, %v4824
          %v4826 = vrot.slane %v4821, %v4825
          %v4828 = vsel %vm1680, %v4816, 0
          %v4831 = vsel %vm1680, %v4814, 0
          %v4834 = vsel %vm1680, %v4815, 0
          %4836 = vmatprep.subr.mxu0 0.0
          %4837 = vmatpush1.xpose.msra.mxu0 0.0
          %4838 = vmatprep.subr.mxu0 0.0
          %4839 = vmatpush1.xpose.msra.mxu0 0.0
          %4840 = vmatprep.subr.mxu0 0.0
          %4841 = vmatpush1.xpose.msra.mxu0 0.0
          %4842 = vmatprep.subr.mxu0 0.0
          %4843 = vmatpush1.xpose.msra.mxu0 0.0
          %4844 = vmatprep.subr.mxu0 0.0
          %4845 = vmatpush1.xpose.msra.mxu0 0.0
          %4846 = vmatprep.subr.mxu0 0.0
          %4847 = vmatpush1.xpose.msra.mxu0 0.0
          %4848 = vmatprep.subr.mxu0 0.0
          %4849 = vmatpush1.xpose.msra.mxu0 0.0
          %4850 = vmatprep.subr.mxu0 0.0
          %4851 = vmatpush1.xpose.msra.mxu0 0.0
          %4852 = vmatprep.subr.mxu0 0.0
          %4853 = vmatpush1.xpose.msra.mxu0 0.0
          %4854 = vmatprep.subr.mxu0 0.0
          %4855 = vmatpush1.xpose.msra.mxu0 0.0
          %4856 = vmatprep.subr.mxu0 0.0
          %4857 = vmatpush1.xpose.msra.mxu0 0.0
          %4858 = vmatprep.subr.mxu0 0.0
          %4859 = vmatpush1.xpose.msra.mxu0 0.0
          %4860 = vmatprep.subr.mxu0 0.0
          %4861 = vmatpush1.xpose.msra.mxu0 0.0
          %4862 = vmatprep.subr.mxu0 0.0
          %4863 = vmatpush1.xpose.msra.mxu0 0.0
          %4864 = vmatprep.subr.mxu0 0.0
          %4865 = vmatpush1.xpose.msra.mxu0 %v4834
          %4866 = vmatprep.subr.mxu0 0.0
          %4867 = vmatpush1.xpose.msra.mxu0 %v4831
          %4868 = vmatprep.subr.mxu0 0.0
          %4869 = vmatpush2.xpose.msra.mxu0 0.0
          %4870 = vmatprep.subr.mxu0 0.0
          %4871 = vmatpush2.xpose.msra.mxu0 0.0
          %4872 = vmatprep.subr.mxu0 0.0
          %4873 = vmatpush2.xpose.msra.mxu0 0.0
          %4874 = vmatprep.subr.mxu0 0.0
          %4875 = vmatpush2.xpose.msra.mxu0 0.0
          %4876 = vmatprep.subr.mxu0 0.0
          %4877 = vmatpush2.xpose.msra.mxu0 0.0
          %4878 = vmatprep.subr.mxu0 0.0
          %4879 = vmatpush2.xpose.msra.mxu0 0.0
          %4880 = vmatprep.subr.mxu0 0.0
          %4881 = vmatpush2.xpose.msra.mxu0 0.0
          %4882 = vmatprep.subr.mxu0 0.0
          %4883 = vmatpush2.xpose.msra.mxu0 0.0
          %4884 = vmatprep.subr.mxu0 0.0
          %4885 = vmatpush2.xpose.msra.mxu0 0.0
          %4886 = vmatprep.subr.mxu0 0.0
          %4887 = vmatpush2.xpose.msra.mxu0 0.0
          %4888 = vmatprep.subr.mxu0 0.0
          %4889 = vmatpush2.xpose.msra.mxu0 0.0
          %4890 = vmatprep.subr.mxu0 0.0
          %4891 = vmatpush2.xpose.msra.mxu0 0.0
          %4892 = vmatprep.subr.mxu0 0.0
          %4893 = vmatpush2.xpose.msra.mxu0 0.0
          %4894 = vmatprep.subr.mxu0 0.0
          %4895 = vmatpush2.xpose.msra.mxu0 0.0
          %4896 = vmatprep.subr.mxu0 0.0
          %4897 = vmatpush2.xpose.msra.mxu0 0.0
          %4898 = vmatprep.subr.mxu0 0.0
          %4899 = vmatpush2.xpose.msra.mxu0 0.0
          %4900 = vmatprep.mubr.f32.mxu0 0.0
          %4901 = vmatmul.mubr.f32.gmra.mxu0 %v4828
          %v4902 = vpop.f32.mrf.mxu0
          %v4903 = vadd.f32 %v4826, %v4902
          %v4904 = vpop.f32.mrf.mxu0
          %4905 = vdwg.mxu0
          %v4906 = vld [vmem:[%s55] sm:$0xff]
          %v4907 = vld [vmem:[%s55 + $0x8] sm:$0xff]
          %v4908 = vld [vmem:[%s57] sm:$0x1]
          %v4910 = vsel %vm1680, %v4903, 0
          %4912 = vmatprep.subr.mxu0 0.0
          %4913 = vmatpush1.msra.mxu0 0.0
          %4914 = vmatprep.subr.mxu0 0.0
          %4915 = vmatpush1.msra.mxu0 0.0
          %4916 = vmatprep.subr.mxu0 0.0
          %4917 = vmatpush1.msra.mxu0 0.0
          %4918 = vmatprep.subr.mxu0 0.0
          %4919 = vmatpush1.msra.mxu0 0.0
          %4920 = vmatprep.subr.mxu0 0.0
          %4921 = vmatpush1.msra.mxu0 0.0
          %4922 = vmatprep.subr.mxu0 0.0
          %4923 = vmatpush1.msra.mxu0 0.0
          %4924 = vmatprep.subr.mxu0 0.0
          %4925 = vmatpush1.msra.mxu0 0.0
          %4926 = vmatprep.subr.mxu0 0.0
          %4927 = vmatpush1.msra.mxu0 0.0
          %4928 = vmatprep.subr.mxu0 0.0
          %4929 = vmatpush1.msra.mxu0 0.0
          %4930 = vmatprep.subr.mxu0 0.0
          %4931 = vmatpush1.msra.mxu0 0.0
          %4932 = vmatprep.subr.mxu0 0.0
          %4933 = vmatpush1.msra.mxu0 0.0
          %4934 = vmatprep.subr.mxu0 0.0
          %4935 = vmatpush1.msra.mxu0 0.0
          %4936 = vmatprep.subr.mxu0 0.0
          %4937 = vmatpush1.msra.mxu0 0.0
          %4938 = vmatprep.subr.mxu0 0.0
          %4939 = vmatpush1.msra.mxu0 0.0
          %4940 = vmatprep.subr.mxu0 0.0
          %4941 = vmatpush1.msra.mxu0 %v4907
          %4942 = vmatprep.subr.mxu0 0.0
          %4943 = vmatpush1.msra.mxu0 %v4906
          %4944 = vmatprep.subr.mxu0 0.0
          %4945 = vmatpush2.msra.mxu0 0.0
          %4946 = vmatprep.subr.mxu0 0.0
          %4947 = vmatpush2.msra.mxu0 0.0
          %4948 = vmatprep.subr.mxu0 0.0
          %4949 = vmatpush2.msra.mxu0 0.0
          %4950 = vmatprep.subr.mxu0 0.0
          %4951 = vmatpush2.msra.mxu0 0.0
          %4952 = vmatprep.subr.mxu0 0.0
          %4953 = vmatpush2.msra.mxu0 0.0
          %4954 = vmatprep.subr.mxu0 0.0
          %4955 = vmatpush2.msra.mxu0 0.0
          %4956 = vmatprep.subr.mxu0 0.0
          %4957 = vmatpush2.msra.mxu0 0.0
          %4958 = vmatprep.subr.mxu0 0.0
          %4959 = vmatpush2.msra.mxu0 0.0
          %4960 = vmatprep.subr.mxu0 0.0
          %4961 = vmatpush2.msra.mxu0 0.0
          %4962 = vmatprep.subr.mxu0 0.0
          %4963 = vmatpush2.msra.mxu0 0.0
          %4964 = vmatprep.subr.mxu0 0.0
          %4965 = vmatpush2.msra.mxu0 0.0
          %4966 = vmatprep.subr.mxu0 0.0
          %4967 = vmatpush2.msra.mxu0 0.0
          %4968 = vmatprep.subr.mxu0 0.0
          %4969 = vmatpush2.msra.mxu0 0.0
          %4970 = vmatprep.subr.mxu0 0.0
          %4971 = vmatpush2.msra.mxu0 0.0
          %4972 = vmatprep.subr.mxu0 0.0
          %4973 = vmatpush2.msra.mxu0 0.0
          %4974 = vmatprep.subr.mxu0 0.0
          %4975 = vmatpush2.msra.mxu0 0.0
          %4976 = vmatprep.mubr.f32.mxu0 0.0
          %4977 = vmatmul.mubr.f32.gmra.mxu0 %v4910
          %v4978 = vpop.f32.mrf.mxu0
          %v4979 = vadd.f32 %v4908, %v4978
          %v4980 = vpop.f32.mrf.mxu0
          %4981 = vdwg.mxu0
          %v4982 = vmax.f32 %v4979, 0.0
          %v4983 = vld [vmem:[%s59] sm:$0xff]
          %v4984 = vld [vmem:[%s59 + $0x8] sm:$0xf]
          %v4985 = vld [vmem:[%s61] sm:$0x1]
          %vm4986 = vcmask 97280
          %v4988 = vsel %vm4986, %v4982, 0
          %v4991 = vsel %vm1991, %v4984, 0
          %4993 = vmatprep.subr.mxu0 0.0
          %4994 = vmatpush1.msra.mxu0 0.0
          %4995 = vmatprep.subr.mxu0 0.0
          %4996 = vmatpush1.msra.mxu0 0.0
          %4997 = vmatprep.subr.mxu0 0.0
          %4998 = vmatpush1.msra.mxu0 0.0
          %4999 = vmatprep.subr.mxu0 0.0
          %5000 = vmatpush1.msra.mxu0 0.0
          %5001 = vmatprep.subr.mxu0 0.0
          %5002 = vmatpush1.msra.mxu0 0.0
          %5003 = vmatprep.subr.mxu0 0.0
          %5004 = vmatpush1.msra.mxu0 0.0
          %5005 = vmatprep.subr.mxu0 0.0
          %5006 = vmatpush1.msra.mxu0 0.0
          %5007 = vmatprep.subr.mxu0 0.0
          %5008 = vmatpush1.msra.mxu0 0.0
          %5009 = vmatprep.subr.mxu0 0.0
          %5010 = vmatpush1.msra.mxu0 0.0
          %5011 = vmatprep.subr.mxu0 0.0
          %5012 = vmatpush1.msra.mxu0 0.0
          %5013 = vmatprep.subr.mxu0 0.0
          %5014 = vmatpush1.msra.mxu0 0.0
          %5015 = vmatprep.subr.mxu0 0.0
          %5016 = vmatpush1.msra.mxu0 0.0
          %5017 = vmatprep.subr.mxu0 0.0
          %5018 = vmatpush1.msra.mxu0 0.0
          %5019 = vmatprep.subr.mxu0 0.0
          %5020 = vmatpush1.msra.mxu0 0.0
          %5021 = vmatprep.subr.mxu0 0.0
          %5022 = vmatpush1.msra.mxu0 %v4991
          %5023 = vmatprep.subr.mxu0 0.0
          %5024 = vmatpush1.msra.mxu0 %v4983
          %5025 = vmatprep.subr.mxu0 0.0
          %5026 = vmatpush2.msra.mxu0 0.0
          %5027 = vmatprep.subr.mxu0 0.0
          %5028 = vmatpush2.msra.mxu0 0.0
          %5029 = vmatprep.subr.mxu0 0.0
          %5030 = vmatpush2.msra.mxu0 0.0
          %5031 = vmatprep.subr.mxu0 0.0
          %5032 = vmatpush2.msra.mxu0 0.0
          %5033 = vmatprep.subr.mxu0 0.0
          %5034 = vmatpush2.msra.mxu0 0.0
          %5035 = vmatprep.subr.mxu0 0.0
          %5036 = vmatpush2.msra.mxu0 0.0
          %5037 = vmatprep.subr.mxu0 0.0
          %5038 = vmatpush2.msra.mxu0 0.0
          %5039 = vmatprep.subr.mxu0 0.0
          %5040 = vmatpush2.msra.mxu0 0.0
          %5041 = vmatprep.subr.mxu0 0.0
          %5042 = vmatpush2.msra.mxu0 0.0
          %5043 = vmatprep.subr.mxu0 0.0
          %5044 = vmatpush2.msra.mxu0 0.0
          %5045 = vmatprep.subr.mxu0 0.0
          %5046 = vmatpush2.msra.mxu0 0.0
          %5047 = vmatprep.subr.mxu0 0.0
          %5048 = vmatpush2.msra.mxu0 0.0
          %5049 = vmatprep.subr.mxu0 0.0
          %5050 = vmatpush2.msra.mxu0 0.0
          %5051 = vmatprep.subr.mxu0 0.0
          %5052 = vmatpush2.msra.mxu0 0.0
          %5053 = vmatprep.subr.mxu0 0.0
          %5054 = vmatpush2.msra.mxu0 0.0
          %5055 = vmatprep.subr.mxu0 0.0
          %5056 = vmatpush2.msra.mxu0 0.0
          %5057 = vmatprep.mubr.f32.mxu0 0.0
          %5058 = vmatmul.mubr.f32.gmra.mxu0 %v4988
          %v5059 = vpop.f32.mrf.mxu0
          %v5060 = vadd.f32 %v4985, %v5059
          %v5061 = vpop.f32.mrf.mxu0
          %5062 = vdwg.mxu0
          %vm5063 = vcmask 57344
          %5064 = vst.msk [vmem:[%s1177] sm:$0x1] %vm5063, %v5060
        $region152: #{tf_model_forward.1} parent=143 // pred_fallthru
          _
        %s5065 = sand.u32 %s840, 1
        %s5066 = scalar_lea.sflag [#allocation5], %s5065
        %s5067 = sand.u32 %s840, 1
        %s5068 = scalar_lea.vmem [#allocation4], %s5067
        // Predicated region
        $region153: #{tf_model_forward.1} parent=143 // pred_check
          %p5069 = pneg %p850
        $region154: #{tf_model_forward.1} parent=143 // pred_check_branch
          %5071 = sbr.rel (%p5069) target = $region156
        $region155: #{tf_model_forward.1} parent=143 // pred_region
          %s5073 = ssub.s32 16, 16
          %5074 = vsyncadd %s5066, %s5073
          %s5075 = smul.addr %s83, 16
          %s5076 = scalar_lea.hbm %s63, %s5075
          %s5078 = sshll.u32 %s5068, 4
          %s5079 = int_to_ptr.vmem [resolvable:$true] %s5078
          %5081 = dma.vmem_to_hbm [thread:$0]  %s5079, 16, %s5076, %s5066
        $region156: #{tf_model_forward.1} parent=143 // pred_fallthru
          _
      $region144: #{tf_model_forward.1} parent=5 // pred_fallthru
        _
      %p5082 = scmp.le.s32.totalorder 2, %s74
      // Predicated region
      $region157: #{tf_model_forward.1} parent=5 // pred_check
        %p5083 = pneg %p5082
      $region158: #{tf_model_forward.1} parent=5 // pred_check_branch
        %5085 = sbr.rel (%p5083) target = $region160
      $region159: #{tf_model_forward.1} parent=5 // pred_region
        %s5086 = ssub.s32 %s74, 2
        // Predicated region
        $region161: #{tf_model_forward.1} parent=159 // pred_check
          %p5087 = pneg %p856
        $region162: #{tf_model_forward.1} parent=159 // pred_check_branch
          %5089 = sbr.rel (%p5087) target = $region164
        $region163: #{tf_model_forward.1} parent=159 // pred_region
          %s5090 = sand.u32 %s841, 1
          %s5091 = scalar_lea.sflag [#allocation5], %s5090
          %s5092 = sand.u32 %s841, 1
          %s5093 = scalar_lea.vmem [#allocation4], %s5092
          %5094 = dma.done %s5091, 16
        $region164: #{tf_model_forward.1} parent=159 // pred_fallthru
          _
      $region160: #{tf_model_forward.1} parent=5 // pred_fallthru
        _
    $region6: #{tf_model_forward.1} parent=1 // loop_footer
      %s78 = sadd.s32 1, %s74
    $region7: #{tf_model_forward.1} parent=1 // loop_footer_branch
      %73 = sbr.rel target = $region3
    $region8: #{tf_model_forward.1} parent=1 // loop_exit
      _
    %5095 = vsyncpa [#allocation5], 1
    %s5096 = scalar_lea.sflag [#allocation5], 1
    %5097 = vsyncpa %s5096, 1

</llo_original>
